<compile_context>
chip_gen: v5e
topology: v5e:2x2
jax: 0.10.0
libtpu: 0.0.40
codegen_flags: <defaults>
</compile_context>

<pallas_src>
import functools
import math

import jax
import jax.numpy as jnp
from jax.experimental import pallas as pl
from jax.experimental.pallas import tpu as pltpu


def calc_pad(lin, lout, stride, k, d):
    return math.ceil((lout - 1) * stride + 1 - lin + d * (k - 1))


def d_stack_dilate_block(x, weights, biases, *, kernel_size, stride, paddings,
                         dilations, compute_dtype=jnp.bfloat16,
                         im2col_budget_bytes=None):
    """Fused Pallas implementation of D_StackDilateBlock.forward.

    x:       (N, C_in, L)        float32, NCW (PyTorch Conv1d layout)
    weights: (NB, OC, C_in, K)   stacked per-branch Conv1d weights
    biases:  (NB, OC)            stacked per-branch Conv1d biases
    returns: (N, NB*OC, L_out)   == torch.cat([conv_i(F.pad(x, (p_i, 0)))], 1)
    """
    NB = len(dilations)
    assert len(paddings) == NB
    N, C, L = x.shape
    OC = weights.shape[1]
    K = kernel_size
    S = stride
    NOC = NB * OC                               # fused output channels

    itemsize = jnp.dtype(compute_dtype).itemsize
    sub = {4: 8, 2: 16, 1: 32}[itemsize]        # sublane packing granularity
    C_pad = ((C + sub - 1) // sub) * sub        # aligned per-tap channel group
    CD = NB * K * C_pad                         # fused contraction depth

    # All branches must yield the same output length (required by torch.cat).
    L_outs = [(L + paddings[i] - dilations[i] * (K - 1) - 1) // S + 1
              for i in range(NB)]
    assert all(lo == L_outs[0] for lo in L_outs), "branch output lengths differ"
    L_out = L_outs[0]
    L_out_pad = ((L_out + 127) // 128) * 128    # lane-dense output; slice later

    # Static tap offsets into the max-left-padded signal, sorted so duplicate /
    # nearby column windows are adjacent (one load feeds several xcol stores).
    P_max = max(paddings)

    def tap_off(br, k):
        return (P_max - paddings[br]) + k * dilations[br]

    taps = sorted(((br, k) for br in range(NB) for k in range(K)),
                  key=lambda t: tap_off(*t))
    offs = [tap_off(br, k) for (br, k) in taps]
    tap_groups = []                             # [(off, [xcol tap indices])]
    for j, off in enumerate(offs):
        if tap_groups and tap_groups[-1][0] == off:
            tap_groups[-1][1].append(j)
        else:
            tap_groups.append((off, [j]))

    # Pad so every tap read is in range for every (padded) output position and
    # the length is a multiple of S; round M up to a lane multiple.
    L_need = max(L + P_max, max(offs) + S * (L_out_pad - 1) + 1)
    M = -(-L_need // S)
    M = ((M + 127) // 128) * 128
    L_pad = M * S

    # Polyphase + channel pad: xr[n, p*C_pad + c, m] = x_padded[n, c, S*m + p].
    # Absorbs the conv stride (unit-stride tap reads) and keeps L on lanes.
    xp = jnp.pad(x, ((0, 0), (0, C_pad - C), (P_max, L_pad - P_max - L)))
    xr = xp.reshape(N, C_pad, M, S).transpose(0, 3, 1, 2).reshape(N, S * C_pad, M)
    xr = xr.astype(compute_dtype)

    # Packed weight (NOC, CD): column block j holds tap taps[j]'s weights in the
    # rows of its branch, zero elsewhere (block-diagonal up to the tap sort).
    # NOTE: with NOC << MXU rows the zero-padded fused dot is free MXU slack;
    # switch to per-branch (OC, K*C_pad) dots if NOC approaches 128/256.
    cols = []
    for (br, k) in taps:
        blk = jnp.pad(weights[br, :, :, k], ((0, 0), (0, C_pad - C)))
        cols.append(jnp.zeros((NOC, C_pad), weights.dtype)
                    .at[br * OC:(br + 1) * OC].set(blk))
    w2 = jnp.concatenate(cols, axis=1).astype(compute_dtype)
    b2 = biases.reshape(NOC, 1).astype(jnp.float32)

    # --- per-generation VMEM budgets ---------------------------------------
    try:
        vmem_phys = int(pltpu.get_tpu_info().vmem_capacity_bytes)
    except Exception:
        vmem_phys = 64 << 20                    # conservative (v7x-sized) fallback
    small_vmem = vmem_phys < (100 << 20)        # v7x: 64 MiB; v5e/v6e: 128 MiB
    if im2col_budget_bytes is None:
        im2col_budget_bytes = (4 << 20) if small_vmem else (16 << 20)
    vmem_cap = (32 << 20) if small_vmem else (64 << 20)

    # --- L_out tiling: grid axis (n_grid) x static inner loop (double-buffer) --
    TL = 128
    for cand in (2048, 1024, 512, 256, 128):
        if (cand <= L_out_pad and L_out_pad % cand == 0
                and 2 * CD * cand * itemsize <= im2col_budget_bytes):
            TL = cand
            break
    n_lt = L_out_pad // TL
    feasible = [d for d in range(1, min(n_lt, 4) + 1)
                if n_lt % d == 0 and N * (n_lt // d) >= min(4, N * n_lt)]
    inner = max(feasible) if feasible else 1    # static sub-tiles per grid step
    n_grid = n_lt // inner                      # L super-tiles on the grid
    TLG = inner * TL                            # super-tile length
    NBUF = 2 if inner > 1 else 1                # double-buffer im2col when useful

    precision = (jax.lax.Precision.HIGHEST      # bit-fidelity opt-in (f32 path)
                 if jnp.dtype(compute_dtype) == jnp.dtype(jnp.float32)
                 else None)                     # bf16 default: single MXU pass

    def kernel(x_ref, w_ref, b_ref, o_ref, xcol_ref):
        # x_ref:    (1, S*C_pad, M)    polyphase input, L/S on lanes
        # w_ref:    (NOC, CD)          packed per-tap weights
        # b_ref:    (NOC, 1)           packed bias (f32)
        # o_ref:    (1, NOC, TLG)      output super-tile, lanes dense (>=128)
        # xcol_ref: (NBUF, CD, TL)     (double-buffered) transposed-im2col slab
        if n_grid == 1:
            l_base = 0                                  # fully static slicing
        else:
            l_base = pl.multiple_of(pl.program_id(1) * TLG, 128)
        for li in range(inner):                         # short static unroll
            slot = li % NBUF                            # alternate im2col buffer
            l0 = li * TL
            for off, js in tap_groups:                  # grouped tap windows
                p, base = off % S, off // S
                v = x_ref[0, p * C_pad:(p + 1) * C_pad,
                          pl.ds(base + l_base + l0, TL)]
                for j in js:                            # aligned full-tile stores
                    xcol_ref[slot, j * C_pad:(j + 1) * C_pad, :] = v
            # One fused MXU matmul over all branches/taps/channels; result is
            # already (NB*OC, TL): lane-dense, no transpose anywhere.
            acc = jnp.dot(w_ref[...], xcol_ref[slot],
                          preferred_element_type=jnp.float32,
                          precision=precision)
            o_ref[0, :, l0:l0 + TL] = (acc + b_ref[...]).astype(o_ref.dtype)

    vmem_bytes = int(2 * S * C_pad * M * itemsize           # dbl-buffered input
                     + 2 * NOC * TLG * 4                     # dbl-buffered output
                     + 2 * (NOC * CD * itemsize + NOC * 4)   # weights + bias
                     + NBUF * CD * TL * itemsize             # im2col scratch
                     + (4 << 20))                            # headroom
    vmem_limit = int(min(max(vmem_bytes, 16 << 20), vmem_cap))

    cost = pl.CostEstimate(
        flops=int(2 * N * NOC * CD * L_out_pad),
        transcendentals=0,
        bytes_accessed=int(xr.size * itemsize + w2.size * itemsize
                           + b2.size * 4 + N * NOC * L_out_pad * 4))

    out = pl.pallas_call(
        kernel,
        out_shape=jax.ShapeDtypeStruct((N, NOC, L_out_pad), jnp.float32),
        grid=(N, n_grid),
        in_specs=[
            pl.BlockSpec((1, S * C_pad, M), lambda n, g: (n, 0, 0)),
            pl.BlockSpec((NOC, CD), lambda n, g: (0, 0)),
            pl.BlockSpec((NOC, 1), lambda n, g: (0, 0)),
        ],
        out_specs=pl.BlockSpec((1, NOC, TLG), lambda n, g: (n, 0, g)),
        scratch_shapes=[pltpu.VMEM((NBUF, CD, TL), compute_dtype)],
        compiler_params=pltpu.CompilerParams(
            dimension_semantics=("parallel", "parallel"),   # megacore balance
            vmem_limit_bytes=vmem_limit),
        cost_estimate=cost,
    )(xr, w2, b2)

    if L_out_pad != L_out:
        out = out[:, :, :L_out]
    return out


def reference(x, weights, biases, kernel_size, stride, paddings, dilations):
    """Pure-JAX reference replicating the PyTorch forward exactly (f32)."""
    outs = []
    for i, d in enumerate(dilations):
        xi = jnp.pad(x, ((0, 0), (0, 0), (paddings[i], 0)))   # F.pad(x, (p, 0))
        o = jax.lax.conv_general_dilated(
            xi, weights[i], window_strides=(stride,), padding=[(0, 0)],
            rhs_dilation=(d,), dimension_numbers=('NCH', 'OIH', 'NCH'),
            precision=jax.lax.Precision.HIGHEST)
        o = o + biases[i][None, :, None]
        outs.append(o)
    return jnp.concatenate(outs, axis=1)


if __name__ == "__main__":
    # Mirrors one D_StackDilateBlock of Discriminator_new at reduced length:
    # kernel_size=24, stride=4, dilations [1,3,7,15], paddings from calc_pad.
    # TODO(synk): PhaseShuffle / LeakyReLU / Flatten+Linear of Discriminator_new
    # are gather / elementwise / GEMV glue left to XLA; this kernel covers the
    # D_StackDilateBlock convolutions that dominate the forward pass.
    N, C_in, L_in, L_target = 2, 4, 1024, 256
    OC = 8
    K = 24
    stride = 4
    dilations = [1, 3, 7, 15]
    paddings = [calc_pad(lin=L_in, lout=L_target, stride=stride, k=K, d=d)
                for d in dilations]
    NB = len(dilations)

    key = jax.random.PRNGKey(0)
    kx, kw, kb = jax.random.split(key, 3)
    x = jax.random.normal(kx, (N, C_in, L_in), dtype=jnp.float32)
    weights = jax.random.normal(kw, (NB, OC, C_in, K), dtype=jnp.float32) * 0.1
    biases = jax.random.normal(kb, (NB, OC), dtype=jnp.float32) * 0.1

    fwd = jax.jit(functools.partial(
        d_stack_dilate_block, kernel_size=K, stride=stride,
        paddings=tuple(paddings), dilations=tuple(dilations)))
    out = jax.block_until_ready(fwd(x, weights, biases))

    ref = jax.block_until_ready(
        reference(x, weights, biases, K, stride, paddings, dilations))
    assert out.shape == ref.shape == (N, NB * OC, L_target), (out.shape, ref.shape)
    # Default compute dtype is bf16 (per perf review): operands are quantized to
    # bf16 before the f32-accumulated MXU matmul, so compare at a bf16-level
    # tolerance.  Pass compute_dtype=jnp.float32 for the bit-fidelity path.
    err = float(jnp.max(jnp.abs(out - ref)))
    assert err < 3e-2, f"mismatch vs reference: max abs err {err}"
    print("KERNEL_OK")
</pallas_src>

<mosaic_0001>
module attributes {stable_mosaic.version = 11 : i64} {
  func.func @kernel(%arg0: i32, %arg1: i32, %arg2: memref<1x64x384xbf16, #tpu.memory_space<vmem>>, %arg3: memref<32x1536xbf16, #tpu.memory_space<vmem>>, %arg4: memref<32x1xf32, #tpu.memory_space<vmem>>, %arg5: memref<1x32x256xf32, #tpu.memory_space<vmem>>, %arg6: memref<1x1536x256xbf16, #tpu.memory_space<vmem>>) attributes {dimension_semantics = [#tpu.dimension_semantics<parallel>, #tpu.dimension_semantics<parallel>], iteration_bounds = array<i64: 2, 1>, scalar_prefetch = 0 : i64, scratch_operands = 1 : i64, tpu.core_type = #tpu.core_type<tc>, window_params = [{transform_indices = @transform_0, window_bounds = array<i64: 1, 64, 384>}, {pipeline_mode = #tpu.pipeline_mode<synchronous>, transform_indices = @transform_1, window_bounds = array<i64: 32, 1536>}, {pipeline_mode = #tpu.pipeline_mode<synchronous>, transform_indices = @transform_2, window_bounds = array<i64: 32, 1>}, {transform_indices = @transform_3, window_bounds = array<i64: 1, 32, 256>}]} {
    %c0 = arith.constant 0 : index
    %c0_0 = arith.constant 0 : index
    %c0_1 = arith.constant 0 : index
    %0 = vector.load %arg2[%c0, %c0_0, %c0_1] : memref<1x64x384xbf16, #tpu.memory_space<vmem>>, vector<1x16x256xbf16>
    %1 = vector.shape_cast %0 : vector<1x16x256xbf16> to vector<16x256xbf16>
    %c0_2 = arith.constant 0 : index
    %c0_3 = arith.constant 0 : index
    %c0_4 = arith.constant 0 : index
    %2 = vector.load %arg6[%c0_2, %c0_3, %c0_4] : memref<1x1536x256xbf16, #tpu.memory_space<vmem>>, vector<1x16x256xbf16>
    %3 = vector.shape_cast %2 : vector<1x16x256xbf16> to vector<16x256xbf16>
    %4 = vector.shape_cast %1 : vector<16x256xbf16> to vector<1x16x256xbf16>
    tpu.vector_store %arg6[%c0_2, %c0_3, %c0_4], %4 {strides = array<i32>} : memref<1x1536x256xbf16, #tpu.memory_space<vmem>>, vector<1x16x256xbf16>,
    %c0_5 = arith.constant 0 : index
    %c48 = arith.constant 48 : index
    %c3 = arith.constant 3 : index
    %5 = vector.load %arg2[%c0_5, %c48, %c3] : memref<1x64x384xbf16, #tpu.memory_space<vmem>>, vector<1x16x256xbf16>
    %6 = vector.shape_cast %5 : vector<1x16x256xbf16> to vector<16x256xbf16>
    %c0_6 = arith.constant 0 : index
    %c16 = arith.constant 16 : index
    %c0_7 = arith.constant 0 : index
    %7 = vector.load %arg6[%c0_6, %c16, %c0_7] : memref<1x1536x256xbf16, #tpu.memory_space<vmem>>, vector<1x16x256xbf16>
    %8 = vector.shape_cast %7 : vector<1x16x256xbf16> to vector<16x256xbf16>
    %9 = vector.shape_cast %6 : vector<16x256xbf16> to vector<1x16x256xbf16>
    tpu.vector_store %arg6[%c0_6, %c16, %c0_7], %9 {strides = array<i32>} : memref<1x1536x256xbf16, #tpu.memory_space<vmem>>, vector<1x16x256xbf16>,
    %c0_8 = arith.constant 0 : index
    %c32 = arith.constant 32 : index
    %c7 = arith.constant 7 : index
    %10 = vector.load %arg2[%c0_8, %c32, %c7] : memref<1x64x384xbf16, #tpu.memory_space<vmem>>, vector<1x16x256xbf16>
    %11 = vector.shape_cast %10 : vector<1x16x256xbf16> to vector<16x256xbf16>
    %c0_9 = arith.constant 0 : index
    %c32_10 = arith.constant 32 : index
    %c0_11 = arith.constant 0 : index
    %12 = vector.load %arg6[%c0_9, %c32_10, %c0_11] : memref<1x1536x256xbf16, #tpu.memory_space<vmem>>, vector<1x16x256xbf16>
    %13 = vector.shape_cast %12 : vector<1x16x256xbf16> to vector<16x256xbf16>
    %14 = vector.shape_cast %11 : vector<16x256xbf16> to vector<1x16x256xbf16>
    tpu.vector_store %arg6[%c0_9, %c32_10, %c0_11], %14 {strides = array<i32>} : memref<1x1536x256xbf16, #tpu.memory_space<vmem>>, vector<1x16x256xbf16>,
    %c0_12 = arith.constant 0 : index
    %c16_13 = arith.constant 16 : index
    %c11 = arith.constant 11 : index
    %15 = vector.load %arg2[%c0_12, %c16_13, %c11] : memref<1x64x384xbf16, #tpu.memory_space<vmem>>, vector<1x16x256xbf16>
    %16 = vector.shape_cast %15 : vector<1x16x256xbf16> to vector<16x256xbf16>
    %c0_14 = arith.constant 0 : index
    %c48_15 = arith.constant 48 : index
    %c0_16 = arith.constant 0 : index
    %17 = vector.load %arg6[%c0_14, %c48_15, %c0_16] : memref<1x1536x256xbf16, #tpu.memory_space<vmem>>, vector<1x16x256xbf16>
    %18 = vector.shape_cast %17 : vector<1x16x256xbf16> to vector<16x256xbf16>
    %19 = vector.shape_cast %16 : vector<16x256xbf16> to vector<1x16x256xbf16>
    tpu.vector_store %arg6[%c0_14, %c48_15, %c0_16], %19 {strides = array<i32>} : memref<1x1536x256xbf16, #tpu.memory_space<vmem>>, vector<1x16x256xbf16>,
    %c0_17 = arith.constant 0 : index
    %c0_18 = arith.constant 0 : index
    %c15 = arith.constant 15 : index
    %20 = vector.load %arg2[%c0_17, %c0_18, %c15] : memref<1x64x384xbf16, #tpu.memory_space<vmem>>, vector<1x16x256xbf16>
    %21 = vector.shape_cast %20 : vector<1x16x256xbf16> to vector<16x256xbf16>
    %c0_19 = arith.constant 0 : index
    %c64 = arith.constant 64 : index
    %c0_20 = arith.constant 0 : index
    %22 = vector.load %arg6[%c0_19, %c64, %c0_20] : memref<1x1536x256xbf16, #tpu.memory_space<vmem>>, vector<1x16x256xbf16>
    %23 = vector.shape_cast %22 : vector<1x16x256xbf16> to vector<16x256xbf16>
    %24 = vector.shape_cast %21 : vector<16x256xbf16> to vector<1x16x256xbf16>
    tpu.vector_store %arg6[%c0_19, %c64, %c0_20], %24 {strides = array<i32>} : memref<1x1536x256xbf16, #tpu.memory_space<vmem>>, vector<1x16x256xbf16>,
    %c0_21 = arith.constant 0 : index
    %c48_22 = arith.constant 48 : index
    %c18 = arith.constant 18 : index
    %25 = vector.load %arg2[%c0_21, %c48_22, %c18] : memref<1x64x384xbf16, #tpu.memory_space<vmem>>, vector<1x16x256xbf16>
    %26 = vector.shape_cast %25 : vector<1x16x256xbf16> to vector<16x256xbf16>
    %c0_23 = arith.constant 0 : index
    %c80 = arith.constant 80 : index
    %c0_24 = arith.constant 0 : index
    %27 = vector.load %arg6[%c0_23, %c80, %c0_24] : memref<1x1536x256xbf16, #tpu.memory_space<vmem>>, vector<1x16x256xbf16>
    %28 = vector.shape_cast %27 : vector<1x16x256xbf16> to vector<16x256xbf16>
    %29 = vector.shape_cast %26 : vector<16x256xbf16> to vector<1x16x256xbf16>
    tpu.vector_store %arg6[%c0_23, %c80, %c0_24], %29 {strides = array<i32>} : memref<1x1536x256xbf16, #tpu.memory_space<vmem>>, vector<1x16x256xbf16>,
    %c0_25 = arith.constant 0 : index
    %c32_26 = arith.constant 32 : index
    %c22 = arith.constant 22 : index
    %30 = vector.load %arg2[%c0_25, %c32_26, %c22] : memref<1x64x384xbf16, #tpu.memory_space<vmem>>, vector<1x16x256xbf16>
    %31 = vector.shape_cast %30 : vector<1x16x256xbf16> to vector<16x256xbf16>
    %c0_27 = arith.constant 0 : index
    %c96 = arith.constant 96 : index
    %c0_28 = arith.constant 0 : index
    %32 = vector.load %arg6[%c0_27, %c96, %c0_28] : memref<1x1536x256xbf16, #tpu.memory_space<vmem>>, vector<1x16x256xbf16>
    %33 = vector.shape_cast %32 : vector<1x16x256xbf16> to vector<16x256xbf16>
    %34 = vector.shape_cast %31 : vector<16x256xbf16> to vector<1x16x256xbf16>
    tpu.vector_store %arg6[%c0_27, %c96, %c0_28], %34 {strides = array<i32>} : memref<1x1536x256xbf16, #tpu.memory_space<vmem>>, vector<1x16x256xbf16>,
    %c0_29 = arith.constant 0 : index
    %c16_30 = arith.constant 16 : index
    %c26 = arith.constant 26 : index
    %35 = vector.load %arg2[%c0_29, %c16_30, %c26] : memref<1x64x384xbf16, #tpu.memory_space<vmem>>, vector<1x16x256xbf16>
    %36 = vector.shape_cast %35 : vector<1x16x256xbf16> to vector<16x256xbf16>
    %c0_31 = arith.constant 0 : index
    %c112 = arith.constant 112 : index
    %c0_32 = arith.constant 0 : index
    %37 = vector.load %arg6[%c0_31, %c112, %c0_32] : memref<1x1536x256xbf16, #tpu.memory_space<vmem>>, vector<1x16x256xbf16>
    %38 = vector.shape_cast %37 : vector<1x16x256xbf16> to vector<16x256xbf16>
    %39 = vector.shape_cast %36 : vector<16x256xbf16> to vector<1x16x256xbf16>
    tpu.vector_store %arg6[%c0_31, %c112, %c0_32], %39 {strides = array<i32>} : memref<1x1536x256xbf16, #tpu.memory_space<vmem>>, vector<1x16x256xbf16>,
    %c0_33 = arith.constant 0 : index
    %c0_34 = arith.constant 0 : index
    %c30 = arith.constant 30 : index
    %40 = vector.load %arg2[%c0_33, %c0_34, %c30] : memref<1x64x384xbf16, #tpu.memory_space<vmem>>, vector<1x16x256xbf16>
    %41 = vector.shape_cast %40 : vector<1x16x256xbf16> to vector<16x256xbf16>
    %c0_35 = arith.constant 0 : index
    %c128 = arith.constant 128 : index
    %c0_36 = arith.constant 0 : index
    %42 = vector.load %arg6[%c0_35, %c128, %c0_36] : memref<1x1536x256xbf16, #tpu.memory_space<vmem>>, vector<1x16x256xbf16>
    %43 = vector.shape_cast %42 : vector<1x16x256xbf16> to vector<16x256xbf16>
    %44 = vector.shape_cast %41 : vector<16x256xbf16> to vector<1x16x256xbf16>
    tpu.vector_store %arg6[%c0_35, %c128, %c0_36], %44 {strides = array<i32>} : memref<1x1536x256xbf16, #tpu.memory_space<vmem>>, vector<1x16x256xbf16>,
    %c0_37 = arith.constant 0 : index
    %c48_38 = arith.constant 48 : index
    %c33 = arith.constant 33 : index
    %45 = vector.load %arg2[%c0_37, %c48_38, %c33] : memref<1x64x384xbf16, #tpu.memory_space<vmem>>, vector<1x16x256xbf16>
    %46 = vector.shape_cast %45 : vector<1x16x256xbf16> to vector<16x256xbf16>
    %c0_39 = arith.constant 0 : index
    %c144 = arith.constant 144 : index
    %c0_40 = arith.constant 0 : index
    %47 = vector.load %arg6[%c0_39, %c144, %c0_40] : memref<1x1536x256xbf16, #tpu.memory_space<vmem>>, vector<1x16x256xbf16>
    %48 = vector.shape_cast %47 : vector<1x16x256xbf16> to vector<16x256xbf16>
    %49 = vector.shape_cast %46 : vector<16x256xbf16> to vector<1x16x256xbf16>
    tpu.vector_store %arg6[%c0_39, %c144, %c0_40], %49 {strides = array<i32>} : memref<1x1536x256xbf16, #tpu.memory_space<vmem>>, vector<1x16x256xbf16>,
    %c0_41 = arith.constant 0 : index
    %c32_42 = arith.constant 32 : index
    %c37 = arith.constant 37 : index
    %50 = vector.load %arg2[%c0_41, %c32_42, %c37] : memref<1x64x384xbf16, #tpu.memory_space<vmem>>, vector<1x16x256xbf16>
    %51 = vector.shape_cast %50 : vector<1x16x256xbf16> to vector<16x256xbf16>
    %c0_43 = arith.constant 0 : index
    %c160 = arith.constant 160 : index
    %c0_44 = arith.constant 0 : index
    %52 = vector.load %arg6[%c0_43, %c160, %c0_44] : memref<1x1536x256xbf16, #tpu.memory_space<vmem>>, vector<1x16x256xbf16>
    %53 = vector.shape_cast %52 : vector<1x16x256xbf16> to vector<16x256xbf16>
    %54 = vector.shape_cast %51 : vector<16x256xbf16> to vector<1x16x256xbf16>
    tpu.vector_store %arg6[%c0_43, %c160, %c0_44], %54 {strides = array<i32>} : memref<1x1536x256xbf16, #tpu.memory_space<vmem>>, vector<1x16x256xbf16>,
    %c0_45 = arith.constant 0 : index
    %c16_46 = arith.constant 16 : index
    %c41 = arith.constant 41 : index
    %55 = vector.load %arg2[%c0_45, %c16_46, %c41] : memref<1x64x384xbf16, #tpu.memory_space<vmem>>, vector<1x16x256xbf16>
    %56 = vector.shape_cast %55 : vector<1x16x256xbf16> to vector<16x256xbf16>
    %c0_47 = arith.constant 0 : index
    %c176 = arith.constant 176 : index
    %c0_48 = arith.constant 0 : index
    %57 = vector.load %arg6[%c0_47, %c176, %c0_48] : memref<1x1536x256xbf16, #tpu.memory_space<vmem>>, vector<1x16x256xbf16>
    %58 = vector.shape_cast %57 : vector<1x16x256xbf16> to vector<16x256xbf16>
    %59 = vector.shape_cast %56 : vector<16x256xbf16> to vector<1x16x256xbf16>
    tpu.vector_store %arg6[%c0_47, %c176, %c0_48], %59 {strides = array<i32>} : memref<1x1536x256xbf16, #tpu.memory_space<vmem>>, vector<1x16x256xbf16>,
    %c0_49 = arith.constant 0 : index
    %c0_50 = arith.constant 0 : index
    %c45 = arith.constant 45 : index
    %60 = vector.load %arg2[%c0_49, %c0_50, %c45] : memref<1x64x384xbf16, #tpu.memory_space<vmem>>, vector<1x16x256xbf16>
    %61 = vector.shape_cast %60 : vector<1x16x256xbf16> to vector<16x256xbf16>
    %c0_51 = arith.constant 0 : index
    %c192 = arith.constant 192 : index
    %c0_52 = arith.constant 0 : index
    %62 = vector.load %arg6[%c0_51, %c192, %c0_52] : memref<1x1536x256xbf16, #tpu.memory_space<vmem>>, vector<1x16x256xbf16>
    %63 = vector.shape_cast %62 : vector<1x16x256xbf16> to vector<16x256xbf16>
    %64 = vector.shape_cast %61 : vector<16x256xbf16> to vector<1x16x256xbf16>
    tpu.vector_store %arg6[%c0_51, %c192, %c0_52], %64 {strides = array<i32>} : memref<1x1536x256xbf16, #tpu.memory_space<vmem>>, vector<1x16x256xbf16>,
    %c0_53 = arith.constant 0 : index
    %c0_54 = arith.constant 0 : index
    %c46 = arith.constant 46 : index
    %65 = vector.load %arg2[%c0_53, %c0_54, %c46] : memref<1x64x384xbf16, #tpu.memory_space<vmem>>, vector<1x16x256xbf16>
    %66 = vector.shape_cast %65 : vector<1x16x256xbf16> to vector<16x256xbf16>
    %c0_55 = arith.constant 0 : index
    %c208 = arith.constant 208 : index
    %c0_56 = arith.constant 0 : index
    %67 = vector.load %arg6[%c0_55, %c208, %c0_56] : memref<1x1536x256xbf16, #tpu.memory_space<vmem>>, vector<1x16x256xbf16>
    %68 = vector.shape_cast %67 : vector<1x16x256xbf16> to vector<16x256xbf16>
    %69 = vector.shape_cast %66 : vector<16x256xbf16> to vector<1x16x256xbf16>
    tpu.vector_store %arg6[%c0_55, %c208, %c0_56], %69 {strides = array<i32>} : memref<1x1536x256xbf16, #tpu.memory_space<vmem>>, vector<1x16x256xbf16>,
    %c0_57 = arith.constant 0 : index
    %c48_58 = arith.constant 48 : index
    %c47 = arith.constant 47 : index
    %70 = vector.load %arg2[%c0_57, %c48_58, %c47] : memref<1x64x384xbf16, #tpu.memory_space<vmem>>, vector<1x16x256xbf16>
    %71 = vector.shape_cast %70 : vector<1x16x256xbf16> to vector<16x256xbf16>
    %c0_59 = arith.constant 0 : index
    %c224 = arith.constant 224 : index
    %c0_60 = arith.constant 0 : index
    %72 = vector.load %arg6[%c0_59, %c224, %c0_60] : memref<1x1536x256xbf16, #tpu.memory_space<vmem>>, vector<1x16x256xbf16>
    %73 = vector.shape_cast %72 : vector<1x16x256xbf16> to vector<16x256xbf16>
    %74 = vector.shape_cast %71 : vector<16x256xbf16> to vector<1x16x256xbf16>
    tpu.vector_store %arg6[%c0_59, %c224, %c0_60], %74 {strides = array<i32>} : memref<1x1536x256xbf16, #tpu.memory_space<vmem>>, vector<1x16x256xbf16>,
    %c0_61 = arith.constant 0 : index
    %c48_62 = arith.constant 48 : index
    %c48_63 = arith.constant 48 : index
    %75 = vector.load %arg2[%c0_61, %c48_62, %c48_63] : memref<1x64x384xbf16, #tpu.memory_space<vmem>>, vector<1x16x256xbf16>
    %76 = vector.shape_cast %75 : vector<1x16x256xbf16> to vector<16x256xbf16>
    %c0_64 = arith.constant 0 : index
    %c240 = arith.constant 240 : index
    %c0_65 = arith.constant 0 : index
    %77 = vector.load %arg6[%c0_64, %c240, %c0_65] : memref<1x1536x256xbf16, #tpu.memory_space<vmem>>, vector<1x16x256xbf16>
    %78 = vector.shape_cast %77 : vector<1x16x256xbf16> to vector<16x256xbf16>
    %79 = vector.shape_cast %76 : vector<16x256xbf16> to vector<1x16x256xbf16>
    tpu.vector_store %arg6[%c0_64, %c240, %c0_65], %79 {strides = array<i32>} : memref<1x1536x256xbf16, #tpu.memory_space<vmem>>, vector<1x16x256xbf16>,
    %c0_66 = arith.constant 0 : index
    %c32_67 = arith.constant 32 : index
    %c49 = arith.constant 49 : index
    %80 = vector.load %arg2[%c0_66, %c32_67, %c49] : memref<1x64x384xbf16, #tpu.memory_space<vmem>>, vector<1x16x256xbf16>
    %81 = vector.shape_cast %80 : vector<1x16x256xbf16> to vector<16x256xbf16>
    %c0_68 = arith.constant 0 : index
    %c256 = arith.constant 256 : index
    %c0_69 = arith.constant 0 : index
    %82 = vector.load %arg6[%c0_68, %c256, %c0_69] : memref<1x1536x256xbf16, #tpu.memory_space<vmem>>, vector<1x16x256xbf16>
    %83 = vector.shape_cast %82 : vector<1x16x256xbf16> to vector<16x256xbf16>
    %84 = vector.shape_cast %81 : vector<16x256xbf16> to vector<1x16x256xbf16>
    tpu.vector_store %arg6[%c0_68, %c256, %c0_69], %84 {strides = array<i32>} : memref<1x1536x256xbf16, #tpu.memory_space<vmem>>, vector<1x16x256xbf16>,
    %c0_70 = arith.constant 0 : index
    %c16_71 = arith.constant 16 : index
    %c51 = arith.constant 51 : index
    %85 = vector.load %arg2[%c0_70, %c16_71, %c51] : memref<1x64x384xbf16, #tpu.memory_space<vmem>>, vector<1x16x256xbf16>
    %86 = vector.shape_cast %85 : vector<1x16x256xbf16> to vector<16x256xbf16>
    %c0_72 = arith.constant 0 : index
    %c272 = arith.constant 272 : index
    %c0_73 = arith.constant 0 : index
    %87 = vector.load %arg6[%c0_72, %c272, %c0_73] : memref<1x1536x256xbf16, #tpu.memory_space<vmem>>, vector<1x16x256xbf16>
    %88 = vector.shape_cast %87 : vector<1x16x256xbf16> to vector<16x256xbf16>
    %89 = vector.shape_cast %86 : vector<16x256xbf16> to vector<1x16x256xbf16>
    tpu.vector_store %arg6[%c0_72, %c272, %c0_73], %89 {strides = array<i32>} : memref<1x1536x256xbf16, #tpu.memory_space<vmem>>, vector<1x16x256xbf16>,
    %c0_74 = arith.constant 0 : index
    %c32_75 = arith.constant 32 : index
    %c52 = arith.constant 52 : index
    %90 = vector.load %arg2[%c0_74, %c32_75, %c52] : memref<1x64x384xbf16, #tpu.memory_space<vmem>>, vector<1x16x256xbf16>
    %91 = vector.shape_cast %90 : vector<1x16x256xbf16> to vector<16x256xbf16>
    %c0_76 = arith.constant 0 : index
    %c288 = arith.constant 288 : index
    %c0_77 = arith.constant 0 : index
    %92 = vector.load %arg6[%c0_76, %c288, %c0_77] : memref<1x1536x256xbf16, #tpu.memory_space<vmem>>, vector<1x16x256xbf16>
    %93 = vector.shape_cast %92 : vector<1x16x256xbf16> to vector<16x256xbf16>
    %94 = vector.shape_cast %91 : vector<16x256xbf16> to vector<1x16x256xbf16>
    tpu.vector_store %arg6[%c0_76, %c288, %c0_77], %94 {strides = array<i32>} : memref<1x1536x256xbf16, #tpu.memory_space<vmem>>, vector<1x16x256xbf16>,
    %c0_78 = arith.constant 0 : index
    %c0_79 = arith.constant 0 : index
    %c53 = arith.constant 53 : index
    %95 = vector.load %arg2[%c0_78, %c0_79, %c53] : memref<1x64x384xbf16, #tpu.memory_space<vmem>>, vector<1x16x256xbf16>
    %96 = vector.shape_cast %95 : vector<1x16x256xbf16> to vector<16x256xbf16>
    %c0_80 = arith.constant 0 : index
    %c304 = arith.constant 304 : index
    %c0_81 = arith.constant 0 : index
    %97 = vector.load %arg6[%c0_80, %c304, %c0_81] : memref<1x1536x256xbf16, #tpu.memory_space<vmem>>, vector<1x16x256xbf16>
    %98 = vector.shape_cast %97 : vector<1x16x256xbf16> to vector<16x256xbf16>
    %99 = vector.shape_cast %96 : vector<16x256xbf16> to vector<1x16x256xbf16>
    tpu.vector_store %arg6[%c0_80, %c304, %c0_81], %99 {strides = array<i32>} : memref<1x1536x256xbf16, #tpu.memory_space<vmem>>, vector<1x16x256xbf16>,
    %c0_82 = arith.constant 0 : index
    %c48_83 = arith.constant 48 : index
    %c54 = arith.constant 54 : index
    %100 = vector.load %arg2[%c0_82, %c48_83, %c54] : memref<1x64x384xbf16, #tpu.memory_space<vmem>>, vector<1x16x256xbf16>
    %101 = vector.shape_cast %100 : vector<1x16x256xbf16> to vector<16x256xbf16>
    %c0_84 = arith.constant 0 : index
    %c320 = arith.constant 320 : index
    %c0_85 = arith.constant 0 : index
    %102 = vector.load %arg6[%c0_84, %c320, %c0_85] : memref<1x1536x256xbf16, #tpu.memory_space<vmem>>, vector<1x16x256xbf16>
    %103 = vector.shape_cast %102 : vector<1x16x256xbf16> to vector<16x256xbf16>
    %104 = vector.shape_cast %101 : vector<16x256xbf16> to vector<1x16x256xbf16>
    tpu.vector_store %arg6[%c0_84, %c320, %c0_85], %104 {strides = array<i32>} : memref<1x1536x256xbf16, #tpu.memory_space<vmem>>, vector<1x16x256xbf16>,
    %c0_86 = arith.constant 0 : index
    %c16_87 = arith.constant 16 : index
    %c56 = arith.constant 56 : index
    %105 = vector.load %arg2[%c0_86, %c16_87, %c56] : memref<1x64x384xbf16, #tpu.memory_space<vmem>>, vector<1x16x256xbf16>
    %106 = vector.shape_cast %105 : vector<1x16x256xbf16> to vector<16x256xbf16>
    %c0_88 = arith.constant 0 : index
    %c336 = arith.constant 336 : index
    %c0_89 = arith.constant 0 : index
    %107 = vector.load %arg6[%c0_88, %c336, %c0_89] : memref<1x1536x256xbf16, #tpu.memory_space<vmem>>, vector<1x16x256xbf16>
    %108 = vector.shape_cast %107 : vector<1x16x256xbf16> to vector<16x256xbf16>
    %109 = vector.shape_cast %106 : vector<16x256xbf16> to vector<1x16x256xbf16>
    tpu.vector_store %arg6[%c0_88, %c336, %c0_89], %109 {strides = array<i32>} : memref<1x1536x256xbf16, #tpu.memory_space<vmem>>, vector<1x16x256xbf16>,
    %c0_90 = arith.constant 0 : index
    %c32_91 = arith.constant 32 : index
    %c56_92 = arith.constant 56 : index
    %110 = vector.load %arg2[%c0_90, %c32_91, %c56_92] : memref<1x64x384xbf16, #tpu.memory_space<vmem>>, vector<1x16x256xbf16>
    %111 = vector.shape_cast %110 : vector<1x16x256xbf16> to vector<16x256xbf16>
    %c0_93 = arith.constant 0 : index
    %c352 = arith.constant 352 : index
    %c0_94 = arith.constant 0 : index
    %112 = vector.load %arg6[%c0_93, %c352, %c0_94] : memref<1x1536x256xbf16, #tpu.memory_space<vmem>>, vector<1x16x256xbf16>
    %113 = vector.shape_cast %112 : vector<1x16x256xbf16> to vector<16x256xbf16>
    %114 = vector.shape_cast %111 : vector<16x256xbf16> to vector<1x16x256xbf16>
    tpu.vector_store %arg6[%c0_93, %c352, %c0_94], %114 {strides = array<i32>} : memref<1x1536x256xbf16, #tpu.memory_space<vmem>>, vector<1x16x256xbf16>,
    %c0_95 = arith.constant 0 : index
    %c16_96 = arith.constant 16 : index
    %c58 = arith.constant 58 : index
    %115 = vector.load %arg2[%c0_95, %c16_96, %c58] : memref<1x64x384xbf16, #tpu.memory_space<vmem>>, vector<1x16x256xbf16>
    %116 = vector.shape_cast %115 : vector<1x16x256xbf16> to vector<16x256xbf16>
    %c0_97 = arith.constant 0 : index
    %c368 = arith.constant 368 : index
    %c0_98 = arith.constant 0 : index
    %117 = vector.load %arg6[%c0_97, %c368, %c0_98] : memref<1x1536x256xbf16, #tpu.memory_space<vmem>>, vector<1x16x256xbf16>
    %118 = vector.shape_cast %117 : vector<1x16x256xbf16> to vector<16x256xbf16>
    %119 = vector.shape_cast %116 : vector<16x256xbf16> to vector<1x16x256xbf16>
    tpu.vector_store %arg6[%c0_97, %c368, %c0_98], %119 {strides = array<i32>} : memref<1x1536x256xbf16, #tpu.memory_space<vmem>>, vector<1x16x256xbf16>,
    %c0_99 = arith.constant 0 : index
    %c0_100 = arith.constant 0 : index
    %c60 = arith.constant 60 : index
    %120 = vector.load %arg2[%c0_99, %c0_100, %c60] : memref<1x64x384xbf16, #tpu.memory_space<vmem>>, vector<1x16x256xbf16>
    %121 = vector.shape_cast %120 : vector<1x16x256xbf16> to vector<16x256xbf16>
    %c0_101 = arith.constant 0 : index
    %c384 = arith.constant 384 : index
    %c0_102 = arith.constant 0 : index
    %122 = vector.load %arg6[%c0_101, %c384, %c0_102] : memref<1x1536x256xbf16, #tpu.memory_space<vmem>>, vector<1x16x256xbf16>
    %123 = vector.shape_cast %122 : vector<1x16x256xbf16> to vector<16x256xbf16>
    %124 = vector.shape_cast %121 : vector<16x256xbf16> to vector<1x16x256xbf16>
    tpu.vector_store %arg6[%c0_101, %c384, %c0_102], %124 {strides = array<i32>} : memref<1x1536x256xbf16, #tpu.memory_space<vmem>>, vector<1x16x256xbf16>,
    %c0_103 = arith.constant 0 : index
    %c400 = arith.constant 400 : index
    %c0_104 = arith.constant 0 : index
    %125 = vector.load %arg6[%c0_103, %c400, %c0_104] : memref<1x1536x256xbf16, #tpu.memory_space<vmem>>, vector<1x16x256xbf16>
    %126 = vector.shape_cast %125 : vector<1x16x256xbf16> to vector<16x256xbf16>
    %127 = vector.shape_cast %121 : vector<16x256xbf16> to vector<1x16x256xbf16>
    tpu.vector_store %arg6[%c0_103, %c400, %c0_104], %127 {strides = array<i32>} : memref<1x1536x256xbf16, #tpu.memory_space<vmem>>, vector<1x16x256xbf16>,
    %c0_105 = arith.constant 0 : index
    %c48_106 = arith.constant 48 : index
    %c61 = arith.constant 61 : index
    %128 = vector.load %arg2[%c0_105, %c48_106, %c61] : memref<1x64x384xbf16, #tpu.memory_space<vmem>>, vector<1x16x256xbf16>
    %129 = vector.shape_cast %128 : vector<1x16x256xbf16> to vector<16x256xbf16>
    %c0_107 = arith.constant 0 : index
    %c416 = arith.constant 416 : index
    %c0_108 = arith.constant 0 : index
    %130 = vector.load %arg6[%c0_107, %c416, %c0_108] : memref<1x1536x256xbf16, #tpu.memory_space<vmem>>, vector<1x16x256xbf16>
    %131 = vector.shape_cast %130 : vector<1x16x256xbf16> to vector<16x256xbf16>
    %132 = vector.shape_cast %129 : vector<16x256xbf16> to vector<1x16x256xbf16>
    tpu.vector_store %arg6[%c0_107, %c416, %c0_108], %132 {strides = array<i32>} : memref<1x1536x256xbf16, #tpu.memory_space<vmem>>, vector<1x16x256xbf16>,
    %c0_109 = arith.constant 0 : index
    %c32_110 = arith.constant 32 : index
    %c63 = arith.constant 63 : index
    %133 = vector.load %arg2[%c0_109, %c32_110, %c63] : memref<1x64x384xbf16, #tpu.memory_space<vmem>>, vector<1x16x256xbf16>
    %134 = vector.shape_cast %133 : vector<1x16x256xbf16> to vector<16x256xbf16>
    %c0_111 = arith.constant 0 : index
    %c432 = arith.constant 432 : index
    %c0_112 = arith.constant 0 : index
    %135 = vector.load %arg6[%c0_111, %c432, %c0_112] : memref<1x1536x256xbf16, #tpu.memory_space<vmem>>, vector<1x16x256xbf16>
    %136 = vector.shape_cast %135 : vector<1x16x256xbf16> to vector<16x256xbf16>
    %137 = vector.shape_cast %134 : vector<16x256xbf16> to vector<1x16x256xbf16>
    tpu.vector_store %arg6[%c0_111, %c432, %c0_112], %137 {strides = array<i32>} : memref<1x1536x256xbf16, #tpu.memory_space<vmem>>, vector<1x16x256xbf16>,
    %c0_113 = arith.constant 0 : index
    %c48_114 = arith.constant 48 : index
    %c63_115 = arith.constant 63 : index
    %138 = vector.load %arg2[%c0_113, %c48_114, %c63_115] : memref<1x64x384xbf16, #tpu.memory_space<vmem>>, vector<1x16x256xbf16>
    %139 = vector.shape_cast %138 : vector<1x16x256xbf16> to vector<16x256xbf16>
    %c0_116 = arith.constant 0 : index
    %c448 = arith.constant 448 : index
    %c0_117 = arith.constant 0 : index
    %140 = vector.load %arg6[%c0_116, %c448, %c0_117] : memref<1x1536x256xbf16, #tpu.memory_space<vmem>>, vector<1x16x256xbf16>
    %141 = vector.shape_cast %140 : vector<1x16x256xbf16> to vector<16x256xbf16>
    %142 = vector.shape_cast %139 : vector<16x256xbf16> to vector<1x16x256xbf16>
    tpu.vector_store %arg6[%c0_116, %c448, %c0_117], %142 {strides = array<i32>} : memref<1x1536x256xbf16, #tpu.memory_space<vmem>>, vector<1x16x256xbf16>,
    %c0_118 = arith.constant 0 : index
    %c16_119 = arith.constant 16 : index
    %c65 = arith.constant 65 : index
    %143 = vector.load %arg2[%c0_118, %c16_119, %c65] : memref<1x64x384xbf16, #tpu.memory_space<vmem>>, vector<1x16x256xbf16>
    %144 = vector.shape_cast %143 : vector<1x16x256xbf16> to vector<16x256xbf16>
    %c0_120 = arith.constant 0 : index
    %c464 = arith.constant 464 : index
    %c0_121 = arith.constant 0 : index
    %145 = vector.load %arg6[%c0_120, %c464, %c0_121] : memref<1x1536x256xbf16, #tpu.memory_space<vmem>>, vector<1x16x256xbf16>
    %146 = vector.shape_cast %145 : vector<1x16x256xbf16> to vector<16x256xbf16>
    %147 = vector.shape_cast %144 : vector<16x256xbf16> to vector<1x16x256xbf16>
    tpu.vector_store %arg6[%c0_120, %c464, %c0_121], %147 {strides = array<i32>} : memref<1x1536x256xbf16, #tpu.memory_space<vmem>>, vector<1x16x256xbf16>,
    %c0_122 = arith.constant 0 : index
    %c0_123 = arith.constant 0 : index
    %c67 = arith.constant 67 : index
    %148 = vector.load %arg2[%c0_122, %c0_123, %c67] : memref<1x64x384xbf16, #tpu.memory_space<vmem>>, vector<1x16x256xbf16>
    %149 = vector.shape_cast %148 : vector<1x16x256xbf16> to vector<16x256xbf16>
    %c0_124 = arith.constant 0 : index
    %c480 = arith.constant 480 : index
    %c0_125 = arith.constant 0 : index
    %150 = vector.load %arg6[%c0_124, %c480, %c0_125] : memref<1x1536x256xbf16, #tpu.memory_space<vmem>>, vector<1x16x256xbf16>
    %151 = vector.shape_cast %150 : vector<1x16x256xbf16> to vector<16x256xbf16>
    %152 = vector.shape_cast %149 : vector<16x256xbf16> to vector<1x16x256xbf16>
    tpu.vector_store %arg6[%c0_124, %c480, %c0_125], %152 {strides = array<i32>} : memref<1x1536x256xbf16, #tpu.memory_space<vmem>>, vector<1x16x256xbf16>,
    %c0_126 = arith.constant 0 : index
    %c32_127 = arith.constant 32 : index
    %c67_128 = arith.constant 67 : index
    %153 = vector.load %arg2[%c0_126, %c32_127, %c67_128] : memref<1x64x384xbf16, #tpu.memory_space<vmem>>, vector<1x16x256xbf16>
    %154 = vector.shape_cast %153 : vector<1x16x256xbf16> to vector<16x256xbf16>
    %c0_129 = arith.constant 0 : index
    %c496 = arith.constant 496 : index
    %c0_130 = arith.constant 0 : index
    %155 = vector.load %arg6[%c0_129, %c496, %c0_130] : memref<1x1536x256xbf16, #tpu.memory_space<vmem>>, vector<1x16x256xbf16>
    %156 = vector.shape_cast %155 : vector<1x16x256xbf16> to vector<16x256xbf16>
    %157 = vector.shape_cast %154 : vector<16x256xbf16> to vector<1x16x256xbf16>
    tpu.vector_store %arg6[%c0_129, %c496, %c0_130], %157 {strides = array<i32>} : memref<1x1536x256xbf16, #tpu.memory_space<vmem>>, vector<1x16x256xbf16>,
    %c0_131 = arith.constant 0 : index
    %c48_132 = arith.constant 48 : index
    %c68 = arith.constant 68 : index
    %158 = vector.load %arg2[%c0_131, %c48_132, %c68] : memref<1x64x384xbf16, #tpu.memory_space<vmem>>, vector<1x16x256xbf16>
    %159 = vector.shape_cast %158 : vector<1x16x256xbf16> to vector<16x256xbf16>
    %c0_133 = arith.constant 0 : index
    %c512 = arith.constant 512 : index
    %c0_134 = arith.constant 0 : index
    %160 = vector.load %arg6[%c0_133, %c512, %c0_134] : memref<1x1536x256xbf16, #tpu.memory_space<vmem>>, vector<1x16x256xbf16>
    %161 = vector.shape_cast %160 : vector<1x16x256xbf16> to vector<16x256xbf16>
    %162 = vector.shape_cast %159 : vector<16x256xbf16> to vector<1x16x256xbf16>
    tpu.vector_store %arg6[%c0_133, %c512, %c0_134], %162 {strides = array<i32>} : memref<1x1536x256xbf16, #tpu.memory_space<vmem>>, vector<1x16x256xbf16>,
    %c0_135 = arith.constant 0 : index
    %c0_136 = arith.constant 0 : index
    %c69 = arith.constant 69 : index
    %163 = vector.load %arg2[%c0_135, %c0_136, %c69] : memref<1x64x384xbf16, #tpu.memory_space<vmem>>, vector<1x16x256xbf16>
    %164 = vector.shape_cast %163 : vector<1x16x256xbf16> to vector<16x256xbf16>
    %c0_137 = arith.constant 0 : index
    %c528 = arith.constant 528 : index
    %c0_138 = arith.constant 0 : index
    %165 = vector.load %arg6[%c0_137, %c528, %c0_138] : memref<1x1536x256xbf16, #tpu.memory_space<vmem>>, vector<1x16x256xbf16>
    %166 = vector.shape_cast %165 : vector<1x16x256xbf16> to vector<16x256xbf16>
    %167 = vector.shape_cast %164 : vector<16x256xbf16> to vector<1x16x256xbf16>
    tpu.vector_store %arg6[%c0_137, %c528, %c0_138], %167 {strides = array<i32>} : memref<1x1536x256xbf16, #tpu.memory_space<vmem>>, vector<1x16x256xbf16>,
    %c0_139 = arith.constant 0 : index
    %c48_140 = arith.constant 48 : index
    %c69_141 = arith.constant 69 : index
    %168 = vector.load %arg2[%c0_139, %c48_140, %c69_141] : memref<1x64x384xbf16, #tpu.memory_space<vmem>>, vector<1x16x256xbf16>
    %169 = vector.shape_cast %168 : vector<1x16x256xbf16> to vector<16x256xbf16>
    %c0_142 = arith.constant 0 : index
    %c544 = arith.constant 544 : index
    %c0_143 = arith.constant 0 : index
    %170 = vector.load %arg6[%c0_142, %c544, %c0_143] : memref<1x1536x256xbf16, #tpu.memory_space<vmem>>, vector<1x16x256xbf16>
    %171 = vector.shape_cast %170 : vector<1x16x256xbf16> to vector<16x256xbf16>
    %172 = vector.shape_cast %169 : vector<16x256xbf16> to vector<1x16x256xbf16>
    tpu.vector_store %arg6[%c0_142, %c544, %c0_143], %172 {strides = array<i32>} : memref<1x1536x256xbf16, #tpu.memory_space<vmem>>, vector<1x16x256xbf16>,
    %c0_144 = arith.constant 0 : index
    %c32_145 = arith.constant 32 : index
    %c70 = arith.constant 70 : index
    %173 = vector.load %arg2[%c0_144, %c32_145, %c70] : memref<1x64x384xbf16, #tpu.memory_space<vmem>>, vector<1x16x256xbf16>
    %174 = vector.shape_cast %173 : vector<1x16x256xbf16> to vector<16x256xbf16>
    %c0_146 = arith.constant 0 : index
    %c560 = arith.constant 560 : index
    %c0_147 = arith.constant 0 : index
    %175 = vector.load %arg6[%c0_146, %c560, %c0_147] : memref<1x1536x256xbf16, #tpu.memory_space<vmem>>, vector<1x16x256xbf16>
    %176 = vector.shape_cast %175 : vector<1x16x256xbf16> to vector<16x256xbf16>
    %177 = vector.shape_cast %174 : vector<16x256xbf16> to vector<1x16x256xbf16>
    tpu.vector_store %arg6[%c0_146, %c560, %c0_147], %177 {strides = array<i32>} : memref<1x1536x256xbf16, #tpu.memory_space<vmem>>, vector<1x16x256xbf16>,
    %c0_148 = arith.constant 0 : index
    %c576 = arith.constant 576 : index
    %c0_149 = arith.constant 0 : index
    %178 = vector.load %arg6[%c0_148, %c576, %c0_149] : memref<1x1536x256xbf16, #tpu.memory_space<vmem>>, vector<1x16x256xbf16>
    %179 = vector.shape_cast %178 : vector<1x16x256xbf16> to vector<16x256xbf16>
    %180 = vector.shape_cast %174 : vector<16x256xbf16> to vector<1x16x256xbf16>
    tpu.vector_store %arg6[%c0_148, %c576, %c0_149], %180 {strides = array<i32>} : memref<1x1536x256xbf16, #tpu.memory_space<vmem>>, vector<1x16x256xbf16>,
    %c0_150 = arith.constant 0 : index
    %c16_151 = arith.constant 16 : index
    %c71 = arith.constant 71 : index
    %181 = vector.load %arg2[%c0_150, %c16_151, %c71] : memref<1x64x384xbf16, #tpu.memory_space<vmem>>, vector<1x16x256xbf16>
    %182 = vector.shape_cast %181 : vector<1x16x256xbf16> to vector<16x256xbf16>
    %c0_152 = arith.constant 0 : index
    %c592 = arith.constant 592 : index
    %c0_153 = arith.constant 0 : index
    %183 = vector.load %arg6[%c0_152, %c592, %c0_153] : memref<1x1536x256xbf16, #tpu.memory_space<vmem>>, vector<1x16x256xbf16>
    %184 = vector.shape_cast %183 : vector<1x16x256xbf16> to vector<16x256xbf16>
    %185 = vector.shape_cast %182 : vector<16x256xbf16> to vector<1x16x256xbf16>
    tpu.vector_store %arg6[%c0_152, %c592, %c0_153], %185 {strides = array<i32>} : memref<1x1536x256xbf16, #tpu.memory_space<vmem>>, vector<1x16x256xbf16>,
    %c0_154 = arith.constant 0 : index
    %c608 = arith.constant 608 : index
    %c0_155 = arith.constant 0 : index
    %186 = vector.load %arg6[%c0_154, %c608, %c0_155] : memref<1x1536x256xbf16, #tpu.memory_space<vmem>>, vector<1x16x256xbf16>
    %187 = vector.shape_cast %186 : vector<1x16x256xbf16> to vector<16x256xbf16>
    %188 = vector.shape_cast %182 : vector<16x256xbf16> to vector<1x16x256xbf16>
    tpu.vector_store %arg6[%c0_154, %c608, %c0_155], %188 {strides = array<i32>} : memref<1x1536x256xbf16, #tpu.memory_space<vmem>>, vector<1x16x256xbf16>,
    %c0_156 = arith.constant 0 : index
    %c0_157 = arith.constant 0 : index
    %c72 = arith.constant 72 : index
    %189 = vector.load %arg2[%c0_156, %c0_157, %c72] : memref<1x64x384xbf16, #tpu.memory_space<vmem>>, vector<1x16x256xbf16>
    %190 = vector.shape_cast %189 : vector<1x16x256xbf16> to vector<16x256xbf16>
    %c0_158 = arith.constant 0 : index
    %c624 = arith.constant 624 : index
    %c0_159 = arith.constant 0 : index
    %191 = vector.load %arg6[%c0_158, %c624, %c0_159] : memref<1x1536x256xbf16, #tpu.memory_space<vmem>>, vector<1x16x256xbf16>
    %192 = vector.shape_cast %191 : vector<1x16x256xbf16> to vector<16x256xbf16>
    %193 = vector.shape_cast %190 : vector<16x256xbf16> to vector<1x16x256xbf16>
    tpu.vector_store %arg6[%c0_158, %c624, %c0_159], %193 {strides = array<i32>} : memref<1x1536x256xbf16, #tpu.memory_space<vmem>>, vector<1x16x256xbf16>,
    %c0_160 = arith.constant 0 : index
    %c16_161 = arith.constant 16 : index
    %c72_162 = arith.constant 72 : index
    %194 = vector.load %arg2[%c0_160, %c16_161, %c72_162] : memref<1x64x384xbf16, #tpu.memory_space<vmem>>, vector<1x16x256xbf16>
    %195 = vector.shape_cast %194 : vector<1x16x256xbf16> to vector<16x256xbf16>
    %c0_163 = arith.constant 0 : index
    %c640 = arith.constant 640 : index
    %c0_164 = arith.constant 0 : index
    %196 = vector.load %arg6[%c0_163, %c640, %c0_164] : memref<1x1536x256xbf16, #tpu.memory_space<vmem>>, vector<1x16x256xbf16>
    %197 = vector.shape_cast %196 : vector<1x16x256xbf16> to vector<16x256xbf16>
    %198 = vector.shape_cast %195 : vector<16x256xbf16> to vector<1x16x256xbf16>
    tpu.vector_store %arg6[%c0_163, %c640, %c0_164], %198 {strides = array<i32>} : memref<1x1536x256xbf16, #tpu.memory_space<vmem>>, vector<1x16x256xbf16>,
    %c0_165 = arith.constant 0 : index
    %c48_166 = arith.constant 48 : index
    %c72_167 = arith.constant 72 : index
    %199 = vector.load %arg2[%c0_165, %c48_166, %c72_167] : memref<1x64x384xbf16, #tpu.memory_space<vmem>>, vector<1x16x256xbf16>
    %200 = vector.shape_cast %199 : vector<1x16x256xbf16> to vector<16x256xbf16>
    %c0_168 = arith.constant 0 : index
    %c656 = arith.constant 656 : index
    %c0_169 = arith.constant 0 : index
    %201 = vector.load %arg6[%c0_168, %c656, %c0_169] : memref<1x1536x256xbf16, #tpu.memory_space<vmem>>, vector<1x16x256xbf16>
    %202 = vector.shape_cast %201 : vector<1x16x256xbf16> to vector<16x256xbf16>
    %203 = vector.shape_cast %200 : vector<16x256xbf16> to vector<1x16x256xbf16>
    tpu.vector_store %arg6[%c0_168, %c656, %c0_169], %203 {strides = array<i32>} : memref<1x1536x256xbf16, #tpu.memory_space<vmem>>, vector<1x16x256xbf16>,
    %c0_170 = arith.constant 0 : index
    %c32_171 = arith.constant 32 : index
    %c73 = arith.constant 73 : index
    %204 = vector.load %arg2[%c0_170, %c32_171, %c73] : memref<1x64x384xbf16, #tpu.memory_space<vmem>>, vector<1x16x256xbf16>
    %205 = vector.shape_cast %204 : vector<1x16x256xbf16> to vector<16x256xbf16>
    %c0_172 = arith.constant 0 : index
    %c672 = arith.constant 672 : index
    %c0_173 = arith.constant 0 : index
    %206 = vector.load %arg6[%c0_172, %c672, %c0_173] : memref<1x1536x256xbf16, #tpu.memory_space<vmem>>, vector<1x16x256xbf16>
    %207 = vector.shape_cast %206 : vector<1x16x256xbf16> to vector<16x256xbf16>
    %208 = vector.shape_cast %205 : vector<16x256xbf16> to vector<1x16x256xbf16>
    tpu.vector_store %arg6[%c0_172, %c672, %c0_173], %208 {strides = array<i32>} : memref<1x1536x256xbf16, #tpu.memory_space<vmem>>, vector<1x16x256xbf16>,
    %c0_174 = arith.constant 0 : index
    %c0_175 = arith.constant 0 : index
    %c74 = arith.constant 74 : index
    %209 = vector.load %arg2[%c0_174, %c0_175, %c74] : memref<1x64x384xbf16, #tpu.memory_space<vmem>>, vector<1x16x256xbf16>
    %210 = vector.shape_cast %209 : vector<1x16x256xbf16> to vector<16x256xbf16>
    %c0_176 = arith.constant 0 : index
    %c688 = arith.constant 688 : index
    %c0_177 = arith.constant 0 : index
    %211 = vector.load %arg6[%c0_176, %c688, %c0_177] : memref<1x1536x256xbf16, #tpu.memory_space<vmem>>, vector<1x16x256xbf16>
    %212 = vector.shape_cast %211 : vector<1x16x256xbf16> to vector<16x256xbf16>
    %213 = vector.shape_cast %210 : vector<16x256xbf16> to vector<1x16x256xbf16>
    tpu.vector_store %arg6[%c0_176, %c688, %c0_177], %213 {strides = array<i32>} : memref<1x1536x256xbf16, #tpu.memory_space<vmem>>, vector<1x16x256xbf16>,
    %c0_178 = arith.constant 0 : index
    %c16_179 = arith.constant 16 : index
    %c74_180 = arith.constant 74 : index
    %214 = vector.load %arg2[%c0_178, %c16_179, %c74_180] : memref<1x64x384xbf16, #tpu.memory_space<vmem>>, vector<1x16x256xbf16>
    %215 = vector.shape_cast %214 : vector<1x16x256xbf16> to vector<16x256xbf16>
    %c0_181 = arith.constant 0 : index
    %c704 = arith.constant 704 : index
    %c0_182 = arith.constant 0 : index
    %216 = vector.load %arg6[%c0_181, %c704, %c0_182] : memref<1x1536x256xbf16, #tpu.memory_space<vmem>>, vector<1x16x256xbf16>
    %217 = vector.shape_cast %216 : vector<1x16x256xbf16> to vector<16x256xbf16>
    %218 = vector.shape_cast %215 : vector<16x256xbf16> to vector<1x16x256xbf16>
    tpu.vector_store %arg6[%c0_181, %c704, %c0_182], %218 {strides = array<i32>} : memref<1x1536x256xbf16, #tpu.memory_space<vmem>>, vector<1x16x256xbf16>,
    %c0_183 = arith.constant 0 : index
    %c0_184 = arith.constant 0 : index
    %c75 = arith.constant 75 : index
    %219 = vector.load %arg2[%c0_183, %c0_184, %c75] : memref<1x64x384xbf16, #tpu.memory_space<vmem>>, vector<1x16x256xbf16>
    %220 = vector.shape_cast %219 : vector<1x16x256xbf16> to vector<16x256xbf16>
    %c0_185 = arith.constant 0 : index
    %c720 = arith.constant 720 : index
    %c0_186 = arith.constant 0 : index
    %221 = vector.load %arg6[%c0_185, %c720, %c0_186] : memref<1x1536x256xbf16, #tpu.memory_space<vmem>>, vector<1x16x256xbf16>
    %222 = vector.shape_cast %221 : vector<1x16x256xbf16> to vector<16x256xbf16>
    %223 = vector.shape_cast %220 : vector<16x256xbf16> to vector<1x16x256xbf16>
    tpu.vector_store %arg6[%c0_185, %c720, %c0_186], %223 {strides = array<i32>} : memref<1x1536x256xbf16, #tpu.memory_space<vmem>>, vector<1x16x256xbf16>,
    %c0_187 = arith.constant 0 : index
    %c736 = arith.constant 736 : index
    %c0_188 = arith.constant 0 : index
    %224 = vector.load %arg6[%c0_187, %c736, %c0_188] : memref<1x1536x256xbf16, #tpu.memory_space<vmem>>, vector<1x16x256xbf16>
    %225 = vector.shape_cast %224 : vector<1x16x256xbf16> to vector<16x256xbf16>
    %226 = vector.shape_cast %220 : vector<16x256xbf16> to vector<1x16x256xbf16>
    tpu.vector_store %arg6[%c0_187, %c736, %c0_188], %226 {strides = array<i32>} : memref<1x1536x256xbf16, #tpu.memory_space<vmem>>, vector<1x16x256xbf16>,
    %c0_189 = arith.constant 0 : index
    %c48_190 = arith.constant 48 : index
    %c75_191 = arith.constant 75 : index
    %227 = vector.load %arg2[%c0_189, %c48_190, %c75_191] : memref<1x64x384xbf16, #tpu.memory_space<vmem>>, vector<1x16x256xbf16>
    %228 = vector.shape_cast %227 : vector<1x16x256xbf16> to vector<16x256xbf16>
    %c0_192 = arith.constant 0 : index
    %c752 = arith.constant 752 : index
    %c0_193 = arith.constant 0 : index
    %229 = vector.load %arg6[%c0_192, %c752, %c0_193] : memref<1x1536x256xbf16, #tpu.memory_space<vmem>>, vector<1x16x256xbf16>
    %230 = vector.shape_cast %229 : vector<1x16x256xbf16> to vector<16x256xbf16>
    %231 = vector.shape_cast %228 : vector<16x256xbf16> to vector<1x16x256xbf16>
    tpu.vector_store %arg6[%c0_192, %c752, %c0_193], %231 {strides = array<i32>} : memref<1x1536x256xbf16, #tpu.memory_space<vmem>>, vector<1x16x256xbf16>,
    %c0_194 = arith.constant 0 : index
    %c768 = arith.constant 768 : index
    %c0_195 = arith.constant 0 : index
    %232 = vector.load %arg6[%c0_194, %c768, %c0_195] : memref<1x1536x256xbf16, #tpu.memory_space<vmem>>, vector<1x16x256xbf16>
    %233 = vector.shape_cast %232 : vector<1x16x256xbf16> to vector<16x256xbf16>
    %234 = vector.shape_cast %228 : vector<16x256xbf16> to vector<1x16x256xbf16>
    tpu.vector_store %arg6[%c0_194, %c768, %c0_195], %234 {strides = array<i32>} : memref<1x1536x256xbf16, #tpu.memory_space<vmem>>, vector<1x16x256xbf16>,
    %c0_196 = arith.constant 0 : index
    %c32_197 = arith.constant 32 : index
    %c76 = arith.constant 76 : index
    %235 = vector.load %arg2[%c0_196, %c32_197, %c76] : memref<1x64x384xbf16, #tpu.memory_space<vmem>>, vector<1x16x256xbf16>
    %236 = vector.shape_cast %235 : vector<1x16x256xbf16> to vector<16x256xbf16>
    %c0_198 = arith.constant 0 : index
    %c784 = arith.constant 784 : index
    %c0_199 = arith.constant 0 : index
    %237 = vector.load %arg6[%c0_198, %c784, %c0_199] : memref<1x1536x256xbf16, #tpu.memory_space<vmem>>, vector<1x16x256xbf16>
    %238 = vector.shape_cast %237 : vector<1x16x256xbf16> to vector<16x256xbf16>
    %239 = vector.shape_cast %236 : vector<16x256xbf16> to vector<1x16x256xbf16>
    tpu.vector_store %arg6[%c0_198, %c784, %c0_199], %239 {strides = array<i32>} : memref<1x1536x256xbf16, #tpu.memory_space<vmem>>, vector<1x16x256xbf16>,
    %c0_200 = arith.constant 0 : index
    %c16_201 = arith.constant 16 : index
    %c77 = arith.constant 77 : index
    %240 = vector.load %arg2[%c0_200, %c16_201, %c77] : memref<1x64x384xbf16, #tpu.memory_space<vmem>>, vector<1x16x256xbf16>
    %241 = vector.shape_cast %240 : vector<1x16x256xbf16> to vector<16x256xbf16>
    %c0_202 = arith.constant 0 : index
    %c800 = arith.constant 800 : index
    %c0_203 = arith.constant 0 : index
    %242 = vector.load %arg6[%c0_202, %c800, %c0_203] : memref<1x1536x256xbf16, #tpu.memory_space<vmem>>, vector<1x16x256xbf16>
    %243 = vector.shape_cast %242 : vector<1x16x256xbf16> to vector<16x256xbf16>
    %244 = vector.shape_cast %241 : vector<16x256xbf16> to vector<1x16x256xbf16>
    tpu.vector_store %arg6[%c0_202, %c800, %c0_203], %244 {strides = array<i32>} : memref<1x1536x256xbf16, #tpu.memory_space<vmem>>, vector<1x16x256xbf16>,
    %c0_204 = arith.constant 0 : index
    %c32_205 = arith.constant 32 : index
    %c77_206 = arith.constant 77 : index
    %245 = vector.load %arg2[%c0_204, %c32_205, %c77_206] : memref<1x64x384xbf16, #tpu.memory_space<vmem>>, vector<1x16x256xbf16>
    %246 = vector.shape_cast %245 : vector<1x16x256xbf16> to vector<16x256xbf16>
    %c0_207 = arith.constant 0 : index
    %c816 = arith.constant 816 : index
    %c0_208 = arith.constant 0 : index
    %247 = vector.load %arg6[%c0_207, %c816, %c0_208] : memref<1x1536x256xbf16, #tpu.memory_space<vmem>>, vector<1x16x256xbf16>
    %248 = vector.shape_cast %247 : vector<1x16x256xbf16> to vector<16x256xbf16>
    %249 = vector.shape_cast %246 : vector<16x256xbf16> to vector<1x16x256xbf16>
    tpu.vector_store %arg6[%c0_207, %c816, %c0_208], %249 {strides = array<i32>} : memref<1x1536x256xbf16, #tpu.memory_space<vmem>>, vector<1x16x256xbf16>,
    %c0_209 = arith.constant 0 : index
    %c0_210 = arith.constant 0 : index
    %c78 = arith.constant 78 : index
    %250 = vector.load %arg2[%c0_209, %c0_210, %c78] : memref<1x64x384xbf16, #tpu.memory_space<vmem>>, vector<1x16x256xbf16>
    %251 = vector.shape_cast %250 : vector<1x16x256xbf16> to vector<16x256xbf16>
    %c0_211 = arith.constant 0 : index
    %c832 = arith.constant 832 : index
    %c0_212 = arith.constant 0 : index
    %252 = vector.load %arg6[%c0_211, %c832, %c0_212] : memref<1x1536x256xbf16, #tpu.memory_space<vmem>>, vector<1x16x256xbf16>
    %253 = vector.shape_cast %252 : vector<1x16x256xbf16> to vector<16x256xbf16>
    %254 = vector.shape_cast %251 : vector<16x256xbf16> to vector<1x16x256xbf16>
    tpu.vector_store %arg6[%c0_211, %c832, %c0_212], %254 {strides = array<i32>} : memref<1x1536x256xbf16, #tpu.memory_space<vmem>>, vector<1x16x256xbf16>,
    %c0_213 = arith.constant 0 : index
    %c48_214 = arith.constant 48 : index
    %c78_215 = arith.constant 78 : index
    %255 = vector.load %arg2[%c0_213, %c48_214, %c78_215] : memref<1x64x384xbf16, #tpu.memory_space<vmem>>, vector<1x16x256xbf16>
    %256 = vector.shape_cast %255 : vector<1x16x256xbf16> to vector<16x256xbf16>
    %c0_216 = arith.constant 0 : index
    %c848 = arith.constant 848 : index
    %c0_217 = arith.constant 0 : index
    %257 = vector.load %arg6[%c0_216, %c848, %c0_217] : memref<1x1536x256xbf16, #tpu.memory_space<vmem>>, vector<1x16x256xbf16>
    %258 = vector.shape_cast %257 : vector<1x16x256xbf16> to vector<16x256xbf16>
    %259 = vector.shape_cast %256 : vector<16x256xbf16> to vector<1x16x256xbf16>
    tpu.vector_store %arg6[%c0_216, %c848, %c0_217], %259 {strides = array<i32>} : memref<1x1536x256xbf16, #tpu.memory_space<vmem>>, vector<1x16x256xbf16>,
    %c0_218 = arith.constant 0 : index
    %c864 = arith.constant 864 : index
    %c0_219 = arith.constant 0 : index
    %260 = vector.load %arg6[%c0_218, %c864, %c0_219] : memref<1x1536x256xbf16, #tpu.memory_space<vmem>>, vector<1x16x256xbf16>
    %261 = vector.shape_cast %260 : vector<1x16x256xbf16> to vector<16x256xbf16>
    %262 = vector.shape_cast %256 : vector<16x256xbf16> to vector<1x16x256xbf16>
    tpu.vector_store %arg6[%c0_218, %c864, %c0_219], %262 {strides = array<i32>} : memref<1x1536x256xbf16, #tpu.memory_space<vmem>>, vector<1x16x256xbf16>,
    %c0_220 = arith.constant 0 : index
    %c16_221 = arith.constant 16 : index
    %c79 = arith.constant 79 : index
    %263 = vector.load %arg2[%c0_220, %c16_221, %c79] : memref<1x64x384xbf16, #tpu.memory_space<vmem>>, vector<1x16x256xbf16>
    %264 = vector.shape_cast %263 : vector<1x16x256xbf16> to vector<16x256xbf16>
    %c0_222 = arith.constant 0 : index
    %c880 = arith.constant 880 : index
    %c0_223 = arith.constant 0 : index
    %265 = vector.load %arg6[%c0_222, %c880, %c0_223] : memref<1x1536x256xbf16, #tpu.memory_space<vmem>>, vector<1x16x256xbf16>
    %266 = vector.shape_cast %265 : vector<1x16x256xbf16> to vector<16x256xbf16>
    %267 = vector.shape_cast %264 : vector<16x256xbf16> to vector<1x16x256xbf16>
    tpu.vector_store %arg6[%c0_222, %c880, %c0_223], %267 {strides = array<i32>} : memref<1x1536x256xbf16, #tpu.memory_space<vmem>>, vector<1x16x256xbf16>,
    %c0_224 = arith.constant 0 : index
    %c32_225 = arith.constant 32 : index
    %c79_226 = arith.constant 79 : index
    %268 = vector.load %arg2[%c0_224, %c32_225, %c79_226] : memref<1x64x384xbf16, #tpu.memory_space<vmem>>, vector<1x16x256xbf16>
    %269 = vector.shape_cast %268 : vector<1x16x256xbf16> to vector<16x256xbf16>
    %c0_227 = arith.constant 0 : index
    %c896 = arith.constant 896 : index
    %c0_228 = arith.constant 0 : index
    %270 = vector.load %arg6[%c0_227, %c896, %c0_228] : memref<1x1536x256xbf16, #tpu.memory_space<vmem>>, vector<1x16x256xbf16>
    %271 = vector.shape_cast %270 : vector<1x16x256xbf16> to vector<16x256xbf16>
    %272 = vector.shape_cast %269 : vector<16x256xbf16> to vector<1x16x256xbf16>
    tpu.vector_store %arg6[%c0_227, %c896, %c0_228], %272 {strides = array<i32>} : memref<1x1536x256xbf16, #tpu.memory_space<vmem>>, vector<1x16x256xbf16>,
    %c0_229 = arith.constant 0 : index
    %c16_230 = arith.constant 16 : index
    %c80_231 = arith.constant 80 : index
    %273 = vector.load %arg2[%c0_229, %c16_230, %c80_231] : memref<1x64x384xbf16, #tpu.memory_space<vmem>>, vector<1x16x256xbf16>
    %274 = vector.shape_cast %273 : vector<1x16x256xbf16> to vector<16x256xbf16>
    %c0_232 = arith.constant 0 : index
    %c912 = arith.constant 912 : index
    %c0_233 = arith.constant 0 : index
    %275 = vector.load %arg6[%c0_232, %c912, %c0_233] : memref<1x1536x256xbf16, #tpu.memory_space<vmem>>, vector<1x16x256xbf16>
    %276 = vector.shape_cast %275 : vector<1x16x256xbf16> to vector<16x256xbf16>
    %277 = vector.shape_cast %274 : vector<16x256xbf16> to vector<1x16x256xbf16>
    tpu.vector_store %arg6[%c0_232, %c912, %c0_233], %277 {strides = array<i32>} : memref<1x1536x256xbf16, #tpu.memory_space<vmem>>, vector<1x16x256xbf16>,
    %c0_234 = arith.constant 0 : index
    %c32_235 = arith.constant 32 : index
    %c80_236 = arith.constant 80 : index
    %278 = vector.load %arg2[%c0_234, %c32_235, %c80_236] : memref<1x64x384xbf16, #tpu.memory_space<vmem>>, vector<1x16x256xbf16>
    %279 = vector.shape_cast %278 : vector<1x16x256xbf16> to vector<16x256xbf16>
    %c0_237 = arith.constant 0 : index
    %c928 = arith.constant 928 : index
    %c0_238 = arith.constant 0 : index
    %280 = vector.load %arg6[%c0_237, %c928, %c0_238] : memref<1x1536x256xbf16, #tpu.memory_space<vmem>>, vector<1x16x256xbf16>
    %281 = vector.shape_cast %280 : vector<1x16x256xbf16> to vector<16x256xbf16>
    %282 = vector.shape_cast %279 : vector<16x256xbf16> to vector<1x16x256xbf16>
    tpu.vector_store %arg6[%c0_237, %c928, %c0_238], %282 {strides = array<i32>} : memref<1x1536x256xbf16, #tpu.memory_space<vmem>>, vector<1x16x256xbf16>,
    %c0_239 = arith.constant 0 : index
    %c48_240 = arith.constant 48 : index
    %c80_241 = arith.constant 80 : index
    %283 = vector.load %arg2[%c0_239, %c48_240, %c80_241] : memref<1x64x384xbf16, #tpu.memory_space<vmem>>, vector<1x16x256xbf16>
    %284 = vector.shape_cast %283 : vector<1x16x256xbf16> to vector<16x256xbf16>
    %c0_242 = arith.constant 0 : index
    %c944 = arith.constant 944 : index
    %c0_243 = arith.constant 0 : index
    %285 = vector.load %arg6[%c0_242, %c944, %c0_243] : memref<1x1536x256xbf16, #tpu.memory_space<vmem>>, vector<1x16x256xbf16>
    %286 = vector.shape_cast %285 : vector<1x16x256xbf16> to vector<16x256xbf16>
    %287 = vector.shape_cast %284 : vector<16x256xbf16> to vector<1x16x256xbf16>
    tpu.vector_store %arg6[%c0_242, %c944, %c0_243], %287 {strides = array<i32>} : memref<1x1536x256xbf16, #tpu.memory_space<vmem>>, vector<1x16x256xbf16>,
    %c0_244 = arith.constant 0 : index
    %c0_245 = arith.constant 0 : index
    %c81 = arith.constant 81 : index
    %288 = vector.load %arg2[%c0_244, %c0_245, %c81] : memref<1x64x384xbf16, #tpu.memory_space<vmem>>, vector<1x16x256xbf16>
    %289 = vector.shape_cast %288 : vector<1x16x256xbf16> to vector<16x256xbf16>
    %c0_246 = arith.constant 0 : index
    %c960 = arith.constant 960 : index
    %c0_247 = arith.constant 0 : index
    %290 = vector.load %arg6[%c0_246, %c960, %c0_247] : memref<1x1536x256xbf16, #tpu.memory_space<vmem>>, vector<1x16x256xbf16>
    %291 = vector.shape_cast %290 : vector<1x16x256xbf16> to vector<16x256xbf16>
    %292 = vector.shape_cast %289 : vector<16x256xbf16> to vector<1x16x256xbf16>
    tpu.vector_store %arg6[%c0_246, %c960, %c0_247], %292 {strides = array<i32>} : memref<1x1536x256xbf16, #tpu.memory_space<vmem>>, vector<1x16x256xbf16>,
    %c0_248 = arith.constant 0 : index
    %c976 = arith.constant 976 : index
    %c0_249 = arith.constant 0 : index
    %293 = vector.load %arg6[%c0_248, %c976, %c0_249] : memref<1x1536x256xbf16, #tpu.memory_space<vmem>>, vector<1x16x256xbf16>
    %294 = vector.shape_cast %293 : vector<1x16x256xbf16> to vector<16x256xbf16>
    %295 = vector.shape_cast %289 : vector<16x256xbf16> to vector<1x16x256xbf16>
    tpu.vector_store %arg6[%c0_248, %c976, %c0_249], %295 {strides = array<i32>} : memref<1x1536x256xbf16, #tpu.memory_space<vmem>>, vector<1x16x256xbf16>,
    %c0_250 = arith.constant 0 : index
    %c992 = arith.constant 992 : index
    %c0_251 = arith.constant 0 : index
    %296 = vector.load %arg6[%c0_250, %c992, %c0_251] : memref<1x1536x256xbf16, #tpu.memory_space<vmem>>, vector<1x16x256xbf16>
    %297 = vector.shape_cast %296 : vector<1x16x256xbf16> to vector<16x256xbf16>
    %298 = vector.shape_cast %289 : vector<16x256xbf16> to vector<1x16x256xbf16>
    tpu.vector_store %arg6[%c0_250, %c992, %c0_251], %298 {strides = array<i32>} : memref<1x1536x256xbf16, #tpu.memory_space<vmem>>, vector<1x16x256xbf16>,
    %c0_252 = arith.constant 0 : index
    %c16_253 = arith.constant 16 : index
    %c81_254 = arith.constant 81 : index
    %299 = vector.load %arg2[%c0_252, %c16_253, %c81_254] : memref<1x64x384xbf16, #tpu.memory_space<vmem>>, vector<1x16x256xbf16>
    %300 = vector.shape_cast %299 : vector<1x16x256xbf16> to vector<16x256xbf16>
    %c0_255 = arith.constant 0 : index
    %c1008 = arith.constant 1008 : index
    %c0_256 = arith.constant 0 : index
    %301 = vector.load %arg6[%c0_255, %c1008, %c0_256] : memref<1x1536x256xbf16, #tpu.memory_space<vmem>>, vector<1x16x256xbf16>
    %302 = vector.shape_cast %301 : vector<1x16x256xbf16> to vector<16x256xbf16>
    %303 = vector.shape_cast %300 : vector<16x256xbf16> to vector<1x16x256xbf16>
    tpu.vector_store %arg6[%c0_255, %c1008, %c0_256], %303 {strides = array<i32>} : memref<1x1536x256xbf16, #tpu.memory_space<vmem>>, vector<1x16x256xbf16>,
    %c0_257 = arith.constant 0 : index
    %c32_258 = arith.constant 32 : index
    %c81_259 = arith.constant 81 : index
    %304 = vector.load %arg2[%c0_257, %c32_258, %c81_259] : memref<1x64x384xbf16, #tpu.memory_space<vmem>>, vector<1x16x256xbf16>
    %305 = vector.shape_cast %304 : vector<1x16x256xbf16> to vector<16x256xbf16>
    %c0_260 = arith.constant 0 : index
    %c1024 = arith.constant 1024 : index
    %c0_261 = arith.constant 0 : index
    %306 = vector.load %arg6[%c0_260, %c1024, %c0_261] : memref<1x1536x256xbf16, #tpu.memory_space<vmem>>, vector<1x16x256xbf16>
    %307 = vector.shape_cast %306 : vector<1x16x256xbf16> to vector<16x256xbf16>
    %308 = vector.shape_cast %305 : vector<16x256xbf16> to vector<1x16x256xbf16>
    tpu.vector_store %arg6[%c0_260, %c1024, %c0_261], %308 {strides = array<i32>} : memref<1x1536x256xbf16, #tpu.memory_space<vmem>>, vector<1x16x256xbf16>,
    %c0_262 = arith.constant 0 : index
    %c48_263 = arith.constant 48 : index
    %c81_264 = arith.constant 81 : index
    %309 = vector.load %arg2[%c0_262, %c48_263, %c81_264] : memref<1x64x384xbf16, #tpu.memory_space<vmem>>, vector<1x16x256xbf16>
    %310 = vector.shape_cast %309 : vector<1x16x256xbf16> to vector<16x256xbf16>
    %c0_265 = arith.constant 0 : index
    %c1040 = arith.constant 1040 : index
    %c0_266 = arith.constant 0 : index
    %311 = vector.load %arg6[%c0_265, %c1040, %c0_266] : memref<1x1536x256xbf16, #tpu.memory_space<vmem>>, vector<1x16x256xbf16>
    %312 = vector.shape_cast %311 : vector<1x16x256xbf16> to vector<16x256xbf16>
    %313 = vector.shape_cast %310 : vector<16x256xbf16> to vector<1x16x256xbf16>
    tpu.vector_store %arg6[%c0_265, %c1040, %c0_266], %313 {strides = array<i32>} : memref<1x1536x256xbf16, #tpu.memory_space<vmem>>, vector<1x16x256xbf16>,
    %c0_267 = arith.constant 0 : index
    %c1056 = arith.constant 1056 : index
    %c0_268 = arith.constant 0 : index
    %314 = vector.load %arg6[%c0_267, %c1056, %c0_268] : memref<1x1536x256xbf16, #tpu.memory_space<vmem>>, vector<1x16x256xbf16>
    %315 = vector.shape_cast %314 : vector<1x16x256xbf16> to vector<16x256xbf16>
    %316 = vector.shape_cast %310 : vector<16x256xbf16> to vector<1x16x256xbf16>
    tpu.vector_store %arg6[%c0_267, %c1056, %c0_268], %316 {strides = array<i32>} : memref<1x1536x256xbf16, #tpu.memory_space<vmem>>, vector<1x16x256xbf16>,
    %c0_269 = arith.constant 0 : index
    %c0_270 = arith.constant 0 : index
    %c82 = arith.constant 82 : index
    %317 = vector.load %arg2[%c0_269, %c0_270, %c82] : memref<1x64x384xbf16, #tpu.memory_space<vmem>>, vector<1x16x256xbf16>
    %318 = vector.shape_cast %317 : vector<1x16x256xbf16> to vector<16x256xbf16>
    %c0_271 = arith.constant 0 : index
    %c1072 = arith.constant 1072 : index
    %c0_272 = arith.constant 0 : index
    %319 = vector.load %arg6[%c0_271, %c1072, %c0_272] : memref<1x1536x256xbf16, #tpu.memory_space<vmem>>, vector<1x16x256xbf16>
    %320 = vector.shape_cast %319 : vector<1x16x256xbf16> to vector<16x256xbf16>
    %321 = vector.shape_cast %318 : vector<16x256xbf16> to vector<1x16x256xbf16>
    tpu.vector_store %arg6[%c0_271, %c1072, %c0_272], %321 {strides = array<i32>} : memref<1x1536x256xbf16, #tpu.memory_space<vmem>>, vector<1x16x256xbf16>,
    %c0_273 = arith.constant 0 : index
    %c16_274 = arith.constant 16 : index
    %c82_275 = arith.constant 82 : index
    %322 = vector.load %arg2[%c0_273, %c16_274, %c82_275] : memref<1x64x384xbf16, #tpu.memory_space<vmem>>, vector<1x16x256xbf16>
    %323 = vector.shape_cast %322 : vector<1x16x256xbf16> to vector<16x256xbf16>
    %c0_276 = arith.constant 0 : index
    %c1088 = arith.constant 1088 : index
    %c0_277 = arith.constant 0 : index
    %324 = vector.load %arg6[%c0_276, %c1088, %c0_277] : memref<1x1536x256xbf16, #tpu.memory_space<vmem>>, vector<1x16x256xbf16>
    %325 = vector.shape_cast %324 : vector<1x16x256xbf16> to vector<16x256xbf16>
    %326 = vector.shape_cast %323 : vector<16x256xbf16> to vector<1x16x256xbf16>
    tpu.vector_store %arg6[%c0_276, %c1088, %c0_277], %326 {strides = array<i32>} : memref<1x1536x256xbf16, #tpu.memory_space<vmem>>, vector<1x16x256xbf16>,
    %c0_278 = arith.constant 0 : index
    %c32_279 = arith.constant 32 : index
    %c82_280 = arith.constant 82 : index
    %327 = vector.load %arg2[%c0_278, %c32_279, %c82_280] : memref<1x64x384xbf16, #tpu.memory_space<vmem>>, vector<1x16x256xbf16>
    %328 = vector.shape_cast %327 : vector<1x16x256xbf16> to vector<16x256xbf16>
    %c0_281 = arith.constant 0 : index
    %c1104 = arith.constant 1104 : index
    %c0_282 = arith.constant 0 : index
    %329 = vector.load %arg6[%c0_281, %c1104, %c0_282] : memref<1x1536x256xbf16, #tpu.memory_space<vmem>>, vector<1x16x256xbf16>
    %330 = vector.shape_cast %329 : vector<1x16x256xbf16> to vector<16x256xbf16>
    %331 = vector.shape_cast %328 : vector<16x256xbf16> to vector<1x16x256xbf16>
    tpu.vector_store %arg6[%c0_281, %c1104, %c0_282], %331 {strides = array<i32>} : memref<1x1536x256xbf16, #tpu.memory_space<vmem>>, vector<1x16x256xbf16>,
    %c0_283 = arith.constant 0 : index
    %c1120 = arith.constant 1120 : index
    %c0_284 = arith.constant 0 : index
    %332 = vector.load %arg6[%c0_283, %c1120, %c0_284] : memref<1x1536x256xbf16, #tpu.memory_space<vmem>>, vector<1x16x256xbf16>
    %333 = vector.shape_cast %332 : vector<1x16x256xbf16> to vector<16x256xbf16>
    %334 = vector.shape_cast %328 : vector<16x256xbf16> to vector<1x16x256xbf16>
    tpu.vector_store %arg6[%c0_283, %c1120, %c0_284], %334 {strides = array<i32>} : memref<1x1536x256xbf16, #tpu.memory_space<vmem>>, vector<1x16x256xbf16>,
    %c0_285 = arith.constant 0 : index
    %c1136 = arith.constant 1136 : index
    %c0_286 = arith.constant 0 : index
    %335 = vector.load %arg6[%c0_285, %c1136, %c0_286] : memref<1x1536x256xbf16, #tpu.memory_space<vmem>>, vector<1x16x256xbf16>
    %336 = vector.shape_cast %335 : vector<1x16x256xbf16> to vector<16x256xbf16>
    %337 = vector.shape_cast %328 : vector<16x256xbf16> to vector<1x16x256xbf16>
    tpu.vector_store %arg6[%c0_285, %c1136, %c0_286], %337 {strides = array<i32>} : memref<1x1536x256xbf16, #tpu.memory_space<vmem>>, vector<1x16x256xbf16>,
    %c0_287 = arith.constant 0 : index
    %c48_288 = arith.constant 48 : index
    %c82_289 = arith.constant 82 : index
    %338 = vector.load %arg2[%c0_287, %c48_288, %c82_289] : memref<1x64x384xbf16, #tpu.memory_space<vmem>>, vector<1x16x256xbf16>
    %339 = vector.shape_cast %338 : vector<1x16x256xbf16> to vector<16x256xbf16>
    %c0_290 = arith.constant 0 : index
    %c1152 = arith.constant 1152 : index
    %c0_291 = arith.constant 0 : index
    %340 = vector.load %arg6[%c0_290, %c1152, %c0_291] : memref<1x1536x256xbf16, #tpu.memory_space<vmem>>, vector<1x16x256xbf16>
    %341 = vector.shape_cast %340 : vector<1x16x256xbf16> to vector<16x256xbf16>
    %342 = vector.shape_cast %339 : vector<16x256xbf16> to vector<1x16x256xbf16>
    tpu.vector_store %arg6[%c0_290, %c1152, %c0_291], %342 {strides = array<i32>} : memref<1x1536x256xbf16, #tpu.memory_space<vmem>>, vector<1x16x256xbf16>,
    %c0_292 = arith.constant 0 : index
    %c1168 = arith.constant 1168 : index
    %c0_293 = arith.constant 0 : index
    %343 = vector.load %arg6[%c0_292, %c1168, %c0_293] : memref<1x1536x256xbf16, #tpu.memory_space<vmem>>, vector<1x16x256xbf16>
    %344 = vector.shape_cast %343 : vector<1x16x256xbf16> to vector<16x256xbf16>
    %345 = vector.shape_cast %339 : vector<16x256xbf16> to vector<1x16x256xbf16>
    tpu.vector_store %arg6[%c0_292, %c1168, %c0_293], %345 {strides = array<i32>} : memref<1x1536x256xbf16, #tpu.memory_space<vmem>>, vector<1x16x256xbf16>,
    %c0_294 = arith.constant 0 : index
    %c0_295 = arith.constant 0 : index
    %c83 = arith.constant 83 : index
    %346 = vector.load %arg2[%c0_294, %c0_295, %c83] : memref<1x64x384xbf16, #tpu.memory_space<vmem>>, vector<1x16x256xbf16>
    %347 = vector.shape_cast %346 : vector<1x16x256xbf16> to vector<16x256xbf16>
    %c0_296 = arith.constant 0 : index
    %c1184 = arith.constant 1184 : index
    %c0_297 = arith.constant 0 : index
    %348 = vector.load %arg6[%c0_296, %c1184, %c0_297] : memref<1x1536x256xbf16, #tpu.memory_space<vmem>>, vector<1x16x256xbf16>
    %349 = vector.shape_cast %348 : vector<1x16x256xbf16> to vector<16x256xbf16>
    %350 = vector.shape_cast %347 : vector<16x256xbf16> to vector<1x16x256xbf16>
    tpu.vector_store %arg6[%c0_296, %c1184, %c0_297], %350 {strides = array<i32>} : memref<1x1536x256xbf16, #tpu.memory_space<vmem>>, vector<1x16x256xbf16>,
    %c0_298 = arith.constant 0 : index
    %c16_299 = arith.constant 16 : index
    %c83_300 = arith.constant 83 : index
    %351 = vector.load %arg2[%c0_298, %c16_299, %c83_300] : memref<1x64x384xbf16, #tpu.memory_space<vmem>>, vector<1x16x256xbf16>
    %352 = vector.shape_cast %351 : vector<1x16x256xbf16> to vector<16x256xbf16>
    %c0_301 = arith.constant 0 : index
    %c1200 = arith.constant 1200 : index
    %c0_302 = arith.constant 0 : index
    %353 = vector.load %arg6[%c0_301, %c1200, %c0_302] : memref<1x1536x256xbf16, #tpu.memory_space<vmem>>, vector<1x16x256xbf16>
    %354 = vector.shape_cast %353 : vector<1x16x256xbf16> to vector<16x256xbf16>
    %355 = vector.shape_cast %352 : vector<16x256xbf16> to vector<1x16x256xbf16>
    tpu.vector_store %arg6[%c0_301, %c1200, %c0_302], %355 {strides = array<i32>} : memref<1x1536x256xbf16, #tpu.memory_space<vmem>>, vector<1x16x256xbf16>,
    %c0_303 = arith.constant 0 : index
    %c1216 = arith.constant 1216 : index
    %c0_304 = arith.constant 0 : index
    %356 = vector.load %arg6[%c0_303, %c1216, %c0_304] : memref<1x1536x256xbf16, #tpu.memory_space<vmem>>, vector<1x16x256xbf16>
    %357 = vector.shape_cast %356 : vector<1x16x256xbf16> to vector<16x256xbf16>
    %358 = vector.shape_cast %352 : vector<16x256xbf16> to vector<1x16x256xbf16>
    tpu.vector_store %arg6[%c0_303, %c1216, %c0_304], %358 {strides = array<i32>} : memref<1x1536x256xbf16, #tpu.memory_space<vmem>>, vector<1x16x256xbf16>,
    %c0_305 = arith.constant 0 : index
    %c32_306 = arith.constant 32 : index
    %c83_307 = arith.constant 83 : index
    %359 = vector.load %arg2[%c0_305, %c32_306, %c83_307] : memref<1x64x384xbf16, #tpu.memory_space<vmem>>, vector<1x16x256xbf16>
    %360 = vector.shape_cast %359 : vector<1x16x256xbf16> to vector<16x256xbf16>
    %c0_308 = arith.constant 0 : index
    %c1232 = arith.constant 1232 : index
    %c0_309 = arith.constant 0 : index
    %361 = vector.load %arg6[%c0_308, %c1232, %c0_309] : memref<1x1536x256xbf16, #tpu.memory_space<vmem>>, vector<1x16x256xbf16>
    %362 = vector.shape_cast %361 : vector<1x16x256xbf16> to vector<16x256xbf16>
    %363 = vector.shape_cast %360 : vector<16x256xbf16> to vector<1x16x256xbf16>
    tpu.vector_store %arg6[%c0_308, %c1232, %c0_309], %363 {strides = array<i32>} : memref<1x1536x256xbf16, #tpu.memory_space<vmem>>, vector<1x16x256xbf16>,
    %c0_310 = arith.constant 0 : index
    %c48_311 = arith.constant 48 : index
    %c83_312 = arith.constant 83 : index
    %364 = vector.load %arg2[%c0_310, %c48_311, %c83_312] : memref<1x64x384xbf16, #tpu.memory_space<vmem>>, vector<1x16x256xbf16>
    %365 = vector.shape_cast %364 : vector<1x16x256xbf16> to vector<16x256xbf16>
    %c0_313 = arith.constant 0 : index
    %c1248 = arith.constant 1248 : index
    %c0_314 = arith.constant 0 : index
    %366 = vector.load %arg6[%c0_313, %c1248, %c0_314] : memref<1x1536x256xbf16, #tpu.memory_space<vmem>>, vector<1x16x256xbf16>
    %367 = vector.shape_cast %366 : vector<1x16x256xbf16> to vector<16x256xbf16>
    %368 = vector.shape_cast %365 : vector<16x256xbf16> to vector<1x16x256xbf16>
    tpu.vector_store %arg6[%c0_313, %c1248, %c0_314], %368 {strides = array<i32>} : memref<1x1536x256xbf16, #tpu.memory_space<vmem>>, vector<1x16x256xbf16>,
    %c0_315 = arith.constant 0 : index
    %c0_316 = arith.constant 0 : index
    %c84 = arith.constant 84 : index
    %369 = vector.load %arg2[%c0_315, %c0_316, %c84] : memref<1x64x384xbf16, #tpu.memory_space<vmem>>, vector<1x16x256xbf16>
    %370 = vector.shape_cast %369 : vector<1x16x256xbf16> to vector<16x256xbf16>
    %c0_317 = arith.constant 0 : index
    %c1264 = arith.constant 1264 : index
    %c0_318 = arith.constant 0 : index
    %371 = vector.load %arg6[%c0_317, %c1264, %c0_318] : memref<1x1536x256xbf16, #tpu.memory_space<vmem>>, vector<1x16x256xbf16>
    %372 = vector.shape_cast %371 : vector<1x16x256xbf16> to vector<16x256xbf16>
    %373 = vector.shape_cast %370 : vector<16x256xbf16> to vector<1x16x256xbf16>
    tpu.vector_store %arg6[%c0_317, %c1264, %c0_318], %373 {strides = array<i32>} : memref<1x1536x256xbf16, #tpu.memory_space<vmem>>, vector<1x16x256xbf16>,
    %c0_319 = arith.constant 0 : index
    %c1280 = arith.constant 1280 : index
    %c0_320 = arith.constant 0 : index
    %374 = vector.load %arg6[%c0_319, %c1280, %c0_320] : memref<1x1536x256xbf16, #tpu.memory_space<vmem>>, vector<1x16x256xbf16>
    %375 = vector.shape_cast %374 : vector<1x16x256xbf16> to vector<16x256xbf16>
    %376 = vector.shape_cast %370 : vector<16x256xbf16> to vector<1x16x256xbf16>
    tpu.vector_store %arg6[%c0_319, %c1280, %c0_320], %376 {strides = array<i32>} : memref<1x1536x256xbf16, #tpu.memory_space<vmem>>, vector<1x16x256xbf16>,
    %c0_321 = arith.constant 0 : index
    %c16_322 = arith.constant 16 : index
    %c84_323 = arith.constant 84 : index
    %377 = vector.load %arg2[%c0_321, %c16_322, %c84_323] : memref<1x64x384xbf16, #tpu.memory_space<vmem>>, vector<1x16x256xbf16>
    %378 = vector.shape_cast %377 : vector<1x16x256xbf16> to vector<16x256xbf16>
    %c0_324 = arith.constant 0 : index
    %c1296 = arith.constant 1296 : index
    %c0_325 = arith.constant 0 : index
    %379 = vector.load %arg6[%c0_324, %c1296, %c0_325] : memref<1x1536x256xbf16, #tpu.memory_space<vmem>>, vector<1x16x256xbf16>
    %380 = vector.shape_cast %379 : vector<1x16x256xbf16> to vector<16x256xbf16>
    %381 = vector.shape_cast %378 : vector<16x256xbf16> to vector<1x16x256xbf16>
    tpu.vector_store %arg6[%c0_324, %c1296, %c0_325], %381 {strides = array<i32>} : memref<1x1536x256xbf16, #tpu.memory_space<vmem>>, vector<1x16x256xbf16>,
    %c0_326 = arith.constant 0 : index
    %c32_327 = arith.constant 32 : index
    %c84_328 = arith.constant 84 : index
    %382 = vector.load %arg2[%c0_326, %c32_327, %c84_328] : memref<1x64x384xbf16, #tpu.memory_space<vmem>>, vector<1x16x256xbf16>
    %383 = vector.shape_cast %382 : vector<1x16x256xbf16> to vector<16x256xbf16>
    %c0_329 = arith.constant 0 : index
    %c1312 = arith.constant 1312 : index
    %c0_330 = arith.constant 0 : index
    %384 = vector.load %arg6[%c0_329, %c1312, %c0_330] : memref<1x1536x256xbf16, #tpu.memory_space<vmem>>, vector<1x16x256xbf16>
    %385 = vector.shape_cast %384 : vector<1x16x256xbf16> to vector<16x256xbf16>
    %386 = vector.shape_cast %383 : vector<16x256xbf16> to vector<1x16x256xbf16>
    tpu.vector_store %arg6[%c0_329, %c1312, %c0_330], %386 {strides = array<i32>} : memref<1x1536x256xbf16, #tpu.memory_space<vmem>>, vector<1x16x256xbf16>,
    %c0_331 = arith.constant 0 : index
    %c1328 = arith.constant 1328 : index
    %c0_332 = arith.constant 0 : index
    %387 = vector.load %arg6[%c0_331, %c1328, %c0_332] : memref<1x1536x256xbf16, #tpu.memory_space<vmem>>, vector<1x16x256xbf16>
    %388 = vector.shape_cast %387 : vector<1x16x256xbf16> to vector<16x256xbf16>
    %389 = vector.shape_cast %383 : vector<16x256xbf16> to vector<1x16x256xbf16>
    tpu.vector_store %arg6[%c0_331, %c1328, %c0_332], %389 {strides = array<i32>} : memref<1x1536x256xbf16, #tpu.memory_space<vmem>>, vector<1x16x256xbf16>,
    %c0_333 = arith.constant 0 : index
    %c48_334 = arith.constant 48 : index
    %c84_335 = arith.constant 84 : index
    %390 = vector.load %arg2[%c0_333, %c48_334, %c84_335] : memref<1x64x384xbf16, #tpu.memory_space<vmem>>, vector<1x16x256xbf16>
    %391 = vector.shape_cast %390 : vector<1x16x256xbf16> to vector<16x256xbf16>
    %c0_336 = arith.constant 0 : index
    %c1344 = arith.constant 1344 : index
    %c0_337 = arith.constant 0 : index
    %392 = vector.load %arg6[%c0_336, %c1344, %c0_337] : memref<1x1536x256xbf16, #tpu.memory_space<vmem>>, vector<1x16x256xbf16>
    %393 = vector.shape_cast %392 : vector<1x16x256xbf16> to vector<16x256xbf16>
    %394 = vector.shape_cast %391 : vector<16x256xbf16> to vector<1x16x256xbf16>
    tpu.vector_store %arg6[%c0_336, %c1344, %c0_337], %394 {strides = array<i32>} : memref<1x1536x256xbf16, #tpu.memory_space<vmem>>, vector<1x16x256xbf16>,
    %c0_338 = arith.constant 0 : index
    %c1360 = arith.constant 1360 : index
    %c0_339 = arith.constant 0 : index
    %395 = vector.load %arg6[%c0_338, %c1360, %c0_339] : memref<1x1536x256xbf16, #tpu.memory_space<vmem>>, vector<1x16x256xbf16>
    %396 = vector.shape_cast %395 : vector<1x16x256xbf16> to vector<16x256xbf16>
    %397 = vector.shape_cast %391 : vector<16x256xbf16> to vector<1x16x256xbf16>
    tpu.vector_store %arg6[%c0_338, %c1360, %c0_339], %397 {strides = array<i32>} : memref<1x1536x256xbf16, #tpu.memory_space<vmem>>, vector<1x16x256xbf16>,
    %c0_340 = arith.constant 0 : index
    %c0_341 = arith.constant 0 : index
    %c85 = arith.constant 85 : index
    %398 = vector.load %arg2[%c0_340, %c0_341, %c85] : memref<1x64x384xbf16, #tpu.memory_space<vmem>>, vector<1x16x256xbf16>
    %399 = vector.shape_cast %398 : vector<1x16x256xbf16> to vector<16x256xbf16>
    %c0_342 = arith.constant 0 : index
    %c1376 = arith.constant 1376 : index
    %c0_343 = arith.constant 0 : index
    %400 = vector.load %arg6[%c0_342, %c1376, %c0_343] : memref<1x1536x256xbf16, #tpu.memory_space<vmem>>, vector<1x16x256xbf16>
    %401 = vector.shape_cast %400 : vector<1x16x256xbf16> to vector<16x256xbf16>
    %402 = vector.shape_cast %399 : vector<16x256xbf16> to vector<1x16x256xbf16>
    tpu.vector_store %arg6[%c0_342, %c1376, %c0_343], %402 {strides = array<i32>} : memref<1x1536x256xbf16, #tpu.memory_space<vmem>>, vector<1x16x256xbf16>,
    %c0_344 = arith.constant 0 : index
    %c16_345 = arith.constant 16 : index
    %c85_346 = arith.constant 85 : index
    %403 = vector.load %arg2[%c0_344, %c16_345, %c85_346] : memref<1x64x384xbf16, #tpu.memory_space<vmem>>, vector<1x16x256xbf16>
    %404 = vector.shape_cast %403 : vector<1x16x256xbf16> to vector<16x256xbf16>
    %c0_347 = arith.constant 0 : index
    %c1392 = arith.constant 1392 : index
    %c0_348 = arith.constant 0 : index
    %405 = vector.load %arg6[%c0_347, %c1392, %c0_348] : memref<1x1536x256xbf16, #tpu.memory_space<vmem>>, vector<1x16x256xbf16>
    %406 = vector.shape_cast %405 : vector<1x16x256xbf16> to vector<16x256xbf16>
    %407 = vector.shape_cast %404 : vector<16x256xbf16> to vector<1x16x256xbf16>
    tpu.vector_store %arg6[%c0_347, %c1392, %c0_348], %407 {strides = array<i32>} : memref<1x1536x256xbf16, #tpu.memory_space<vmem>>, vector<1x16x256xbf16>,
    %c0_349 = arith.constant 0 : index
    %c32_350 = arith.constant 32 : index
    %c85_351 = arith.constant 85 : index
    %408 = vector.load %arg2[%c0_349, %c32_350, %c85_351] : memref<1x64x384xbf16, #tpu.memory_space<vmem>>, vector<1x16x256xbf16>
    %409 = vector.shape_cast %408 : vector<1x16x256xbf16> to vector<16x256xbf16>
    %c0_352 = arith.constant 0 : index
    %c1408 = arith.constant 1408 : index
    %c0_353 = arith.constant 0 : index
    %410 = vector.load %arg6[%c0_352, %c1408, %c0_353] : memref<1x1536x256xbf16, #tpu.memory_space<vmem>>, vector<1x16x256xbf16>
    %411 = vector.shape_cast %410 : vector<1x16x256xbf16> to vector<16x256xbf16>
    %412 = vector.shape_cast %409 : vector<16x256xbf16> to vector<1x16x256xbf16>
    tpu.vector_store %arg6[%c0_352, %c1408, %c0_353], %412 {strides = array<i32>} : memref<1x1536x256xbf16, #tpu.memory_space<vmem>>, vector<1x16x256xbf16>,
    %c0_354 = arith.constant 0 : index
    %c1424 = arith.constant 1424 : index
    %c0_355 = arith.constant 0 : index
    %413 = vector.load %arg6[%c0_354, %c1424, %c0_355] : memref<1x1536x256xbf16, #tpu.memory_space<vmem>>, vector<1x16x256xbf16>
    %414 = vector.shape_cast %413 : vector<1x16x256xbf16> to vector<16x256xbf16>
    %415 = vector.shape_cast %409 : vector<16x256xbf16> to vector<1x16x256xbf16>
    tpu.vector_store %arg6[%c0_354, %c1424, %c0_355], %415 {strides = array<i32>} : memref<1x1536x256xbf16, #tpu.memory_space<vmem>>, vector<1x16x256xbf16>,
    %c0_356 = arith.constant 0 : index
    %c48_357 = arith.constant 48 : index
    %c85_358 = arith.constant 85 : index
    %416 = vector.load %arg2[%c0_356, %c48_357, %c85_358] : memref<1x64x384xbf16, #tpu.memory_space<vmem>>, vector<1x16x256xbf16>
    %417 = vector.shape_cast %416 : vector<1x16x256xbf16> to vector<16x256xbf16>
    %c0_359 = arith.constant 0 : index
    %c1440 = arith.constant 1440 : index
    %c0_360 = arith.constant 0 : index
    %418 = vector.load %arg6[%c0_359, %c1440, %c0_360] : memref<1x1536x256xbf16, #tpu.memory_space<vmem>>, vector<1x16x256xbf16>
    %419 = vector.shape_cast %418 : vector<1x16x256xbf16> to vector<16x256xbf16>
    %420 = vector.shape_cast %417 : vector<16x256xbf16> to vector<1x16x256xbf16>
    tpu.vector_store %arg6[%c0_359, %c1440, %c0_360], %420 {strides = array<i32>} : memref<1x1536x256xbf16, #tpu.memory_space<vmem>>, vector<1x16x256xbf16>,
    %c0_361 = arith.constant 0 : index
    %c0_362 = arith.constant 0 : index
    %c86 = arith.constant 86 : index
    %421 = vector.load %arg2[%c0_361, %c0_362, %c86] : memref<1x64x384xbf16, #tpu.memory_space<vmem>>, vector<1x16x256xbf16>
    %422 = vector.shape_cast %421 : vector<1x16x256xbf16> to vector<16x256xbf16>
    %c0_363 = arith.constant 0 : index
    %c1456 = arith.constant 1456 : index
    %c0_364 = arith.constant 0 : index
    %423 = vector.load %arg6[%c0_363, %c1456, %c0_364] : memref<1x1536x256xbf16, #tpu.memory_space<vmem>>, vector<1x16x256xbf16>
    %424 = vector.shape_cast %423 : vector<1x16x256xbf16> to vector<16x256xbf16>
    %425 = vector.shape_cast %422 : vector<16x256xbf16> to vector<1x16x256xbf16>
    tpu.vector_store %arg6[%c0_363, %c1456, %c0_364], %425 {strides = array<i32>} : memref<1x1536x256xbf16, #tpu.memory_space<vmem>>, vector<1x16x256xbf16>,
    %c0_365 = arith.constant 0 : index
    %c16_366 = arith.constant 16 : index
    %c86_367 = arith.constant 86 : index
    %426 = vector.load %arg2[%c0_365, %c16_366, %c86_367] : memref<1x64x384xbf16, #tpu.memory_space<vmem>>, vector<1x16x256xbf16>
    %427 = vector.shape_cast %426 : vector<1x16x256xbf16> to vector<16x256xbf16>
    %c0_368 = arith.constant 0 : index
    %c1472 = arith.constant 1472 : index
    %c0_369 = arith.constant 0 : index
    %428 = vector.load %arg6[%c0_368, %c1472, %c0_369] : memref<1x1536x256xbf16, #tpu.memory_space<vmem>>, vector<1x16x256xbf16>
    %429 = vector.shape_cast %428 : vector<1x16x256xbf16> to vector<16x256xbf16>
    %430 = vector.shape_cast %427 : vector<16x256xbf16> to vector<1x16x256xbf16>
    tpu.vector_store %arg6[%c0_368, %c1472, %c0_369], %430 {strides = array<i32>} : memref<1x1536x256xbf16, #tpu.memory_space<vmem>>, vector<1x16x256xbf16>,
    %c0_370 = arith.constant 0 : index
    %c1488 = arith.constant 1488 : index
    %c0_371 = arith.constant 0 : index
    %431 = vector.load %arg6[%c0_370, %c1488, %c0_371] : memref<1x1536x256xbf16, #tpu.memory_space<vmem>>, vector<1x16x256xbf16>
    %432 = vector.shape_cast %431 : vector<1x16x256xbf16> to vector<16x256xbf16>
    %433 = vector.shape_cast %427 : vector<16x256xbf16> to vector<1x16x256xbf16>
    tpu.vector_store %arg6[%c0_370, %c1488, %c0_371], %433 {strides = array<i32>} : memref<1x1536x256xbf16, #tpu.memory_space<vmem>>, vector<1x16x256xbf16>,
    %c0_372 = arith.constant 0 : index
    %c1504 = arith.constant 1504 : index
    %c0_373 = arith.constant 0 : index
    %434 = vector.load %arg6[%c0_372, %c1504, %c0_373] : memref<1x1536x256xbf16, #tpu.memory_space<vmem>>, vector<1x16x256xbf16>
    %435 = vector.shape_cast %434 : vector<1x16x256xbf16> to vector<16x256xbf16>
    %436 = vector.shape_cast %427 : vector<16x256xbf16> to vector<1x16x256xbf16>
    tpu.vector_store %arg6[%c0_372, %c1504, %c0_373], %436 {strides = array<i32>} : memref<1x1536x256xbf16, #tpu.memory_space<vmem>>, vector<1x16x256xbf16>,
    %c0_374 = arith.constant 0 : index
    %c1520 = arith.constant 1520 : index
    %c0_375 = arith.constant 0 : index
    %437 = vector.load %arg6[%c0_374, %c1520, %c0_375] : memref<1x1536x256xbf16, #tpu.memory_space<vmem>>, vector<1x16x256xbf16>
    %438 = vector.shape_cast %437 : vector<1x16x256xbf16> to vector<16x256xbf16>
    %439 = vector.shape_cast %427 : vector<16x256xbf16> to vector<1x16x256xbf16>
    tpu.vector_store %arg6[%c0_374, %c1520, %c0_375], %439 {strides = array<i32>} : memref<1x1536x256xbf16, #tpu.memory_space<vmem>>, vector<1x16x256xbf16>,
    %c0_376 = arith.constant 0 : index
    %c0_377 = arith.constant 0 : index
    %440 = vector.load %arg3[%c0_376, %c0_377] : memref<32x1536xbf16, #tpu.memory_space<vmem>>, vector<32x1536xbf16>
    %c0_378 = arith.constant 0 : index
    %c0_379 = arith.constant 0 : index
    %c0_380 = arith.constant 0 : index
    %441 = vector.load %arg6[%c0_378, %c0_379, %c0_380] : memref<1x1536x256xbf16, #tpu.memory_space<vmem>>, vector<1x1536x256xbf16>
    %442 = vector.shape_cast %441 : vector<1x1536x256xbf16> to vector<1536x256xbf16>
    %cst = arith.constant dense<0.000000e+00> : vector<32x256xf32>
    %443 = tpu.matmul %440, %442, %cst {dimension_numbers = #tpu.dot_dimension_numbers<[1], [0], [0], [1], [0, 0, 1, 1], [], []>} : vector<32x1536xbf16>, vector<1536x256xbf16>, vector<32x256xf32> -> vector<32x256xf32>
    %c0_381 = arith.constant 0 : index
    %c0_382 = arith.constant 0 : index
    %444 = vector.load %arg4[%c0_381, %c0_382] : memref<32x1xf32, #tpu.memory_space<vmem>>, vector<32x1xf32>
    %445 = vector.broadcast %444 : vector<32x1xf32> to vector<32x256xf32>
    %446 = arith.addf %443, %445 : vector<32x256xf32>
    %c0_383 = arith.constant 0 : index
    %c0_384 = arith.constant 0 : index
    %c0_385 = arith.constant 0 : index
    %447 = vector.load %arg5[%c0_383, %c0_384, %c0_385] : memref<1x32x256xf32, #tpu.memory_space<vmem>>, vector<1x32x256xf32>
    %448 = vector.shape_cast %447 : vector<1x32x256xf32> to vector<32x256xf32>
    %449 = vector.shape_cast %446 : vector<32x256xf32> to vector<1x32x256xf32>
    tpu.vector_store %arg5[%c0_383, %c0_384, %c0_385], %449 {strides = array<i32>} : memref<1x32x256xf32, #tpu.memory_space<vmem>>, vector<1x32x256xf32>,
    return
  }
  func.func @transform_0(%arg0: i32, %arg1: i32) -> (i32, i32, i32) {
    %c0_i32 = arith.constant 0 : i32
    %c0_i32_0 = arith.constant 0 : i32
    %c0_i32_1 = arith.constant 0 : i32
    return %arg0, %c0_i32, %c0_i32_0 : i32, i32, i32
  }
  func.func @transform_1(%arg0: i32, %arg1: i32) -> (i32, i32) {
    %c0_i32 = arith.constant 0 : i32
    %c0_i32_0 = arith.constant 0 : i32
    %c0_i32_1 = arith.constant 0 : i32
    return %c0_i32, %c0_i32_0 : i32, i32
  }
  func.func @transform_2(%arg0: i32, %arg1: i32) -> (i32, i32) {
    %c0_i32 = arith.constant 0 : i32
    %c0_i32_0 = arith.constant 0 : i32
    %c0_i32_1 = arith.constant 0 : i32
    return %c0_i32, %c0_i32_0 : i32, i32
  }
  func.func @transform_3(%arg0: i32, %arg1: i32) -> (i32, i32, i32) {
    %c0_i32 = arith.constant 0 : i32
    %c0_i32_0 = arith.constant 0 : i32
    return %arg0, %c0_i32, %arg1 : i32, i32, i32
  }
}

</mosaic_0001>

<llo_original>
// kernel: d_stack_dilate_block.1
$region0: #{d_stack_dilate_block.1}
  #allocation0 [shape = 'u32[]', space=smem, size = 0x4, offset = 0x4, fixed_abs, tag = 'smem constant byte address 0x4 - core index']
  #allocation1 [shape = 'u32[72,128]{1,0:T(1,128)}', space=vmem, size = 0x9000, scoped, tag = 'internal scratch']
  #allocation2 [shape = 'bf16[1,1536,256]{2,1,0:T(8,128)(2,1)}', space=vmem, size = 0xc0000, scoped, tag = 'scratch operand']
  %s0 = inlined_call_operand.vmem [shape: bf16[2,64,384], index: 0, kind: input, shape index: {}]
  %s1 = inlined_call_operand.vmem [shape: bf16[32,1536], index: 1, kind: input, shape index: {}]
  %s2 = inlined_call_operand.vmem [shape: f32[32,1], index: 2, kind: input, shape index: {}]
  %s3 = inlined_call_operand.hbm [shape: f32[2,32,256], index: 3, kind: output, shape index: {}]
  %s4 = sld [smem:[#allocation0]]
  $region45: #{d_stack_dilate_block.1} parent=0
    _
  %s6 = ssub.s32 1, %s4
  %s7 = scalar_select 0, %s6, %s4
  $region1: #{d_stack_dilate_block.1} parent=0
    #allocation3 [shape = 'u8[65536]{0}', space=vmem, size = 0x10000, scoped, tag = 'output window, operand 0']
    #allocation4 [shape = 's32[2]{0}', space=sflag, size = 0x8, scoped, tag = 'scoped memory for d_stack_dilate_block.1']
    %8 = vsyncpa [#allocation4], 0
    %s9 = scalar_lea.sflag [#allocation4], 1
    %10 = vsyncpa %s9, 0
    loop: start=0, step=1, limit=4
    $region2: #{d_stack_dilate_block.1} parent=1 // loop_pre_header
      _
    $region3: #{d_stack_dilate_block.1} parent=1 // loop_header
      %s12 = sphi 0, %s16
      %p13 = scmp.ge.s32.totalorder %s12, 4
      %s19 = sphi 0, %s31
      %s20 = sphi 0, %s27
      %s21 = sphi 0, %s19
      %s22 = sphi 0, %s20
      %s23 = sphi 0, %s21
      %s24 = sphi 0, %s22
      %s34 = sphi 0, %s36
      %s37 = sphi 0, %s34
      %s38 = sphi 0, %s37
      %s54 = sphi 0, %s38
      %s58 = sphi 0, %s58
      %s60 = sphi 0, %s58
      %s61 = sphi 0, %s60
      %s75 = sphi 0, %s61
      %s79 = sphi 0, %s79
      %s81 = sphi 0, %s79
      %s82 = sphi 0, %s81
      %s96 = sphi 0, %s82
      %s104 = sphi 0, %s106
      %s107 = sphi 0, %s104
      %s108 = sphi 0, %s107
      %s124 = sphi 0, %s108
    $region4: #{d_stack_dilate_block.1} parent=1 // loop_header_branch
      %15 = sbr.rel (%p13) target = $region8
    $region5: #{d_stack_dilate_block.1} parent=1 // loop_body
      %s17 = ssub.s32 %s12, 1
      %s18 = ssub.s32 %s12, 2
      %s25 = sadd.s32 1, %s20
      %p26 = scmp.ge.s32.totalorder %s25, 1
      %s27 = scalar_select %p26, 0, %s25
      %s28 = sadd.s32 1, %s19
      %s29 = scalar_select %p26, %s28, %s19
      %p30 = scmp.ge.s32.totalorder %s29, 2
      %s31 = scalar_select %p30, 0, %s29
      %s32 = ssub.s32 %s19, %s31
      %p33 = scmp.eq.s32.totalorder %s32, 0
      %s35 = sadd.s32 %s34, 1
      %s36 = scalar_select %p33, %s34, %s35
      %p39 = pneg %p33
      %p40 = scmp.eq.s32.totalorder %s12, 1
      %p41 = por %p39, %p40
      %p42 = scmp.ne.s32.totalorder %s34, %s37
      %p43 = scmp.eq.s32.totalorder %s12, 0
      %p44 = por %p42, %p43
      %p45 = scmp.ne.s32.totalorder %s34, %s37
      %p46 = scmp.eq.s32.totalorder %s17, 1
      %p47 = por %p45, %p46
      %p48 = scmp.ne.s32.totalorder %s37, %s38
      %p49 = scmp.eq.s32.totalorder %s17, 0
      %p50 = por %p48, %p49
      %p51 = scmp.ne.s32.totalorder %s37, %s38
      %p52 = scmp.eq.s32.totalorder %s18, 1
      %p53 = por %p51, %p52
      %p55 = scmp.ne.s32.totalorder %s38, %s54
      %p56 = scmp.eq.s32.totalorder %s18, 0
      %p57 = por %p55, %p56
      %s59 = sadd.s32 %s58, 1
      %p62 = scmp.eq.s32.totalorder %s12, 1
      %p63 = scmp.ne.s32.totalorder %s58, %s60
      %p64 = scmp.eq.s32.totalorder %s12, 0
      %p65 = por %p63, %p64
      %p66 = scmp.ne.s32.totalorder %s58, %s60
      %p67 = scmp.eq.s32.totalorder %s17, 1
      %p68 = por %p66, %p67
      %p69 = scmp.ne.s32.totalorder %s60, %s61
      %p70 = scmp.eq.s32.totalorder %s17, 0
      %p71 = por %p69, %p70
      %p72 = scmp.ne.s32.totalorder %s60, %s61
      %p73 = scmp.eq.s32.totalorder %s18, 1
      %p74 = por %p72, %p73
      %p76 = scmp.ne.s32.totalorder %s61, %s75
      %p77 = scmp.eq.s32.totalorder %s18, 0
      %p78 = por %p76, %p77
      %s80 = sadd.s32 %s79, 1
      %p83 = scmp.eq.s32.totalorder %s12, 1
      %p84 = scmp.ne.s32.totalorder %s79, %s81
      %p85 = scmp.eq.s32.totalorder %s12, 0
      %p86 = por %p84, %p85
      %p87 = scmp.ne.s32.totalorder %s79, %s81
      %p88 = scmp.eq.s32.totalorder %s17, 1
      %p89 = por %p87, %p88
      %p90 = scmp.ne.s32.totalorder %s81, %s82
      %p91 = scmp.eq.s32.totalorder %s17, 0
      %p92 = por %p90, %p91
      %p93 = scmp.ne.s32.totalorder %s81, %s82
      %p94 = scmp.eq.s32.totalorder %s18, 1
      %p95 = por %p93, %p94
      %p97 = scmp.ne.s32.totalorder %s82, %s96
      %p98 = scmp.eq.s32.totalorder %s18, 0
      %p99 = por %p97, %p98
      %s100 = ssub.s32 %s19, %s31
      %s101 = ssub.s32 %s20, %s27
      %s102 = sor.u32 %s100, %s101
      %p103 = scmp.eq.s32.totalorder %s102, 0
      %s105 = sadd.s32 %s104, 1
      %s106 = scalar_select %p103, %s104, %s105
      %p109 = pneg %p103
      %p110 = scmp.eq.s32.totalorder %s12, 1
      %p111 = por %p109, %p110
      %p112 = scmp.ne.s32.totalorder %s104, %s107
      %p113 = scmp.eq.s32.totalorder %s12, 0
      %p114 = por %p112, %p113
      %p115 = scmp.ne.s32.totalorder %s104, %s107
      %p116 = scmp.eq.s32.totalorder %s17, 1
      %p117 = por %p115, %p116
      %p118 = scmp.ne.s32.totalorder %s107, %s108
      %p119 = scmp.eq.s32.totalorder %s17, 0
      %p120 = por %p118, %p119
      %p121 = scmp.ne.s32.totalorder %s107, %s108
      %p122 = scmp.eq.s32.totalorder %s18, 1
      %p123 = por %p121, %p122
      %p125 = scmp.ne.s32.totalorder %s108, %s124
      %p126 = scmp.eq.s32.totalorder %s18, 0
      %p127 = por %p125, %p126
      %p128 = scmp.le.s32.totalorder 1, %s12
      %p129 = scmp.lt.s32.totalorder %s12, 3
      %p130 = pnand %p128, %p129
      %p131 = pneg %p130
      // Predicated region
      $region9: #{d_stack_dilate_block.1} parent=5 // pred_check
        _
      $region10: #{d_stack_dilate_block.1} parent=5 // pred_check_branch
        %133 = sbr.rel (%p130) target = $region12
      $region11: #{d_stack_dilate_block.1} parent=5 // pred_region
        %s134 = ssub.s32 %s12, 1
        // Predicated region
        $region13: #{d_stack_dilate_block.1} parent=11 // pred_check
          %p135 = pneg %p71
        $region14: #{d_stack_dilate_block.1} parent=11 // pred_check_branch
          %137 = sbr.rel (%p135) target = $region16
        $region15: #{d_stack_dilate_block.1} parent=11 // pred_region
          _
        $region16: #{d_stack_dilate_block.1} parent=11 // pred_fallthru
          _
        // Predicated region
        $region17: #{d_stack_dilate_block.1} parent=11 // pred_check
          %p138 = pneg %p92
        $region18: #{d_stack_dilate_block.1} parent=11 // pred_check_branch
          %140 = sbr.rel (%p138) target = $region20
        $region19: #{d_stack_dilate_block.1} parent=11 // pred_region
          _
        $region20: #{d_stack_dilate_block.1} parent=11 // pred_fallthru
          _
      $region12: #{d_stack_dilate_block.1} parent=5 // pred_fallthru
        _
      %p141 = scmp.lt.s32.totalorder %s12, 2
      // Predicated region
      $region21: #{d_stack_dilate_block.1} parent=5 // pred_check
        %p142 = pneg %p141
      $region22: #{d_stack_dilate_block.1} parent=5 // pred_check_branch
        %144 = sbr.rel (%p142) target = $region24
      $region23: #{d_stack_dilate_block.1} parent=5 // pred_region
        // Predicated region
        $region25: #{d_stack_dilate_block.1} parent=23 // pred_check
          %p145 = pneg %p44
        $region26: #{d_stack_dilate_block.1} parent=23 // pred_check_branch
          %147 = sbr.rel (%p145) target = $region28
        $region27: #{d_stack_dilate_block.1} parent=23 // pred_region
          %p148 = scmp.lt.s32.totalorder %s19, 1
          %s149 = scalar_select %p148, %s19, 1
          %s150 = smul.addr %s149, 24
          %s151 = smul.addr %s150, 4
          %s152 = scalar_lea.vmem %s0, %s151
        $region28: #{d_stack_dilate_block.1} parent=23 // pred_fallthru
          _
      $region24: #{d_stack_dilate_block.1} parent=5 // pred_fallthru
        _
      %p153 = scmp.le.s32.totalorder 1, %s12
      %p154 = scmp.lt.s32.totalorder %s12, 3
      %p155 = pnand %p153, %p154
      %p156 = pneg %p155
      // Predicated region
      $region29: #{d_stack_dilate_block.1} parent=5 // pred_check
        _
      $region30: #{d_stack_dilate_block.1} parent=5 // pred_check_branch
        %158 = sbr.rel (%p155) target = $region32
      $region31: #{d_stack_dilate_block.1} parent=5 // pred_region
        %s159 = ssub.s32 %s12, 1
        %p160 = scmp.lt.s32.totalorder %s21, 1
        %s161 = scalar_select %p160, %s21, 1
        %s162 = smul.addr %s161, 24
        %s163 = smul.addr %s162, 4
        %s164 = scalar_lea.vmem %s0, %s163
        %p165 = pneg %p50
        %p166 = pneg %p47
        %p167 = pneg %p71
        %p168 = pneg %p68
        %p169 = pneg %p92
        %p170 = pneg %p89
        %p171 = pneg %p120
        %p172 = pneg %p117
        %s173 = sand.u32 %s107, 1
        %s174 = scalar_lea.sflag [#allocation4], %s173
        %s175 = sand.u32 %s107, 1
        %s176 = smul.addr %s175, 64
        %s177 = scalar_lea.vmem [#allocation3], %s176
        %p178 = scmp.lt.s32.totalorder %s21, 1
        %s179 = scalar_select %p178, %s21, 1
        %s180 = smul.addr %s179, 24
        %s181 = smul.addr %s180, 4
        %s182 = scalar_lea.vmem %s0, %s181
        %s183 = smul.u32 2, %s22
        %v184 = vld [vmem:[%s182] sm:$0xff]
        %v185 = vld [vmem:[%s182 + $0xc] sm:$0xff]
        %186 = vst [vmem:[#allocation2] sm:$0xff] %v184
        %187 = vst [vmem:[#allocation2 + $0x8] sm:$0xff] %v185
        %v188 = vld [vmem:[%s182 + $0x48] sm:$0xff]
        %v189 = vld [vmem:[%s182 + $0x50] sm:$0xf]
        %v190 = vld [vmem:[%s182 + $0x54] sm:$0xff]
        %v191 = vld [vmem:[%s182 + $0x5c] sm:$0xf]
        %196 = vrot.lane.b32.xlu0 %v188, 125
        %v197 = vpop.permute.xlu0 %196
        %198 = vrot.lane.b32.xlu0 %v189, 125
        %v199 = vpop.permute.xlu0 %198
        %200 = vrot.lane.b32.xlu0 %v190, 125
        %v201 = vpop.permute.xlu0 %200
        %202 = vrot.lane.b32.xlu0 %v191, 125
        %v203 = vpop.permute.xlu0 %202
        %v204 = vrot.slane %v197, 4
        %v205 = vrot.slane %v199, 4
        %v206 = vrot.slane %v201, 4
        %v207 = vrot.slane %v203, 4
        %vm208 = vcmask 1043456
        %v209 = vsel %vm208, %v204, %v205
        %vm210 = vcmask 1022976
        %v211 = vsel %vm210, %v197, %v209
        %v212 = vsel %vm208, %v206, %v207
        %v213 = vsel %vm210, %v201, %v212
        %216 = vst [vmem:[#allocation2 + $0x10] sm:$0xff] %v211
        %217 = vst [vmem:[#allocation2 + $0x18] sm:$0xff] %v213
        %v218 = vld [vmem:[%s182 + $0x30] sm:$0xff]
        %v219 = vld [vmem:[%s182 + $0x38] sm:$0xf]
        %v220 = vld [vmem:[%s182 + $0x3c] sm:$0xff]
        %v221 = vld [vmem:[%s182 + $0x44] sm:$0xf]
        %226 = vrot.lane.b32.xlu0 %v218, 121
        %v227 = vpop.permute.xlu0 %226
        %228 = vrot.lane.b32.xlu0 %v219, 121
        %v229 = vpop.permute.xlu0 %228
        %230 = vrot.lane.b32.xlu0 %v220, 121
        %v231 = vpop.permute.xlu0 %230
        %232 = vrot.lane.b32.xlu0 %v221, 121
        %v233 = vpop.permute.xlu0 %232
        %v234 = vrot.slane %v227, 4
        %v235 = vrot.slane %v229, 4
        %v236 = vrot.slane %v231, 4
        %v237 = vrot.slane %v233, 4
        %v238 = vsel %vm208, %v234, %v235
        %vm239 = vcmask 990208
        %v240 = vsel %vm239, %v227, %v238
        %v241 = vsel %vm208, %v236, %v237
        %v242 = vsel %vm239, %v231, %v241
        %245 = vst [vmem:[#allocation2 + $0x20] sm:$0xff] %v240
        %246 = vst [vmem:[#allocation2 + $0x28] sm:$0xff] %v242
        %v247 = vld [vmem:[%s182 + $0x18] sm:$0xff]
        %v248 = vld [vmem:[%s182 + $0x20] sm:$0xf]
        %v249 = vld [vmem:[%s182 + $0x24] sm:$0xff]
        %v250 = vld [vmem:[%s182 + $0x2c] sm:$0xf]
        %255 = vrot.lane.b32.xlu0 %v247, 117
        %v256 = vpop.permute.xlu0 %255
        %257 = vrot.lane.b32.xlu0 %v248, 117
        %v258 = vpop.permute.xlu0 %257
        %259 = vrot.lane.b32.xlu0 %v249, 117
        %v260 = vpop.permute.xlu0 %259
        %261 = vrot.lane.b32.xlu0 %v250, 117
        %v262 = vpop.permute.xlu0 %261
        %v263 = vrot.slane %v256, 4
        %v264 = vrot.slane %v258, 4
        %v265 = vrot.slane %v260, 4
        %v266 = vrot.slane %v262, 4
        %v267 = vsel %vm208, %v263, %v264
        %vm268 = vcmask 957440
        %v269 = vsel %vm268, %v256, %v267
        %v270 = vsel %vm208, %v265, %v266
        %v271 = vsel %vm268, %v260, %v270
        %274 = vst [vmem:[#allocation2 + $0x30] sm:$0xff] %v269
        %275 = vst [vmem:[#allocation2 + $0x38] sm:$0xff] %v271
        %v276 = vld [vmem:[%s182] sm:$0xff]
        %v277 = vld [vmem:[%s182 + $0x8] sm:$0xf]
        %v278 = vld [vmem:[%s182 + $0xc] sm:$0xff]
        %v279 = vld [vmem:[%s182 + $0x14] sm:$0xf]
        %284 = vrot.lane.b32.xlu0 %v276, 113
        %v285 = vpop.permute.xlu0 %284
        %286 = vrot.lane.b32.xlu0 %v277, 113
        %v287 = vpop.permute.xlu0 %286
        %288 = vrot.lane.b32.xlu0 %v278, 113
        %v289 = vpop.permute.xlu0 %288
        %290 = vrot.lane.b32.xlu0 %v279, 113
        %v291 = vpop.permute.xlu0 %290
        %v292 = vrot.slane %v285, 4
        %v293 = vrot.slane %v287, 4
        %v294 = vrot.slane %v289, 4
        %v295 = vrot.slane %v291, 4
        %v296 = vsel %vm208, %v292, %v293
        %vm297 = vcmask 924672
        %v298 = vsel %vm297, %v285, %v296
        %v299 = vsel %vm208, %v294, %v295
        %v300 = vsel %vm297, %v289, %v299
        %303 = vst [vmem:[#allocation2 + $0x40] sm:$0xff] %v298
        %304 = vst [vmem:[#allocation2 + $0x48] sm:$0xff] %v300
        %v305 = vld [vmem:[%s182 + $0x48] sm:$0xff]
        %v306 = vld [vmem:[%s182 + $0x50] sm:$0xf]
        %v307 = vld [vmem:[%s182 + $0x54] sm:$0xff]
        %v308 = vld [vmem:[%s182 + $0x5c] sm:$0xf]
        %313 = vrot.lane.b32.xlu0 %v305, 110
        %v314 = vpop.permute.xlu0 %313
        %315 = vrot.lane.b32.xlu0 %v306, 110
        %v316 = vpop.permute.xlu0 %315
        %317 = vrot.lane.b32.xlu0 %v307, 110
        %v318 = vpop.permute.xlu0 %317
        %319 = vrot.lane.b32.xlu0 %v308, 110
        %v320 = vpop.permute.xlu0 %319
        %v321 = vrot.slane %v314, 4
        %v322 = vrot.slane %v316, 4
        %v323 = vrot.slane %v318, 4
        %v324 = vrot.slane %v320, 4
        %v325 = vsel %vm208, %v321, %v322
        %vm326 = vcmask 900096
        %v327 = vsel %vm326, %v314, %v325
        %v328 = vsel %vm208, %v323, %v324
        %v329 = vsel %vm326, %v318, %v328
        %332 = vst [vmem:[#allocation2 + $0x50] sm:$0xff] %v327
        %333 = vst [vmem:[#allocation2 + $0x58] sm:$0xff] %v329
        %v334 = vld [vmem:[%s182 + $0x30] sm:$0xff]
        %v335 = vld [vmem:[%s182 + $0x38] sm:$0xf]
        %v336 = vld [vmem:[%s182 + $0x3c] sm:$0xff]
        %v337 = vld [vmem:[%s182 + $0x44] sm:$0xf]
        %342 = vrot.lane.b32.xlu0 %v334, 106
        %v343 = vpop.permute.xlu0 %342
        %344 = vrot.lane.b32.xlu0 %v335, 106
        %v345 = vpop.permute.xlu0 %344
        %346 = vrot.lane.b32.xlu0 %v336, 106
        %v347 = vpop.permute.xlu0 %346
        %348 = vrot.lane.b32.xlu0 %v337, 106
        %v349 = vpop.permute.xlu0 %348
        %v350 = vrot.slane %v343, 4
        %v351 = vrot.slane %v345, 4
        %v352 = vrot.slane %v347, 4
        %v353 = vrot.slane %v349, 4
        %v354 = vsel %vm208, %v350, %v351
        %vm355 = vcmask 867328
        %v356 = vsel %vm355, %v343, %v354
        %v357 = vsel %vm208, %v352, %v353
        %v358 = vsel %vm355, %v347, %v357
        %361 = vst [vmem:[#allocation2 + $0x60] sm:$0xff] %v356
        %362 = vst [vmem:[#allocation2 + $0x68] sm:$0xff] %v358
        %v363 = vld [vmem:[%s182 + $0x18] sm:$0xff]
        %v364 = vld [vmem:[%s182 + $0x20] sm:$0xf]
        %v365 = vld [vmem:[%s182 + $0x24] sm:$0xff]
        %v366 = vld [vmem:[%s182 + $0x2c] sm:$0xf]
        %371 = vrot.lane.b32.xlu0 %v363, 102
        %v372 = vpop.permute.xlu0 %371
        %373 = vrot.lane.b32.xlu0 %v364, 102
        %v374 = vpop.permute.xlu0 %373
        %375 = vrot.lane.b32.xlu0 %v365, 102
        %v376 = vpop.permute.xlu0 %375
        %377 = vrot.lane.b32.xlu0 %v366, 102
        %v378 = vpop.permute.xlu0 %377
        %v379 = vrot.slane %v372, 4
        %v380 = vrot.slane %v374, 4
        %v381 = vrot.slane %v376, 4
        %v382 = vrot.slane %v378, 4
        %v383 = vsel %vm208, %v379, %v380
        %vm384 = vcmask 834560
        %v385 = vsel %vm384, %v372, %v383
        %v386 = vsel %vm208, %v381, %v382
        %v387 = vsel %vm384, %v376, %v386
        %390 = vst [vmem:[#allocation2 + $0x70] sm:$0xff] %v385
        %391 = vst [vmem:[#allocation2 + $0x78] sm:$0xff] %v387
        %v392 = vld [vmem:[%s182] sm:$0xff]
        %v393 = vld [vmem:[%s182 + $0x8] sm:$0xf]
        %v394 = vld [vmem:[%s182 + $0xc] sm:$0xff]
        %v395 = vld [vmem:[%s182 + $0x14] sm:$0xf]
        %400 = vrot.lane.b32.xlu0 %v392, 98
        %v401 = vpop.permute.xlu0 %400
        %402 = vrot.lane.b32.xlu0 %v393, 98
        %v403 = vpop.permute.xlu0 %402
        %404 = vrot.lane.b32.xlu0 %v394, 98
        %v405 = vpop.permute.xlu0 %404
        %406 = vrot.lane.b32.xlu0 %v395, 98
        %v407 = vpop.permute.xlu0 %406
        %v408 = vrot.slane %v401, 4
        %v409 = vrot.slane %v403, 4
        %v410 = vrot.slane %v405, 4
        %v411 = vrot.slane %v407, 4
        %v412 = vsel %vm208, %v408, %v409
        %vm413 = vcmask 801792
        %v414 = vsel %vm413, %v401, %v412
        %v415 = vsel %vm208, %v410, %v411
        %v416 = vsel %vm413, %v405, %v415
        %419 = vst [vmem:[#allocation2 + $0x80] sm:$0xff] %v414
        %420 = vst [vmem:[#allocation2 + $0x88] sm:$0xff] %v416
        %v421 = vld [vmem:[%s182 + $0x48] sm:$0xff]
        %v422 = vld [vmem:[%s182 + $0x50] sm:$0xf]
        %v423 = vld [vmem:[%s182 + $0x54] sm:$0xff]
        %v424 = vld [vmem:[%s182 + $0x5c] sm:$0xf]
        %429 = vrot.lane.b32.xlu0 %v421, 95
        %v430 = vpop.permute.xlu0 %429
        %431 = vrot.lane.b32.xlu0 %v422, 95
        %v432 = vpop.permute.xlu0 %431
        %433 = vrot.lane.b32.xlu0 %v423, 95
        %v434 = vpop.permute.xlu0 %433
        %435 = vrot.lane.b32.xlu0 %v424, 95
        %v436 = vpop.permute.xlu0 %435
        %v437 = vrot.slane %v430, 4
        %v438 = vrot.slane %v432, 4
        %v439 = vrot.slane %v434, 4
        %v440 = vrot.slane %v436, 4
        %v441 = vsel %vm208, %v437, %v438
        %vm442 = vcmask 777216
        %v443 = vsel %vm442, %v430, %v441
        %v444 = vsel %vm208, %v439, %v440
        %v445 = vsel %vm442, %v434, %v444
        %448 = vst [vmem:[#allocation2 + $0x90] sm:$0xff] %v443
        %449 = vst [vmem:[#allocation2 + $0x98] sm:$0xff] %v445
        %v450 = vld [vmem:[%s182 + $0x30] sm:$0xff]
        %v451 = vld [vmem:[%s182 + $0x38] sm:$0xf]
        %v452 = vld [vmem:[%s182 + $0x3c] sm:$0xff]
        %v453 = vld [vmem:[%s182 + $0x44] sm:$0xf]
        %458 = vrot.lane.b32.xlu0 %v450, 91
        %v459 = vpop.permute.xlu0 %458
        %460 = vrot.lane.b32.xlu0 %v451, 91
        %v461 = vpop.permute.xlu0 %460
        %462 = vrot.lane.b32.xlu0 %v452, 91
        %v463 = vpop.permute.xlu0 %462
        %464 = vrot.lane.b32.xlu0 %v453, 91
        %v465 = vpop.permute.xlu0 %464
        %v466 = vrot.slane %v459, 4
        %v467 = vrot.slane %v461, 4
        %v468 = vrot.slane %v463, 4
        %v469 = vrot.slane %v465, 4
        %v470 = vsel %vm208, %v466, %v467
        %vm471 = vcmask 744448
        %v472 = vsel %vm471, %v459, %v470
        %v473 = vsel %vm208, %v468, %v469
        %v474 = vsel %vm471, %v463, %v473
        %477 = vst [vmem:[#allocation2 + $0xa0] sm:$0xff] %v472
        %478 = vst [vmem:[#allocation2 + $0xa8] sm:$0xff] %v474
        %v479 = vld [vmem:[%s182 + $0x18] sm:$0xff]
        %v480 = vld [vmem:[%s182 + $0x20] sm:$0xf]
        %v481 = vld [vmem:[%s182 + $0x24] sm:$0xff]
        %v482 = vld [vmem:[%s182 + $0x2c] sm:$0xf]
        %487 = vrot.lane.b32.xlu0 %v479, 87
        %v488 = vpop.permute.xlu0 %487
        %489 = vrot.lane.b32.xlu0 %v480, 87
        %v490 = vpop.permute.xlu0 %489
        %491 = vrot.lane.b32.xlu0 %v481, 87
        %v492 = vpop.permute.xlu0 %491
        %493 = vrot.lane.b32.xlu0 %v482, 87
        %v494 = vpop.permute.xlu0 %493
        %v495 = vrot.slane %v488, 4
        %v496 = vrot.slane %v490, 4
        %v497 = vrot.slane %v492, 4
        %v498 = vrot.slane %v494, 4
        %v499 = vsel %vm208, %v495, %v496
        %vm500 = vcmask 711680
        %v501 = vsel %vm500, %v488, %v499
        %v502 = vsel %vm208, %v497, %v498
        %v503 = vsel %vm500, %v492, %v502
        %506 = vst [vmem:[#allocation2 + $0xb0] sm:$0xff] %v501
        %507 = vst [vmem:[#allocation2 + $0xb8] sm:$0xff] %v503
        %v508 = vld [vmem:[%s182] sm:$0xff]
        %v509 = vld [vmem:[%s182 + $0x8] sm:$0xf]
        %v510 = vld [vmem:[%s182 + $0xc] sm:$0xff]
        %v511 = vld [vmem:[%s182 + $0x14] sm:$0xf]
        %516 = vrot.lane.b32.xlu0 %v508, 83
        %v517 = vpop.permute.xlu0 %516
        %518 = vrot.lane.b32.xlu0 %v509, 83
        %v519 = vpop.permute.xlu0 %518
        %520 = vrot.lane.b32.xlu0 %v510, 83
        %v521 = vpop.permute.xlu0 %520
        %522 = vrot.lane.b32.xlu0 %v511, 83
        %v523 = vpop.permute.xlu0 %522
        %v524 = vrot.slane %v517, 4
        %v525 = vrot.slane %v519, 4
        %v526 = vrot.slane %v521, 4
        %v527 = vrot.slane %v523, 4
        %v528 = vsel %vm208, %v524, %v525
        %vm529 = vcmask 678912
        %v530 = vsel %vm529, %v517, %v528
        %v531 = vsel %vm208, %v526, %v527
        %v532 = vsel %vm529, %v521, %v531
        %535 = vst [vmem:[#allocation2 + $0xc0] sm:$0xff] %v530
        %536 = vst [vmem:[#allocation2 + $0xc8] sm:$0xff] %v532
        %v537 = vld [vmem:[%s182] sm:$0xff]
        %v538 = vld [vmem:[%s182 + $0x8] sm:$0xf]
        %v539 = vld [vmem:[%s182 + $0xc] sm:$0xff]
        %v540 = vld [vmem:[%s182 + $0x14] sm:$0xf]
        %545 = vrot.lane.b32.xlu0 %v537, 82
        %v546 = vpop.permute.xlu0 %545
        %547 = vrot.lane.b32.xlu0 %v538, 82
        %v548 = vpop.permute.xlu0 %547
        %549 = vrot.lane.b32.xlu0 %v539, 82
        %v550 = vpop.permute.xlu0 %549
        %551 = vrot.lane.b32.xlu0 %v540, 82
        %v552 = vpop.permute.xlu0 %551
        %v553 = vrot.slane %v546, 4
        %v554 = vrot.slane %v548, 4
        %v555 = vrot.slane %v550, 4
        %v556 = vrot.slane %v552, 4
        %v557 = vsel %vm208, %v553, %v554
        %vm558 = vcmask 670720
        %v559 = vsel %vm558, %v546, %v557
        %v560 = vsel %vm208, %v555, %v556
        %v561 = vsel %vm558, %v550, %v560
        %564 = vst [vmem:[#allocation2 + $0xd0] sm:$0xff] %v559
        %565 = vst [vmem:[#allocation2 + $0xd8] sm:$0xff] %v561
        %v566 = vld [vmem:[%s182 + $0x48] sm:$0xff]
        %v567 = vld [vmem:[%s182 + $0x50] sm:$0xf]
        %v568 = vld [vmem:[%s182 + $0x54] sm:$0xff]
        %v569 = vld [vmem:[%s182 + $0x5c] sm:$0xf]
        %574 = vrot.lane.b32.xlu0 %v566, 81
        %v575 = vpop.permute.xlu0 %574
        %576 = vrot.lane.b32.xlu0 %v567, 81
        %v577 = vpop.permute.xlu0 %576
        %578 = vrot.lane.b32.xlu0 %v568, 81
        %v579 = vpop.permute.xlu0 %578
        %580 = vrot.lane.b32.xlu0 %v569, 81
        %v581 = vpop.permute.xlu0 %580
        %v582 = vrot.slane %v575, 4
        %v583 = vrot.slane %v577, 4
        %v584 = vrot.slane %v579, 4
        %v585 = vrot.slane %v581, 4
        %v586 = vsel %vm208, %v582, %v583
        %vm587 = vcmask 662528
        %v588 = vsel %vm587, %v575, %v586
        %v589 = vsel %vm208, %v584, %v585
        %v590 = vsel %vm587, %v579, %v589
        %593 = vst [vmem:[#allocation2 + $0xe0] sm:$0xff] %v588
        %594 = vst [vmem:[#allocation2 + $0xe8] sm:$0xff] %v590
        %v595 = vld [vmem:[%s182 + $0x48] sm:$0xff]
        %v596 = vld [vmem:[%s182 + $0x50] sm:$0xf]
        %v597 = vld [vmem:[%s182 + $0x54] sm:$0xff]
        %v598 = vld [vmem:[%s182 + $0x5c] sm:$0xf]
        %603 = vrot.lane.b32.xlu0 %v595, 80
        %v604 = vpop.permute.xlu0 %603
        %605 = vrot.lane.b32.xlu0 %v596, 80
        %v606 = vpop.permute.xlu0 %605
        %607 = vrot.lane.b32.xlu0 %v597, 80
        %v608 = vpop.permute.xlu0 %607
        %609 = vrot.lane.b32.xlu0 %v598, 80
        %v610 = vpop.permute.xlu0 %609
        %v611 = vrot.slane %v604, 4
        %v612 = vrot.slane %v606, 4
        %v613 = vrot.slane %v608, 4
        %v614 = vrot.slane %v610, 4
        %v615 = vsel %vm208, %v611, %v612
        %vm616 = vcmask 654336
        %v617 = vsel %vm616, %v604, %v615
        %v618 = vsel %vm208, %v613, %v614
        %v619 = vsel %vm616, %v608, %v618
        %622 = vst [vmem:[#allocation2 + $0xf0] sm:$0xff] %v617
        %623 = vst [vmem:[#allocation2 + $0xf8] sm:$0xff] %v619
        %v624 = vld [vmem:[%s182 + $0x30] sm:$0xff]
        %v625 = vld [vmem:[%s182 + $0x38] sm:$0xf]
        %v626 = vld [vmem:[%s182 + $0x3c] sm:$0xff]
        %v627 = vld [vmem:[%s182 + $0x44] sm:$0xf]
        %632 = vrot.lane.b32.xlu0 %v624, 79
        %v633 = vpop.permute.xlu0 %632
        %634 = vrot.lane.b32.xlu0 %v625, 79
        %v635 = vpop.permute.xlu0 %634
        %636 = vrot.lane.b32.xlu0 %v626, 79
        %v637 = vpop.permute.xlu0 %636
        %638 = vrot.lane.b32.xlu0 %v627, 79
        %v639 = vpop.permute.xlu0 %638
        %v640 = vrot.slane %v633, 4
        %v641 = vrot.slane %v635, 4
        %v642 = vrot.slane %v637, 4
        %v643 = vrot.slane %v639, 4
        %v644 = vsel %vm208, %v640, %v641
        %vm645 = vcmask 646144
        %v646 = vsel %vm645, %v633, %v644
        %v647 = vsel %vm208, %v642, %v643
        %v648 = vsel %vm645, %v637, %v647
        %651 = vst [vmem:[#allocation2 + $0x100] sm:$0xff] %v646
        %652 = vst [vmem:[#allocation2 + $0x108] sm:$0xff] %v648
        %v653 = vld [vmem:[%s182 + $0x18] sm:$0xff]
        %v654 = vld [vmem:[%s182 + $0x20] sm:$0xf]
        %v655 = vld [vmem:[%s182 + $0x24] sm:$0xff]
        %v656 = vld [vmem:[%s182 + $0x2c] sm:$0xf]
        %661 = vrot.lane.b32.xlu0 %v653, 77
        %v662 = vpop.permute.xlu0 %661
        %663 = vrot.lane.b32.xlu0 %v654, 77
        %v664 = vpop.permute.xlu0 %663
        %665 = vrot.lane.b32.xlu0 %v655, 77
        %v666 = vpop.permute.xlu0 %665
        %667 = vrot.lane.b32.xlu0 %v656, 77
        %v668 = vpop.permute.xlu0 %667
        %v669 = vrot.slane %v662, 4
        %v670 = vrot.slane %v664, 4
        %v671 = vrot.slane %v666, 4
        %v672 = vrot.slane %v668, 4
        %v673 = vsel %vm208, %v669, %v670
        %vm674 = vcmask 629760
        %v675 = vsel %vm674, %v662, %v673
        %v676 = vsel %vm208, %v671, %v672
        %v677 = vsel %vm674, %v666, %v676
        %680 = vst [vmem:[#allocation2 + $0x110] sm:$0xff] %v675
        %681 = vst [vmem:[#allocation2 + $0x118] sm:$0xff] %v677
        %v682 = vld [vmem:[%s182 + $0x30] sm:$0xff]
        %v683 = vld [vmem:[%s182 + $0x38] sm:$0xf]
        %v684 = vld [vmem:[%s182 + $0x3c] sm:$0xff]
        %v685 = vld [vmem:[%s182 + $0x44] sm:$0xf]
        %690 = vrot.lane.b32.xlu0 %v682, 76
        %v691 = vpop.permute.xlu0 %690
        %692 = vrot.lane.b32.xlu0 %v683, 76
        %v693 = vpop.permute.xlu0 %692
        %694 = vrot.lane.b32.xlu0 %v684, 76
        %v695 = vpop.permute.xlu0 %694
        %696 = vrot.lane.b32.xlu0 %v685, 76
        %v697 = vpop.permute.xlu0 %696
        %v698 = vrot.slane %v691, 4
        %v699 = vrot.slane %v693, 4
        %v700 = vrot.slane %v695, 4
        %v701 = vrot.slane %v697, 4
        %v702 = vsel %vm208, %v698, %v699
        %vm703 = vcmask 621568
        %v704 = vsel %vm703, %v691, %v702
        %v705 = vsel %vm208, %v700, %v701
        %v706 = vsel %vm703, %v695, %v705
        %709 = vst [vmem:[#allocation2 + $0x120] sm:$0xff] %v704
        %710 = vst [vmem:[#allocation2 + $0x128] sm:$0xff] %v706
        %v711 = vld [vmem:[%s182] sm:$0xff]
        %v712 = vld [vmem:[%s182 + $0x8] sm:$0xf]
        %v713 = vld [vmem:[%s182 + $0xc] sm:$0xff]
        %v714 = vld [vmem:[%s182 + $0x14] sm:$0xf]
        %719 = vrot.lane.b32.xlu0 %v711, 75
        %v720 = vpop.permute.xlu0 %719
        %721 = vrot.lane.b32.xlu0 %v712, 75
        %v722 = vpop.permute.xlu0 %721
        %723 = vrot.lane.b32.xlu0 %v713, 75
        %v724 = vpop.permute.xlu0 %723
        %725 = vrot.lane.b32.xlu0 %v714, 75
        %v726 = vpop.permute.xlu0 %725
        %v727 = vrot.slane %v720, 4
        %v728 = vrot.slane %v722, 4
        %v729 = vrot.slane %v724, 4
        %v730 = vrot.slane %v726, 4
        %v731 = vsel %vm208, %v727, %v728
        %vm732 = vcmask 613376
        %v733 = vsel %vm732, %v720, %v731
        %v734 = vsel %vm208, %v729, %v730
        %v735 = vsel %vm732, %v724, %v734
        %738 = vst [vmem:[#allocation2 + $0x130] sm:$0xff] %v733
        %739 = vst [vmem:[#allocation2 + $0x138] sm:$0xff] %v735
        %v740 = vld [vmem:[%s182 + $0x48] sm:$0xff]
        %v741 = vld [vmem:[%s182 + $0x50] sm:$0xf]
        %v742 = vld [vmem:[%s182 + $0x54] sm:$0xff]
        %v743 = vld [vmem:[%s182 + $0x5c] sm:$0xf]
        %748 = vrot.lane.b32.xlu0 %v740, 74
        %v749 = vpop.permute.xlu0 %748
        %750 = vrot.lane.b32.xlu0 %v741, 74
        %v751 = vpop.permute.xlu0 %750
        %752 = vrot.lane.b32.xlu0 %v742, 74
        %v753 = vpop.permute.xlu0 %752
        %754 = vrot.lane.b32.xlu0 %v743, 74
        %v755 = vpop.permute.xlu0 %754
        %v756 = vrot.slane %v749, 4
        %v757 = vrot.slane %v751, 4
        %v758 = vrot.slane %v753, 4
        %v759 = vrot.slane %v755, 4
        %v760 = vsel %vm208, %v756, %v757
        %vm761 = vcmask 605184
        %v762 = vsel %vm761, %v749, %v760
        %v763 = vsel %vm208, %v758, %v759
        %v764 = vsel %vm761, %v753, %v763
        %767 = vst [vmem:[#allocation2 + $0x140] sm:$0xff] %v762
        %768 = vst [vmem:[#allocation2 + $0x148] sm:$0xff] %v764
        %v769 = vld [vmem:[%s182 + $0x18] sm:$0xff]
        %v770 = vld [vmem:[%s182 + $0x20] sm:$0xf]
        %v771 = vld [vmem:[%s182 + $0x24] sm:$0xff]
        %v772 = vld [vmem:[%s182 + $0x2c] sm:$0xf]
        %777 = vrot.lane.b32.xlu0 %v769, 72
        %v778 = vpop.permute.xlu0 %777
        %779 = vrot.lane.b32.xlu0 %v770, 72
        %v780 = vpop.permute.xlu0 %779
        %781 = vrot.lane.b32.xlu0 %v771, 72
        %v782 = vpop.permute.xlu0 %781
        %783 = vrot.lane.b32.xlu0 %v772, 72
        %v784 = vpop.permute.xlu0 %783
        %v785 = vrot.slane %v778, 4
        %v786 = vrot.slane %v780, 4
        %v787 = vrot.slane %v782, 4
        %v788 = vrot.slane %v784, 4
        %v789 = vsel %vm208, %v785, %v786
        %vm790 = vcmask 588800
        %v791 = vsel %vm790, %v778, %v789
        %v792 = vsel %vm208, %v787, %v788
        %v793 = vsel %vm790, %v782, %v792
        %796 = vst [vmem:[#allocation2 + $0x150] sm:$0xff] %v791
        %797 = vst [vmem:[#allocation2 + $0x158] sm:$0xff] %v793
        %v798 = vld [vmem:[%s182 + $0x30] sm:$0xff]
        %v799 = vld [vmem:[%s182 + $0x38] sm:$0xf]
        %v800 = vld [vmem:[%s182 + $0x3c] sm:$0xff]
        %v801 = vld [vmem:[%s182 + $0x44] sm:$0xf]
        %806 = vrot.lane.b32.xlu0 %v798, 72
        %v807 = vpop.permute.xlu0 %806
        %808 = vrot.lane.b32.xlu0 %v799, 72
        %v809 = vpop.permute.xlu0 %808
        %810 = vrot.lane.b32.xlu0 %v800, 72
        %v811 = vpop.permute.xlu0 %810
        %812 = vrot.lane.b32.xlu0 %v801, 72
        %v813 = vpop.permute.xlu0 %812
        %v814 = vrot.slane %v807, 4
        %v815 = vrot.slane %v809, 4
        %v816 = vrot.slane %v811, 4
        %v817 = vrot.slane %v813, 4
        %v818 = vsel %vm208, %v814, %v815
        %v819 = vsel %vm790, %v807, %v818
        %v820 = vsel %vm208, %v816, %v817
        %v821 = vsel %vm790, %v811, %v820
        %824 = vst [vmem:[#allocation2 + $0x160] sm:$0xff] %v819
        %825 = vst [vmem:[#allocation2 + $0x168] sm:$0xff] %v821
        %v826 = vld [vmem:[%s182 + $0x18] sm:$0xff]
        %v827 = vld [vmem:[%s182 + $0x20] sm:$0xf]
        %v828 = vld [vmem:[%s182 + $0x24] sm:$0xff]
        %v829 = vld [vmem:[%s182 + $0x2c] sm:$0xf]
        %834 = vrot.lane.b32.xlu0 %v826, 70
        %v835 = vpop.permute.xlu0 %834
        %836 = vrot.lane.b32.xlu0 %v827, 70
        %v837 = vpop.permute.xlu0 %836
        %838 = vrot.lane.b32.xlu0 %v828, 70
        %v839 = vpop.permute.xlu0 %838
        %840 = vrot.lane.b32.xlu0 %v829, 70
        %v841 = vpop.permute.xlu0 %840
        %v842 = vrot.slane %v835, 4
        %v843 = vrot.slane %v837, 4
        %v844 = vrot.slane %v839, 4
        %v845 = vrot.slane %v841, 4
        %v846 = vsel %vm208, %v842, %v843
        %vm847 = vcmask 572416
        %v848 = vsel %vm847, %v835, %v846
        %v849 = vsel %vm208, %v844, %v845
        %v850 = vsel %vm847, %v839, %v849
        %853 = vst [vmem:[#allocation2 + $0x170] sm:$0xff] %v848
        %854 = vst [vmem:[#allocation2 + $0x178] sm:$0xff] %v850
        %v855 = vld [vmem:[%s182] sm:$0xff]
        %v856 = vld [vmem:[%s182 + $0x8] sm:$0xf]
        %v857 = vld [vmem:[%s182 + $0xc] sm:$0xff]
        %v858 = vld [vmem:[%s182 + $0x14] sm:$0xf]
        %863 = vrot.lane.b32.xlu0 %v855, 68
        %v864 = vpop.permute.xlu0 %863
        %865 = vrot.lane.b32.xlu0 %v856, 68
        %v866 = vpop.permute.xlu0 %865
        %867 = vrot.lane.b32.xlu0 %v857, 68
        %v868 = vpop.permute.xlu0 %867
        %869 = vrot.lane.b32.xlu0 %v858, 68
        %v870 = vpop.permute.xlu0 %869
        %v871 = vrot.slane %v864, 4
        %v872 = vrot.slane %v866, 4
        %v873 = vrot.slane %v868, 4
        %v874 = vrot.slane %v870, 4
        %v875 = vsel %vm208, %v871, %v872
        %vm876 = vcmask 556032
        %v877 = vsel %vm876, %v864, %v875
        %v878 = vsel %vm208, %v873, %v874
        %v879 = vsel %vm876, %v868, %v878
        %882 = vst [vmem:[#allocation2 + $0x180] sm:$0xff] %v877
        %883 = vst [vmem:[#allocation2 + $0x188] sm:$0xff] %v879
        %884 = vst [vmem:[#allocation2 + $0x190] sm:$0xff] %v877
        %885 = vst [vmem:[#allocation2 + $0x198] sm:$0xff] %v879
        %v886 = vld [vmem:[%s182 + $0x48] sm:$0xff]
        %v887 = vld [vmem:[%s182 + $0x50] sm:$0xf]
        %v888 = vld [vmem:[%s182 + $0x54] sm:$0xff]
        %v889 = vld [vmem:[%s182 + $0x5c] sm:$0xf]
        %894 = vrot.lane.b32.xlu0 %v886, 67
        %v895 = vpop.permute.xlu0 %894
        %896 = vrot.lane.b32.xlu0 %v887, 67
        %v897 = vpop.permute.xlu0 %896
        %898 = vrot.lane.b32.xlu0 %v888, 67
        %v899 = vpop.permute.xlu0 %898
        %900 = vrot.lane.b32.xlu0 %v889, 67
        %v901 = vpop.permute.xlu0 %900
        %v902 = vrot.slane %v895, 4
        %v903 = vrot.slane %v897, 4
        %v904 = vrot.slane %v899, 4
        %v905 = vrot.slane %v901, 4
        %v906 = vsel %vm208, %v902, %v903
        %vm907 = vcmask 547840
        %v908 = vsel %vm907, %v895, %v906
        %v909 = vsel %vm208, %v904, %v905
        %v910 = vsel %vm907, %v899, %v909
        %913 = vst [vmem:[#allocation2 + $0x1a0] sm:$0xff] %v908
        %914 = vst [vmem:[#allocation2 + $0x1a8] sm:$0xff] %v910
        %v915 = vld [vmem:[%s182 + $0x30] sm:$0xff]
        %v916 = vld [vmem:[%s182 + $0x38] sm:$0xf]
        %v917 = vld [vmem:[%s182 + $0x3c] sm:$0xff]
        %v918 = vld [vmem:[%s182 + $0x44] sm:$0xf]
        %923 = vrot.lane.b32.xlu0 %v915, 65
        %v924 = vpop.permute.xlu0 %923
        %925 = vrot.lane.b32.xlu0 %v916, 65
        %v926 = vpop.permute.xlu0 %925
        %927 = vrot.lane.b32.xlu0 %v917, 65
        %v928 = vpop.permute.xlu0 %927
        %929 = vrot.lane.b32.xlu0 %v918, 65
        %v930 = vpop.permute.xlu0 %929
        %v931 = vrot.slane %v924, 4
        %v932 = vrot.slane %v926, 4
        %v933 = vrot.slane %v928, 4
        %v934 = vrot.slane %v930, 4
        %v935 = vsel %vm208, %v931, %v932
        %vm936 = vcmask 531456
        %v937 = vsel %vm936, %v924, %v935
        %v938 = vsel %vm208, %v933, %v934
        %v939 = vsel %vm936, %v928, %v938
        %942 = vst [vmem:[#allocation2 + $0x1b0] sm:$0xff] %v937
        %943 = vst [vmem:[#allocation2 + $0x1b8] sm:$0xff] %v939
        %v944 = vld [vmem:[%s182 + $0x48] sm:$0xff]
        %v945 = vld [vmem:[%s182 + $0x50] sm:$0xf]
        %v946 = vld [vmem:[%s182 + $0x54] sm:$0xff]
        %v947 = vld [vmem:[%s182 + $0x5c] sm:$0xf]
        %952 = vrot.lane.b32.xlu0 %v944, 65
        %v953 = vpop.permute.xlu0 %952
        %954 = vrot.lane.b32.xlu0 %v945, 65
        %v955 = vpop.permute.xlu0 %954
        %956 = vrot.lane.b32.xlu0 %v946, 65
        %v957 = vpop.permute.xlu0 %956
        %958 = vrot.lane.b32.xlu0 %v947, 65
        %v959 = vpop.permute.xlu0 %958
        %v960 = vrot.slane %v953, 4
        %v961 = vrot.slane %v955, 4
        %v962 = vrot.slane %v957, 4
        %v963 = vrot.slane %v959, 4
        %v964 = vsel %vm208, %v960, %v961
        %v965 = vsel %vm936, %v953, %v964
        %v966 = vsel %vm208, %v962, %v963
        %v967 = vsel %vm936, %v957, %v966
        %970 = vst [vmem:[#allocation2 + $0x1c0] sm:$0xff] %v965
        %971 = vst [vmem:[#allocation2 + $0x1c8] sm:$0xff] %v967
        %v972 = vld [vmem:[%s182 + $0x18] sm:$0xff]
        %v973 = vld [vmem:[%s182 + $0x20] sm:$0xf]
        %v974 = vld [vmem:[%s182 + $0x24] sm:$0xff]
        %v975 = vld [vmem:[%s182 + $0x2c] sm:$0xf]
        %980 = vrot.lane.b32.xlu0 %v972, 63
        %v981 = vpop.permute.xlu0 %980
        %982 = vrot.lane.b32.xlu0 %v973, 63
        %v983 = vpop.permute.xlu0 %982
        %984 = vrot.lane.b32.xlu0 %v974, 63
        %v985 = vpop.permute.xlu0 %984
        %986 = vrot.lane.b32.xlu0 %v975, 63
        %v987 = vpop.permute.xlu0 %986
        %v988 = vrot.slane %v981, 4
        %v989 = vrot.slane %v983, 4
        %v990 = vrot.slane %v985, 4
        %v991 = vrot.slane %v987, 4
        %v992 = vsel %vm208, %v988, %v989
        %vm993 = vcmask 515072
        %v994 = vsel %vm993, %v981, %v992
        %v995 = vsel %vm208, %v990, %v991
        %v996 = vsel %vm993, %v985, %v995
        %999 = vst [vmem:[#allocation2 + $0x1d0] sm:$0xff] %v994
        %1000 = vst [vmem:[#allocation2 + $0x1d8] sm:$0xff] %v996
        %v1001 = vld [vmem:[%s182] sm:$0xff]
        %v1002 = vld [vmem:[%s182 + $0x8] sm:$0xf]
        %v1003 = vld [vmem:[%s182 + $0xc] sm:$0xff]
        %v1004 = vld [vmem:[%s182 + $0x14] sm:$0xf]
        %1009 = vrot.lane.b32.xlu0 %v1001, 61
        %v1010 = vpop.permute.xlu0 %1009
        %1011 = vrot.lane.b32.xlu0 %v1002, 61
        %v1012 = vpop.permute.xlu0 %1011
        %1013 = vrot.lane.b32.xlu0 %v1003, 61
        %v1014 = vpop.permute.xlu0 %1013
        %1015 = vrot.lane.b32.xlu0 %v1004, 61
        %v1016 = vpop.permute.xlu0 %1015
        %v1017 = vrot.slane %v1010, 4
        %v1018 = vrot.slane %v1012, 4
        %v1019 = vrot.slane %v1014, 4
        %v1020 = vrot.slane %v1016, 4
        %v1021 = vsel %vm208, %v1017, %v1018
        %vm1022 = vcmask 498688
        %v1023 = vsel %vm1022, %v1010, %v1021
        %v1024 = vsel %vm208, %v1019, %v1020
        %v1025 = vsel %vm1022, %v1014, %v1024
        %1028 = vst [vmem:[#allocation2 + $0x1e0] sm:$0xff] %v1023
        %1029 = vst [vmem:[#allocation2 + $0x1e8] sm:$0xff] %v1025
        %v1030 = vld [vmem:[%s182 + $0x30] sm:$0xff]
        %v1031 = vld [vmem:[%s182 + $0x38] sm:$0xf]
        %v1032 = vld [vmem:[%s182 + $0x3c] sm:$0xff]
        %v1033 = vld [vmem:[%s182 + $0x44] sm:$0xf]
        %1038 = vrot.lane.b32.xlu0 %v1030, 61
        %v1039 = vpop.permute.xlu0 %1038
        %1040 = vrot.lane.b32.xlu0 %v1031, 61
        %v1041 = vpop.permute.xlu0 %1040
        %1042 = vrot.lane.b32.xlu0 %v1032, 61
        %v1043 = vpop.permute.xlu0 %1042
        %1044 = vrot.lane.b32.xlu0 %v1033, 61
        %v1045 = vpop.permute.xlu0 %1044
        %v1046 = vrot.slane %v1039, 4
        %v1047 = vrot.slane %v1041, 4
        %v1048 = vrot.slane %v1043, 4
        %v1049 = vrot.slane %v1045, 4
        %v1050 = vsel %vm208, %v1046, %v1047
        %v1051 = vsel %vm1022, %v1039, %v1050
        %v1052 = vsel %vm208, %v1048, %v1049
        %v1053 = vsel %vm1022, %v1043, %v1052
        %1056 = vst [vmem:[#allocation2 + $0x1f0] sm:$0xff] %v1051
        %1057 = vst [vmem:[#allocation2 + $0x1f8] sm:$0xff] %v1053
        %v1058 = vld [vmem:[%s182 + $0x48] sm:$0xff]
        %v1059 = vld [vmem:[%s182 + $0x50] sm:$0xf]
        %v1060 = vld [vmem:[%s182 + $0x54] sm:$0xff]
        %v1061 = vld [vmem:[%s182 + $0x5c] sm:$0xf]
        %1066 = vrot.lane.b32.xlu0 %v1058, 60
        %v1067 = vpop.permute.xlu0 %1066
        %1068 = vrot.lane.b32.xlu0 %v1059, 60
        %v1069 = vpop.permute.xlu0 %1068
        %1070 = vrot.lane.b32.xlu0 %v1060, 60
        %v1071 = vpop.permute.xlu0 %1070
        %1072 = vrot.lane.b32.xlu0 %v1061, 60
        %v1073 = vpop.permute.xlu0 %1072
        %v1074 = vrot.slane %v1067, 4
        %v1075 = vrot.slane %v1069, 4
        %v1076 = vrot.slane %v1071, 4
        %v1077 = vrot.slane %v1073, 4
        %v1078 = vsel %vm208, %v1074, %v1075
        %vm1079 = vcmask 490496
        %v1080 = vsel %vm1079, %v1067, %v1078
        %v1081 = vsel %vm208, %v1076, %v1077
        %v1082 = vsel %vm1079, %v1071, %v1081
        %1085 = vst [vmem:[#allocation2 + $0x200] sm:$0xff] %v1080
        %1086 = vst [vmem:[#allocation2 + $0x208] sm:$0xff] %v1082
        %v1087 = vld [vmem:[%s182] sm:$0xff]
        %v1088 = vld [vmem:[%s182 + $0x8] sm:$0xf]
        %v1089 = vld [vmem:[%s182 + $0xc] sm:$0xff]
        %v1090 = vld [vmem:[%s182 + $0x14] sm:$0xf]
        %1095 = vrot.lane.b32.xlu0 %v1087, 59
        %v1096 = vpop.permute.xlu0 %1095
        %1097 = vrot.lane.b32.xlu0 %v1088, 59
        %v1098 = vpop.permute.xlu0 %1097
        %1099 = vrot.lane.b32.xlu0 %v1089, 59
        %v1100 = vpop.permute.xlu0 %1099
        %1101 = vrot.lane.b32.xlu0 %v1090, 59
        %v1102 = vpop.permute.xlu0 %1101
        %v1103 = vrot.slane %v1096, 4
        %v1104 = vrot.slane %v1098, 4
        %v1105 = vrot.slane %v1100, 4
        %v1106 = vrot.slane %v1102, 4
        %v1107 = vsel %vm208, %v1103, %v1104
        %vm1108 = vcmask 482304
        %v1109 = vsel %vm1108, %v1096, %v1107
        %v1110 = vsel %vm208, %v1105, %v1106
        %v1111 = vsel %vm1108, %v1100, %v1110
        %1114 = vst [vmem:[#allocation2 + $0x210] sm:$0xff] %v1109
        %1115 = vst [vmem:[#allocation2 + $0x218] sm:$0xff] %v1111
        %v1116 = vld [vmem:[%s182 + $0x48] sm:$0xff]
        %v1117 = vld [vmem:[%s182 + $0x50] sm:$0xf]
        %v1118 = vld [vmem:[%s182 + $0x54] sm:$0xff]
        %v1119 = vld [vmem:[%s182 + $0x5c] sm:$0xf]
        %1124 = vrot.lane.b32.xlu0 %v1116, 59
        %v1125 = vpop.permute.xlu0 %1124
        %1126 = vrot.lane.b32.xlu0 %v1117, 59
        %v1127 = vpop.permute.xlu0 %1126
        %1128 = vrot.lane.b32.xlu0 %v1118, 59
        %v1129 = vpop.permute.xlu0 %1128
        %1130 = vrot.lane.b32.xlu0 %v1119, 59
        %v1131 = vpop.permute.xlu0 %1130
        %v1132 = vrot.slane %v1125, 4
        %v1133 = vrot.slane %v1127, 4
        %v1134 = vrot.slane %v1129, 4
        %v1135 = vrot.slane %v1131, 4
        %v1136 = vsel %vm208, %v1132, %v1133
        %v1137 = vsel %vm1108, %v1125, %v1136
        %v1138 = vsel %vm208, %v1134, %v1135
        %v1139 = vsel %vm1108, %v1129, %v1138
        %1142 = vst [vmem:[#allocation2 + $0x220] sm:$0xff] %v1137
        %1143 = vst [vmem:[#allocation2 + $0x228] sm:$0xff] %v1139
        %v1144 = vld [vmem:[%s182 + $0x30] sm:$0xff]
        %v1145 = vld [vmem:[%s182 + $0x38] sm:$0xf]
        %v1146 = vld [vmem:[%s182 + $0x3c] sm:$0xff]
        %v1147 = vld [vmem:[%s182 + $0x44] sm:$0xf]
        %1152 = vrot.lane.b32.xlu0 %v1144, 58
        %v1153 = vpop.permute.xlu0 %1152
        %1154 = vrot.lane.b32.xlu0 %v1145, 58
        %v1155 = vpop.permute.xlu0 %1154
        %1156 = vrot.lane.b32.xlu0 %v1146, 58
        %v1157 = vpop.permute.xlu0 %1156
        %1158 = vrot.lane.b32.xlu0 %v1147, 58
        %v1159 = vpop.permute.xlu0 %1158
        %v1160 = vrot.slane %v1153, 4
        %v1161 = vrot.slane %v1155, 4
        %v1162 = vrot.slane %v1157, 4
        %v1163 = vrot.slane %v1159, 4
        %v1164 = vsel %vm208, %v1160, %v1161
        %vm1165 = vcmask 474112
        %v1166 = vsel %vm1165, %v1153, %v1164
        %v1167 = vsel %vm208, %v1162, %v1163
        %v1168 = vsel %vm1165, %v1157, %v1167
        %1171 = vst [vmem:[#allocation2 + $0x230] sm:$0xff] %v1166
        %1172 = vst [vmem:[#allocation2 + $0x238] sm:$0xff] %v1168
        %1173 = vst [vmem:[#allocation2 + $0x240] sm:$0xff] %v1166
        %1174 = vst [vmem:[#allocation2 + $0x248] sm:$0xff] %v1168
        %v1175 = vld [vmem:[%s182 + $0x18] sm:$0xff]
        %v1176 = vld [vmem:[%s182 + $0x20] sm:$0xf]
        %v1177 = vld [vmem:[%s182 + $0x24] sm:$0xff]
        %v1178 = vld [vmem:[%s182 + $0x2c] sm:$0xf]
        %1183 = vrot.lane.b32.xlu0 %v1175, 57
        %v1184 = vpop.permute.xlu0 %1183
        %1185 = vrot.lane.b32.xlu0 %v1176, 57
        %v1186 = vpop.permute.xlu0 %1185
        %1187 = vrot.lane.b32.xlu0 %v1177, 57
        %v1188 = vpop.permute.xlu0 %1187
        %1189 = vrot.lane.b32.xlu0 %v1178, 57
        %v1190 = vpop.permute.xlu0 %1189
        %v1191 = vrot.slane %v1184, 4
        %v1192 = vrot.slane %v1186, 4
        %v1193 = vrot.slane %v1188, 4
        %v1194 = vrot.slane %v1190, 4
        %v1195 = vsel %vm208, %v1191, %v1192
        %vm1196 = vcmask 465920
        %v1197 = vsel %vm1196, %v1184, %v1195
        %v1198 = vsel %vm208, %v1193, %v1194
        %v1199 = vsel %vm1196, %v1188, %v1198
        %1202 = vst [vmem:[#allocation2 + $0x250] sm:$0xff] %v1197
        %1203 = vst [vmem:[#allocation2 + $0x258] sm:$0xff] %v1199
        %1204 = vst [vmem:[#allocation2 + $0x260] sm:$0xff] %v1197
        %1205 = vst [vmem:[#allocation2 + $0x268] sm:$0xff] %v1199
        %v1206 = vld [vmem:[%s182] sm:$0xff]
        %v1207 = vld [vmem:[%s182 + $0x8] sm:$0xf]
        %v1208 = vld [vmem:[%s182 + $0xc] sm:$0xff]
        %v1209 = vld [vmem:[%s182 + $0x14] sm:$0xf]
        %1214 = vrot.lane.b32.xlu0 %v1206, 56
        %v1215 = vpop.permute.xlu0 %1214
        %1216 = vrot.lane.b32.xlu0 %v1207, 56
        %v1217 = vpop.permute.xlu0 %1216
        %1218 = vrot.lane.b32.xlu0 %v1208, 56
        %v1219 = vpop.permute.xlu0 %1218
        %1220 = vrot.lane.b32.xlu0 %v1209, 56
        %v1221 = vpop.permute.xlu0 %1220
        %v1222 = vrot.slane %v1215, 4
        %v1223 = vrot.slane %v1217, 4
        %v1224 = vrot.slane %v1219, 4
        %v1225 = vrot.slane %v1221, 4
        %v1226 = vsel %vm208, %v1222, %v1223
        %vm1227 = vcmask 457728
        %v1228 = vsel %vm1227, %v1215, %v1226
        %v1229 = vsel %vm208, %v1224, %v1225
        %v1230 = vsel %vm1227, %v1219, %v1229
        %1233 = vst [vmem:[#allocation2 + $0x270] sm:$0xff] %v1228
        %1234 = vst [vmem:[#allocation2 + $0x278] sm:$0xff] %v1230
        %v1235 = vld [vmem:[%s182 + $0x18] sm:$0xff]
        %v1236 = vld [vmem:[%s182 + $0x20] sm:$0xf]
        %v1237 = vld [vmem:[%s182 + $0x24] sm:$0xff]
        %v1238 = vld [vmem:[%s182 + $0x2c] sm:$0xf]
        %1243 = vrot.lane.b32.xlu0 %v1235, 56
        %v1244 = vpop.permute.xlu0 %1243
        %1245 = vrot.lane.b32.xlu0 %v1236, 56
        %v1246 = vpop.permute.xlu0 %1245
        %1247 = vrot.lane.b32.xlu0 %v1237, 56
        %v1248 = vpop.permute.xlu0 %1247
        %1249 = vrot.lane.b32.xlu0 %v1238, 56
        %v1250 = vpop.permute.xlu0 %1249
        %v1251 = vrot.slane %v1244, 4
        %v1252 = vrot.slane %v1246, 4
        %v1253 = vrot.slane %v1248, 4
        %v1254 = vrot.slane %v1250, 4
        %v1255 = vsel %vm208, %v1251, %v1252
        %v1256 = vsel %vm1227, %v1244, %v1255
        %v1257 = vsel %vm208, %v1253, %v1254
        %v1258 = vsel %vm1227, %v1248, %v1257
        %1261 = vst [vmem:[#allocation2 + $0x280] sm:$0xff] %v1256
        %1262 = vst [vmem:[#allocation2 + $0x288] sm:$0xff] %v1258
        %v1263 = vld [vmem:[%s182 + $0x48] sm:$0xff]
        %v1264 = vld [vmem:[%s182 + $0x50] sm:$0xf]
        %v1265 = vld [vmem:[%s182 + $0x54] sm:$0xff]
        %v1266 = vld [vmem:[%s182 + $0x5c] sm:$0xf]
        %1271 = vrot.lane.b32.xlu0 %v1263, 56
        %v1272 = vpop.permute.xlu0 %1271
        %1273 = vrot.lane.b32.xlu0 %v1264, 56
        %v1274 = vpop.permute.xlu0 %1273
        %1275 = vrot.lane.b32.xlu0 %v1265, 56
        %v1276 = vpop.permute.xlu0 %1275
        %1277 = vrot.lane.b32.xlu0 %v1266, 56
        %v1278 = vpop.permute.xlu0 %1277
        %v1279 = vrot.slane %v1272, 4
        %v1280 = vrot.slane %v1274, 4
        %v1281 = vrot.slane %v1276, 4
        %v1282 = vrot.slane %v1278, 4
        %v1283 = vsel %vm208, %v1279, %v1280
        %v1284 = vsel %vm1227, %v1272, %v1283
        %v1285 = vsel %vm208, %v1281, %v1282
        %v1286 = vsel %vm1227, %v1276, %v1285
        %1289 = vst [vmem:[#allocation2 + $0x290] sm:$0xff] %v1284
        %1290 = vst [vmem:[#allocation2 + $0x298] sm:$0xff] %v1286
        %v1291 = vld [vmem:[%s182 + $0x30] sm:$0xff]
        %v1292 = vld [vmem:[%s182 + $0x38] sm:$0xf]
        %v1293 = vld [vmem:[%s182 + $0x3c] sm:$0xff]
        %v1294 = vld [vmem:[%s182 + $0x44] sm:$0xf]
        %1299 = vrot.lane.b32.xlu0 %v1291, 55
        %v1300 = vpop.permute.xlu0 %1299
        %1301 = vrot.lane.b32.xlu0 %v1292, 55
        %v1302 = vpop.permute.xlu0 %1301
        %1303 = vrot.lane.b32.xlu0 %v1293, 55
        %v1304 = vpop.permute.xlu0 %1303
        %1305 = vrot.lane.b32.xlu0 %v1294, 55
        %v1306 = vpop.permute.xlu0 %1305
        %v1307 = vrot.slane %v1300, 4
        %v1308 = vrot.slane %v1302, 4
        %v1309 = vrot.slane %v1304, 4
        %v1310 = vrot.slane %v1306, 4
        %v1311 = vsel %vm208, %v1307, %v1308
        %vm1312 = vcmask 449536
        %v1313 = vsel %vm1312, %v1300, %v1311
        %v1314 = vsel %vm208, %v1309, %v1310
        %v1315 = vsel %vm1312, %v1304, %v1314
        %1318 = vst [vmem:[#allocation2 + $0x2a0] sm:$0xff] %v1313
        %1319 = vst [vmem:[#allocation2 + $0x2a8] sm:$0xff] %v1315
        %v1320 = vld [vmem:[%s182] sm:$0xff]
        %v1321 = vld [vmem:[%s182 + $0x8] sm:$0xf]
        %v1322 = vld [vmem:[%s182 + $0xc] sm:$0xff]
        %v1323 = vld [vmem:[%s182 + $0x14] sm:$0xf]
        %1328 = vrot.lane.b32.xlu0 %v1320, 54
        %v1329 = vpop.permute.xlu0 %1328
        %1330 = vrot.lane.b32.xlu0 %v1321, 54
        %v1331 = vpop.permute.xlu0 %1330
        %1332 = vrot.lane.b32.xlu0 %v1322, 54
        %v1333 = vpop.permute.xlu0 %1332
        %1334 = vrot.lane.b32.xlu0 %v1323, 54
        %v1335 = vpop.permute.xlu0 %1334
        %v1336 = vrot.slane %v1329, 4
        %v1337 = vrot.slane %v1331, 4
        %v1338 = vrot.slane %v1333, 4
        %v1339 = vrot.slane %v1335, 4
        %v1340 = vsel %vm208, %v1336, %v1337
        %vm1341 = vcmask 441344
        %v1342 = vsel %vm1341, %v1329, %v1340
        %v1343 = vsel %vm208, %v1338, %v1339
        %v1344 = vsel %vm1341, %v1333, %v1343
        %1347 = vst [vmem:[#allocation2 + $0x2b0] sm:$0xff] %v1342
        %1348 = vst [vmem:[#allocation2 + $0x2b8] sm:$0xff] %v1344
        %v1349 = vld [vmem:[%s182 + $0x18] sm:$0xff]
        %v1350 = vld [vmem:[%s182 + $0x20] sm:$0xf]
        %v1351 = vld [vmem:[%s182 + $0x24] sm:$0xff]
        %v1352 = vld [vmem:[%s182 + $0x2c] sm:$0xf]
        %1357 = vrot.lane.b32.xlu0 %v1349, 54
        %v1358 = vpop.permute.xlu0 %1357
        %1359 = vrot.lane.b32.xlu0 %v1350, 54
        %v1360 = vpop.permute.xlu0 %1359
        %1361 = vrot.lane.b32.xlu0 %v1351, 54
        %v1362 = vpop.permute.xlu0 %1361
        %1363 = vrot.lane.b32.xlu0 %v1352, 54
        %v1364 = vpop.permute.xlu0 %1363
        %v1365 = vrot.slane %v1358, 4
        %v1366 = vrot.slane %v1360, 4
        %v1367 = vrot.slane %v1362, 4
        %v1368 = vrot.slane %v1364, 4
        %v1369 = vsel %vm208, %v1365, %v1366
        %v1370 = vsel %vm1341, %v1358, %v1369
        %v1371 = vsel %vm208, %v1367, %v1368
        %v1372 = vsel %vm1341, %v1362, %v1371
        %1375 = vst [vmem:[#allocation2 + $0x2c0] sm:$0xff] %v1370
        %1376 = vst [vmem:[#allocation2 + $0x2c8] sm:$0xff] %v1372
        %v1377 = vld [vmem:[%s182] sm:$0xff]
        %v1378 = vld [vmem:[%s182 + $0x8] sm:$0xf]
        %v1379 = vld [vmem:[%s182 + $0xc] sm:$0xff]
        %v1380 = vld [vmem:[%s182 + $0x14] sm:$0xf]
        %1385 = vrot.lane.b32.xlu0 %v1377, 53
        %v1386 = vpop.permute.xlu0 %1385
        %1387 = vrot.lane.b32.xlu0 %v1378, 53
        %v1388 = vpop.permute.xlu0 %1387
        %1389 = vrot.lane.b32.xlu0 %v1379, 53
        %v1390 = vpop.permute.xlu0 %1389
        %1391 = vrot.lane.b32.xlu0 %v1380, 53
        %v1392 = vpop.permute.xlu0 %1391
        %v1393 = vrot.slane %v1386, 4
        %v1394 = vrot.slane %v1388, 4
        %v1395 = vrot.slane %v1390, 4
        %v1396 = vrot.slane %v1392, 4
        %v1397 = vsel %vm208, %v1393, %v1394
        %vm1398 = vcmask 433152
        %v1399 = vsel %vm1398, %v1386, %v1397
        %v1400 = vsel %vm208, %v1395, %v1396
        %v1401 = vsel %vm1398, %v1390, %v1400
        %1404 = vst [vmem:[#allocation2 + $0x2d0] sm:$0xff] %v1399
        %1405 = vst [vmem:[#allocation2 + $0x2d8] sm:$0xff] %v1401
        %1406 = vst [vmem:[#allocation2 + $0x2e0] sm:$0xff] %v1399
        %1407 = vst [vmem:[#allocation2 + $0x2e8] sm:$0xff] %v1401
        %v1408 = vld [vmem:[%s182 + $0x48] sm:$0xff]
        %v1409 = vld [vmem:[%s182 + $0x50] sm:$0xf]
        %v1410 = vld [vmem:[%s182 + $0x54] sm:$0xff]
        %v1411 = vld [vmem:[%s182 + $0x5c] sm:$0xf]
        %1416 = vrot.lane.b32.xlu0 %v1408, 53
        %v1417 = vpop.permute.xlu0 %1416
        %1418 = vrot.lane.b32.xlu0 %v1409, 53
        %v1419 = vpop.permute.xlu0 %1418
        %1420 = vrot.lane.b32.xlu0 %v1410, 53
        %v1421 = vpop.permute.xlu0 %1420
        %1422 = vrot.lane.b32.xlu0 %v1411, 53
        %v1423 = vpop.permute.xlu0 %1422
        %v1424 = vrot.slane %v1417, 4
        %v1425 = vrot.slane %v1419, 4
        %v1426 = vrot.slane %v1421, 4
        %v1427 = vrot.slane %v1423, 4
        %v1428 = vsel %vm208, %v1424, %v1425
        %v1429 = vsel %vm1398, %v1417, %v1428
        %v1430 = vsel %vm208, %v1426, %v1427
        %v1431 = vsel %vm1398, %v1421, %v1430
        %1434 = vst [vmem:[#allocation2 + $0x2f0] sm:$0xff] %v1429
        %1435 = vst [vmem:[#allocation2 + $0x2f8] sm:$0xff] %v1431
        %1436 = vst [vmem:[#allocation2 + $0x300] sm:$0xff] %v1429
        %1437 = vst [vmem:[#allocation2 + $0x308] sm:$0xff] %v1431
        %v1438 = vld [vmem:[%s182 + $0x30] sm:$0xff]
        %v1439 = vld [vmem:[%s182 + $0x38] sm:$0xf]
        %v1440 = vld [vmem:[%s182 + $0x3c] sm:$0xff]
        %v1441 = vld [vmem:[%s182 + $0x44] sm:$0xf]
        %1446 = vrot.lane.b32.xlu0 %v1438, 52
        %v1447 = vpop.permute.xlu0 %1446
        %1448 = vrot.lane.b32.xlu0 %v1439, 52
        %v1449 = vpop.permute.xlu0 %1448
        %1450 = vrot.lane.b32.xlu0 %v1440, 52
        %v1451 = vpop.permute.xlu0 %1450
        %1452 = vrot.lane.b32.xlu0 %v1441, 52
        %v1453 = vpop.permute.xlu0 %1452
        %v1454 = vrot.slane %v1447, 4
        %v1455 = vrot.slane %v1449, 4
        %v1456 = vrot.slane %v1451, 4
        %v1457 = vrot.slane %v1453, 4
        %v1458 = vsel %vm208, %v1454, %v1455
        %vm1459 = vcmask 424960
        %v1460 = vsel %vm1459, %v1447, %v1458
        %v1461 = vsel %vm208, %v1456, %v1457
        %v1462 = vsel %vm1459, %v1451, %v1461
        %1465 = vst [vmem:[#allocation2 + $0x310] sm:$0xff] %v1460
        %1466 = vst [vmem:[#allocation2 + $0x318] sm:$0xff] %v1462
        %v1467 = vld [vmem:[%s182 + $0x18] sm:$0xff]
        %v1468 = vld [vmem:[%s182 + $0x20] sm:$0xf]
        %v1469 = vld [vmem:[%s182 + $0x24] sm:$0xff]
        %v1470 = vld [vmem:[%s182 + $0x2c] sm:$0xf]
        %1475 = vrot.lane.b32.xlu0 %v1467, 51
        %v1476 = vpop.permute.xlu0 %1475
        %1477 = vrot.lane.b32.xlu0 %v1468, 51
        %v1478 = vpop.permute.xlu0 %1477
        %1479 = vrot.lane.b32.xlu0 %v1469, 51
        %v1480 = vpop.permute.xlu0 %1479
        %1481 = vrot.lane.b32.xlu0 %v1470, 51
        %v1482 = vpop.permute.xlu0 %1481
        %v1483 = vrot.slane %v1476, 4
        %v1484 = vrot.slane %v1478, 4
        %v1485 = vrot.slane %v1480, 4
        %v1486 = vrot.slane %v1482, 4
        %v1487 = vsel %vm208, %v1483, %v1484
        %vm1488 = vcmask 416768
        %v1489 = vsel %vm1488, %v1476, %v1487
        %v1490 = vsel %vm208, %v1485, %v1486
        %v1491 = vsel %vm1488, %v1480, %v1490
        %1494 = vst [vmem:[#allocation2 + $0x320] sm:$0xff] %v1489
        %1495 = vst [vmem:[#allocation2 + $0x328] sm:$0xff] %v1491
        %v1496 = vld [vmem:[%s182 + $0x30] sm:$0xff]
        %v1497 = vld [vmem:[%s182 + $0x38] sm:$0xf]
        %v1498 = vld [vmem:[%s182 + $0x3c] sm:$0xff]
        %v1499 = vld [vmem:[%s182 + $0x44] sm:$0xf]
        %1504 = vrot.lane.b32.xlu0 %v1496, 51
        %v1505 = vpop.permute.xlu0 %1504
        %1506 = vrot.lane.b32.xlu0 %v1497, 51
        %v1507 = vpop.permute.xlu0 %1506
        %1508 = vrot.lane.b32.xlu0 %v1498, 51
        %v1509 = vpop.permute.xlu0 %1508
        %1510 = vrot.lane.b32.xlu0 %v1499, 51
        %v1511 = vpop.permute.xlu0 %1510
        %v1512 = vrot.slane %v1505, 4
        %v1513 = vrot.slane %v1507, 4
        %v1514 = vrot.slane %v1509, 4
        %v1515 = vrot.slane %v1511, 4
        %v1516 = vsel %vm208, %v1512, %v1513
        %v1517 = vsel %vm1488, %v1505, %v1516
        %v1518 = vsel %vm208, %v1514, %v1515
        %v1519 = vsel %vm1488, %v1509, %v1518
        %1522 = vst [vmem:[#allocation2 + $0x330] sm:$0xff] %v1517
        %1523 = vst [vmem:[#allocation2 + $0x338] sm:$0xff] %v1519
        %v1524 = vld [vmem:[%s182] sm:$0xff]
        %v1525 = vld [vmem:[%s182 + $0x8] sm:$0xf]
        %v1526 = vld [vmem:[%s182 + $0xc] sm:$0xff]
        %v1527 = vld [vmem:[%s182 + $0x14] sm:$0xf]
        %1532 = vrot.lane.b32.xlu0 %v1524, 50
        %v1533 = vpop.permute.xlu0 %1532
        %1534 = vrot.lane.b32.xlu0 %v1525, 50
        %v1535 = vpop.permute.xlu0 %1534
        %1536 = vrot.lane.b32.xlu0 %v1526, 50
        %v1537 = vpop.permute.xlu0 %1536
        %1538 = vrot.lane.b32.xlu0 %v1527, 50
        %v1539 = vpop.permute.xlu0 %1538
        %v1540 = vrot.slane %v1533, 4
        %v1541 = vrot.slane %v1535, 4
        %v1542 = vrot.slane %v1537, 4
        %v1543 = vrot.slane %v1539, 4
        %v1544 = vsel %vm208, %v1540, %v1541
        %vm1545 = vcmask 408576
        %v1546 = vsel %vm1545, %v1533, %v1544
        %v1547 = vsel %vm208, %v1542, %v1543
        %v1548 = vsel %vm1545, %v1537, %v1547
        %1551 = vst [vmem:[#allocation2 + $0x340] sm:$0xff] %v1546
        %1552 = vst [vmem:[#allocation2 + $0x348] sm:$0xff] %v1548
        %v1553 = vld [vmem:[%s182 + $0x48] sm:$0xff]
        %v1554 = vld [vmem:[%s182 + $0x50] sm:$0xf]
        %v1555 = vld [vmem:[%s182 + $0x54] sm:$0xff]
        %v1556 = vld [vmem:[%s182 + $0x5c] sm:$0xf]
        %1561 = vrot.lane.b32.xlu0 %v1553, 50
        %v1562 = vpop.permute.xlu0 %1561
        %1563 = vrot.lane.b32.xlu0 %v1554, 50
        %v1564 = vpop.permute.xlu0 %1563
        %1565 = vrot.lane.b32.xlu0 %v1555, 50
        %v1566 = vpop.permute.xlu0 %1565
        %1567 = vrot.lane.b32.xlu0 %v1556, 50
        %v1568 = vpop.permute.xlu0 %1567
        %v1569 = vrot.slane %v1562, 4
        %v1570 = vrot.slane %v1564, 4
        %v1571 = vrot.slane %v1566, 4
        %v1572 = vrot.slane %v1568, 4
        %v1573 = vsel %vm208, %v1569, %v1570
        %v1574 = vsel %vm1545, %v1562, %v1573
        %v1575 = vsel %vm208, %v1571, %v1572
        %v1576 = vsel %vm1545, %v1566, %v1575
        %1579 = vst [vmem:[#allocation2 + $0x350] sm:$0xff] %v1574
        %1580 = vst [vmem:[#allocation2 + $0x358] sm:$0xff] %v1576
        %1581 = vst [vmem:[#allocation2 + $0x360] sm:$0xff] %v1574
        %1582 = vst [vmem:[#allocation2 + $0x368] sm:$0xff] %v1576
        %v1583 = vld [vmem:[%s182 + $0x18] sm:$0xff]
        %v1584 = vld [vmem:[%s182 + $0x20] sm:$0xf]
        %v1585 = vld [vmem:[%s182 + $0x24] sm:$0xff]
        %v1586 = vld [vmem:[%s182 + $0x2c] sm:$0xf]
        %1591 = vrot.lane.b32.xlu0 %v1583, 49
        %v1592 = vpop.permute.xlu0 %1591
        %1593 = vrot.lane.b32.xlu0 %v1584, 49
        %v1594 = vpop.permute.xlu0 %1593
        %1595 = vrot.lane.b32.xlu0 %v1585, 49
        %v1596 = vpop.permute.xlu0 %1595
        %1597 = vrot.lane.b32.xlu0 %v1586, 49
        %v1598 = vpop.permute.xlu0 %1597
        %v1599 = vrot.slane %v1592, 4
        %v1600 = vrot.slane %v1594, 4
        %v1601 = vrot.slane %v1596, 4
        %v1602 = vrot.slane %v1598, 4
        %v1603 = vsel %vm208, %v1599, %v1600
        %vm1604 = vcmask 400384
        %v1605 = vsel %vm1604, %v1592, %v1603
        %v1606 = vsel %vm208, %v1601, %v1602
        %v1607 = vsel %vm1604, %v1596, %v1606
        %1610 = vst [vmem:[#allocation2 + $0x370] sm:$0xff] %v1605
        %1611 = vst [vmem:[#allocation2 + $0x378] sm:$0xff] %v1607
        %v1612 = vld [vmem:[%s182 + $0x30] sm:$0xff]
        %v1613 = vld [vmem:[%s182 + $0x38] sm:$0xf]
        %v1614 = vld [vmem:[%s182 + $0x3c] sm:$0xff]
        %v1615 = vld [vmem:[%s182 + $0x44] sm:$0xf]
        %1620 = vrot.lane.b32.xlu0 %v1612, 49
        %v1621 = vpop.permute.xlu0 %1620
        %1622 = vrot.lane.b32.xlu0 %v1613, 49
        %v1623 = vpop.permute.xlu0 %1622
        %1624 = vrot.lane.b32.xlu0 %v1614, 49
        %v1625 = vpop.permute.xlu0 %1624
        %1626 = vrot.lane.b32.xlu0 %v1615, 49
        %v1627 = vpop.permute.xlu0 %1626
        %v1628 = vrot.slane %v1621, 4
        %v1629 = vrot.slane %v1623, 4
        %v1630 = vrot.slane %v1625, 4
        %v1631 = vrot.slane %v1627, 4
        %v1632 = vsel %vm208, %v1628, %v1629
        %v1633 = vsel %vm1604, %v1621, %v1632
        %v1634 = vsel %vm208, %v1630, %v1631
        %v1635 = vsel %vm1604, %v1625, %v1634
        %1638 = vst [vmem:[#allocation2 + $0x380] sm:$0xff] %v1633
        %1639 = vst [vmem:[#allocation2 + $0x388] sm:$0xff] %v1635
        %v1640 = vld [vmem:[%s182 + $0x18] sm:$0xff]
        %v1641 = vld [vmem:[%s182 + $0x20] sm:$0xf]
        %v1642 = vld [vmem:[%s182 + $0x24] sm:$0xff]
        %v1643 = vld [vmem:[%s182 + $0x2c] sm:$0xf]
        %1648 = vrot.lane.b32.xlu0 %v1640, 48
        %v1649 = vpop.permute.xlu0 %1648
        %1650 = vrot.lane.b32.xlu0 %v1641, 48
        %v1651 = vpop.permute.xlu0 %1650
        %1652 = vrot.lane.b32.xlu0 %v1642, 48
        %v1653 = vpop.permute.xlu0 %1652
        %1654 = vrot.lane.b32.xlu0 %v1643, 48
        %v1655 = vpop.permute.xlu0 %1654
        %v1656 = vrot.slane %v1649, 4
        %v1657 = vrot.slane %v1651, 4
        %v1658 = vrot.slane %v1653, 4
        %v1659 = vrot.slane %v1655, 4
        %v1660 = vsel %vm208, %v1656, %v1657
        %vm1661 = vcmask 392192
        %v1662 = vsel %vm1661, %v1649, %v1660
        %v1663 = vsel %vm208, %v1658, %v1659
        %v1664 = vsel %vm1661, %v1653, %v1663
        %1667 = vst [vmem:[#allocation2 + $0x390] sm:$0xff] %v1662
        %1668 = vst [vmem:[#allocation2 + $0x398] sm:$0xff] %v1664
        %v1669 = vld [vmem:[%s182 + $0x30] sm:$0xff]
        %v1670 = vld [vmem:[%s182 + $0x38] sm:$0xf]
        %v1671 = vld [vmem:[%s182 + $0x3c] sm:$0xff]
        %v1672 = vld [vmem:[%s182 + $0x44] sm:$0xf]
        %1677 = vrot.lane.b32.xlu0 %v1669, 48
        %v1678 = vpop.permute.xlu0 %1677
        %1679 = vrot.lane.b32.xlu0 %v1670, 48
        %v1680 = vpop.permute.xlu0 %1679
        %1681 = vrot.lane.b32.xlu0 %v1671, 48
        %v1682 = vpop.permute.xlu0 %1681
        %1683 = vrot.lane.b32.xlu0 %v1672, 48
        %v1684 = vpop.permute.xlu0 %1683
        %v1685 = vrot.slane %v1678, 4
        %v1686 = vrot.slane %v1680, 4
        %v1687 = vrot.slane %v1682, 4
        %v1688 = vrot.slane %v1684, 4
        %v1689 = vsel %vm208, %v1685, %v1686
        %v1690 = vsel %vm1661, %v1678, %v1689
        %v1691 = vsel %vm208, %v1687, %v1688
        %v1692 = vsel %vm1661, %v1682, %v1691
        %1695 = vst [vmem:[#allocation2 + $0x3a0] sm:$0xff] %v1690
        %1696 = vst [vmem:[#allocation2 + $0x3a8] sm:$0xff] %v1692
        %v1697 = vld [vmem:[%s182 + $0x48] sm:$0xff]
        %v1698 = vld [vmem:[%s182 + $0x50] sm:$0xf]
        %v1699 = vld [vmem:[%s182 + $0x54] sm:$0xff]
        %v1700 = vld [vmem:[%s182 + $0x5c] sm:$0xf]
        %1705 = vrot.lane.b32.xlu0 %v1697, 48
        %v1706 = vpop.permute.xlu0 %1705
        %1707 = vrot.lane.b32.xlu0 %v1698, 48
        %v1708 = vpop.permute.xlu0 %1707
        %1709 = vrot.lane.b32.xlu0 %v1699, 48
        %v1710 = vpop.permute.xlu0 %1709
        %1711 = vrot.lane.b32.xlu0 %v1700, 48
        %v1712 = vpop.permute.xlu0 %1711
        %v1713 = vrot.slane %v1706, 4
        %v1714 = vrot.slane %v1708, 4
        %v1715 = vrot.slane %v1710, 4
        %v1716 = vrot.slane %v1712, 4
        %v1717 = vsel %vm208, %v1713, %v1714
        %v1718 = vsel %vm1661, %v1706, %v1717
        %v1719 = vsel %vm208, %v1715, %v1716
        %v1720 = vsel %vm1661, %v1710, %v1719
        %1723 = vst [vmem:[#allocation2 + $0x3b0] sm:$0xff] %v1718
        %1724 = vst [vmem:[#allocation2 + $0x3b8] sm:$0xff] %v1720
        %v1725 = vld [vmem:[%s182] sm:$0xff]
        %v1726 = vld [vmem:[%s182 + $0x8] sm:$0xf]
        %v1727 = vld [vmem:[%s182 + $0xc] sm:$0xff]
        %v1728 = vld [vmem:[%s182 + $0x14] sm:$0xf]
        %1733 = vrot.lane.b32.xlu0 %v1725, 47
        %v1734 = vpop.permute.xlu0 %1733
        %1735 = vrot.lane.b32.xlu0 %v1726, 47
        %v1736 = vpop.permute.xlu0 %1735
        %1737 = vrot.lane.b32.xlu0 %v1727, 47
        %v1738 = vpop.permute.xlu0 %1737
        %1739 = vrot.lane.b32.xlu0 %v1728, 47
        %v1740 = vpop.permute.xlu0 %1739
        %v1741 = vrot.slane %v1734, 4
        %v1742 = vrot.slane %v1736, 4
        %v1743 = vrot.slane %v1738, 4
        %v1744 = vrot.slane %v1740, 4
        %v1745 = vsel %vm208, %v1741, %v1742
        %vm1746 = vcmask 384000
        %v1747 = vsel %vm1746, %v1734, %v1745
        %v1748 = vsel %vm208, %v1743, %v1744
        %v1749 = vsel %vm1746, %v1738, %v1748
        %1752 = vst [vmem:[#allocation2 + $0x3c0] sm:$0xff] %v1747
        %1753 = vst [vmem:[#allocation2 + $0x3c8] sm:$0xff] %v1749
        %1754 = vst [vmem:[#allocation2 + $0x3d0] sm:$0xff] %v1747
        %1755 = vst [vmem:[#allocation2 + $0x3d8] sm:$0xff] %v1749
        %1756 = vst [vmem:[#allocation2 + $0x3e0] sm:$0xff] %v1747
        %1757 = vst [vmem:[#allocation2 + $0x3e8] sm:$0xff] %v1749
        %v1758 = vld [vmem:[%s182 + $0x18] sm:$0xff]
        %v1759 = vld [vmem:[%s182 + $0x20] sm:$0xf]
        %v1760 = vld [vmem:[%s182 + $0x24] sm:$0xff]
        %v1761 = vld [vmem:[%s182 + $0x2c] sm:$0xf]
        %1766 = vrot.lane.b32.xlu0 %v1758, 47
        %v1767 = vpop.permute.xlu0 %1766
        %1768 = vrot.lane.b32.xlu0 %v1759, 47
        %v1769 = vpop.permute.xlu0 %1768
        %1770 = vrot.lane.b32.xlu0 %v1760, 47
        %v1771 = vpop.permute.xlu0 %1770
        %1772 = vrot.lane.b32.xlu0 %v1761, 47
        %v1773 = vpop.permute.xlu0 %1772
        %v1774 = vrot.slane %v1767, 4
        %v1775 = vrot.slane %v1769, 4
        %v1776 = vrot.slane %v1771, 4
        %v1777 = vrot.slane %v1773, 4
        %v1778 = vsel %vm208, %v1774, %v1775
        %v1779 = vsel %vm1746, %v1767, %v1778
        %v1780 = vsel %vm208, %v1776, %v1777
        %v1781 = vsel %vm1746, %v1771, %v1780
        %1784 = vst [vmem:[#allocation2 + $0x3f0] sm:$0xff] %v1779
        %1785 = vst [vmem:[#allocation2 + $0x3f8] sm:$0xff] %v1781
        %v1786 = vld [vmem:[%s182 + $0x30] sm:$0xff]
        %v1787 = vld [vmem:[%s182 + $0x38] sm:$0xf]
        %v1788 = vld [vmem:[%s182 + $0x3c] sm:$0xff]
        %v1789 = vld [vmem:[%s182 + $0x44] sm:$0xf]
        %1794 = vrot.lane.b32.xlu0 %v1786, 47
        %v1795 = vpop.permute.xlu0 %1794
        %1796 = vrot.lane.b32.xlu0 %v1787, 47
        %v1797 = vpop.permute.xlu0 %1796
        %1798 = vrot.lane.b32.xlu0 %v1788, 47
        %v1799 = vpop.permute.xlu0 %1798
        %1800 = vrot.lane.b32.xlu0 %v1789, 47
        %v1801 = vpop.permute.xlu0 %1800
        %v1802 = vrot.slane %v1795, 4
        %v1803 = vrot.slane %v1797, 4
        %v1804 = vrot.slane %v1799, 4
        %v1805 = vrot.slane %v1801, 4
        %v1806 = vsel %vm208, %v1802, %v1803
        %v1807 = vsel %vm1746, %v1795, %v1806
        %v1808 = vsel %vm208, %v1804, %v1805
        %v1809 = vsel %vm1746, %v1799, %v1808
        %1812 = vst [vmem:[#allocation2 + $0x400] sm:$0xff] %v1807
        %1813 = vst [vmem:[#allocation2 + $0x408] sm:$0xff] %v1809
        %v1814 = vld [vmem:[%s182 + $0x48] sm:$0xff]
        %v1815 = vld [vmem:[%s182 + $0x50] sm:$0xf]
        %v1816 = vld [vmem:[%s182 + $0x54] sm:$0xff]
        %v1817 = vld [vmem:[%s182 + $0x5c] sm:$0xf]
        %1822 = vrot.lane.b32.xlu0 %v1814, 47
        %v1823 = vpop.permute.xlu0 %1822
        %1824 = vrot.lane.b32.xlu0 %v1815, 47
        %v1825 = vpop.permute.xlu0 %1824
        %1826 = vrot.lane.b32.xlu0 %v1816, 47
        %v1827 = vpop.permute.xlu0 %1826
        %1828 = vrot.lane.b32.xlu0 %v1817, 47
        %v1829 = vpop.permute.xlu0 %1828
        %v1830 = vrot.slane %v1823, 4
        %v1831 = vrot.slane %v1825, 4
        %v1832 = vrot.slane %v1827, 4
        %v1833 = vrot.slane %v1829, 4
        %v1834 = vsel %vm208, %v1830, %v1831
        %v1835 = vsel %vm1746, %v1823, %v1834
        %v1836 = vsel %vm208, %v1832, %v1833
        %v1837 = vsel %vm1746, %v1827, %v1836
        %1840 = vst [vmem:[#allocation2 + $0x410] sm:$0xff] %v1835
        %1841 = vst [vmem:[#allocation2 + $0x418] sm:$0xff] %v1837
        %1842 = vst [vmem:[#allocation2 + $0x420] sm:$0xff] %v1835
        %1843 = vst [vmem:[#allocation2 + $0x428] sm:$0xff] %v1837
        %v1844 = vld [vmem:[%s182] sm:$0xff]
        %v1845 = vld [vmem:[%s182 + $0x8] sm:$0xf]
        %v1846 = vld [vmem:[%s182 + $0xc] sm:$0xff]
        %v1847 = vld [vmem:[%s182 + $0x14] sm:$0xf]
        %1852 = vrot.lane.b32.xlu0 %v1844, 46
        %v1853 = vpop.permute.xlu0 %1852
        %1854 = vrot.lane.b32.xlu0 %v1845, 46
        %v1855 = vpop.permute.xlu0 %1854
        %1856 = vrot.lane.b32.xlu0 %v1846, 46
        %v1857 = vpop.permute.xlu0 %1856
        %1858 = vrot.lane.b32.xlu0 %v1847, 46
        %v1859 = vpop.permute.xlu0 %1858
        %v1860 = vrot.slane %v1853, 4
        %v1861 = vrot.slane %v1855, 4
        %v1862 = vrot.slane %v1857, 4
        %v1863 = vrot.slane %v1859, 4
        %v1864 = vsel %vm208, %v1860, %v1861
        %vm1865 = vcmask 375808
        %v1866 = vsel %vm1865, %v1853, %v1864
        %v1867 = vsel %vm208, %v1862, %v1863
        %v1868 = vsel %vm1865, %v1857, %v1867
        %1871 = vst [vmem:[#allocation2 + $0x430] sm:$0xff] %v1866
        %1872 = vst [vmem:[#allocation2 + $0x438] sm:$0xff] %v1868
        %v1873 = vld [vmem:[%s182 + $0x18] sm:$0xff]
        %v1874 = vld [vmem:[%s182 + $0x20] sm:$0xf]
        %v1875 = vld [vmem:[%s182 + $0x24] sm:$0xff]
        %v1876 = vld [vmem:[%s182 + $0x2c] sm:$0xf]
        %1881 = vrot.lane.b32.xlu0 %v1873, 46
        %v1882 = vpop.permute.xlu0 %1881
        %1883 = vrot.lane.b32.xlu0 %v1874, 46
        %v1884 = vpop.permute.xlu0 %1883
        %1885 = vrot.lane.b32.xlu0 %v1875, 46
        %v1886 = vpop.permute.xlu0 %1885
        %1887 = vrot.lane.b32.xlu0 %v1876, 46
        %v1888 = vpop.permute.xlu0 %1887
        %v1889 = vrot.slane %v1882, 4
        %v1890 = vrot.slane %v1884, 4
        %v1891 = vrot.slane %v1886, 4
        %v1892 = vrot.slane %v1888, 4
        %v1893 = vsel %vm208, %v1889, %v1890
        %v1894 = vsel %vm1865, %v1882, %v1893
        %v1895 = vsel %vm208, %v1891, %v1892
        %v1896 = vsel %vm1865, %v1886, %v1895
        %1899 = vst [vmem:[#allocation2 + $0x440] sm:$0xff] %v1894
        %1900 = vst [vmem:[#allocation2 + $0x448] sm:$0xff] %v1896
        %v1901 = vld [vmem:[%s182 + $0x30] sm:$0xff]
        %v1902 = vld [vmem:[%s182 + $0x38] sm:$0xf]
        %v1903 = vld [vmem:[%s182 + $0x3c] sm:$0xff]
        %v1904 = vld [vmem:[%s182 + $0x44] sm:$0xf]
        %1909 = vrot.lane.b32.xlu0 %v1901, 46
        %v1910 = vpop.permute.xlu0 %1909
        %1911 = vrot.lane.b32.xlu0 %v1902, 46
        %v1912 = vpop.permute.xlu0 %1911
        %1913 = vrot.lane.b32.xlu0 %v1903, 46
        %v1914 = vpop.permute.xlu0 %1913
        %1915 = vrot.lane.b32.xlu0 %v1904, 46
        %v1916 = vpop.permute.xlu0 %1915
        %v1917 = vrot.slane %v1910, 4
        %v1918 = vrot.slane %v1912, 4
        %v1919 = vrot.slane %v1914, 4
        %v1920 = vrot.slane %v1916, 4
        %v1921 = vsel %vm208, %v1917, %v1918
        %v1922 = vsel %vm1865, %v1910, %v1921
        %v1923 = vsel %vm208, %v1919, %v1920
        %v1924 = vsel %vm1865, %v1914, %v1923
        %1927 = vst [vmem:[#allocation2 + $0x450] sm:$0xff] %v1922
        %1928 = vst [vmem:[#allocation2 + $0x458] sm:$0xff] %v1924
        %1929 = vst [vmem:[#allocation2 + $0x460] sm:$0xff] %v1922
        %1930 = vst [vmem:[#allocation2 + $0x468] sm:$0xff] %v1924
        %1931 = vst [vmem:[#allocation2 + $0x470] sm:$0xff] %v1922
        %1932 = vst [vmem:[#allocation2 + $0x478] sm:$0xff] %v1924
        %v1933 = vld [vmem:[%s182 + $0x48] sm:$0xff]
        %v1934 = vld [vmem:[%s182 + $0x50] sm:$0xf]
        %v1935 = vld [vmem:[%s182 + $0x54] sm:$0xff]
        %v1936 = vld [vmem:[%s182 + $0x5c] sm:$0xf]
        %1941 = vrot.lane.b32.xlu0 %v1933, 46
        %v1942 = vpop.permute.xlu0 %1941
        %1943 = vrot.lane.b32.xlu0 %v1934, 46
        %v1944 = vpop.permute.xlu0 %1943
        %1945 = vrot.lane.b32.xlu0 %v1935, 46
        %v1946 = vpop.permute.xlu0 %1945
        %1947 = vrot.lane.b32.xlu0 %v1936, 46
        %v1948 = vpop.permute.xlu0 %1947
        %v1949 = vrot.slane %v1942, 4
        %v1950 = vrot.slane %v1944, 4
        %v1951 = vrot.slane %v1946, 4
        %v1952 = vrot.slane %v1948, 4
        %v1953 = vsel %vm208, %v1949, %v1950
        %v1954 = vsel %vm1865, %v1942, %v1953
        %v1955 = vsel %vm208, %v1951, %v1952
        %v1956 = vsel %vm1865, %v1946, %v1955
        %1959 = vst [vmem:[#allocation2 + $0x480] sm:$0xff] %v1954
        %1960 = vst [vmem:[#allocation2 + $0x488] sm:$0xff] %v1956
        %1961 = vst [vmem:[#allocation2 + $0x490] sm:$0xff] %v1954
        %1962 = vst [vmem:[#allocation2 + $0x498] sm:$0xff] %v1956
        %v1963 = vld [vmem:[%s182] sm:$0xff]
        %v1964 = vld [vmem:[%s182 + $0x8] sm:$0xf]
        %v1965 = vld [vmem:[%s182 + $0xc] sm:$0xff]
        %v1966 = vld [vmem:[%s182 + $0x14] sm:$0xf]
        %1971 = vrot.lane.b32.xlu0 %v1963, 45
        %v1972 = vpop.permute.xlu0 %1971
        %1973 = vrot.lane.b32.xlu0 %v1964, 45
        %v1974 = vpop.permute.xlu0 %1973
        %1975 = vrot.lane.b32.xlu0 %v1965, 45
        %v1976 = vpop.permute.xlu0 %1975
        %1977 = vrot.lane.b32.xlu0 %v1966, 45
        %v1978 = vpop.permute.xlu0 %1977
        %v1979 = vrot.slane %v1972, 4
        %v1980 = vrot.slane %v1974, 4
        %v1981 = vrot.slane %v1976, 4
        %v1982 = vrot.slane %v1978, 4
        %v1983 = vsel %vm208, %v1979, %v1980
        %vm1984 = vcmask 367616
        %v1985 = vsel %vm1984, %v1972, %v1983
        %v1986 = vsel %vm208, %v1981, %v1982
        %v1987 = vsel %vm1984, %v1976, %v1986
        %1990 = vst [vmem:[#allocation2 + $0x4a0] sm:$0xff] %v1985
        %1991 = vst [vmem:[#allocation2 + $0x4a8] sm:$0xff] %v1987
        %v1992 = vld [vmem:[%s182 + $0x18] sm:$0xff]
        %v1993 = vld [vmem:[%s182 + $0x20] sm:$0xf]
        %v1994 = vld [vmem:[%s182 + $0x24] sm:$0xff]
        %v1995 = vld [vmem:[%s182 + $0x2c] sm:$0xf]
        %2000 = vrot.lane.b32.xlu0 %v1992, 45
        %v2001 = vpop.permute.xlu0 %2000
        %2002 = vrot.lane.b32.xlu0 %v1993, 45
        %v2003 = vpop.permute.xlu0 %2002
        %2004 = vrot.lane.b32.xlu0 %v1994, 45
        %v2005 = vpop.permute.xlu0 %2004
        %2006 = vrot.lane.b32.xlu0 %v1995, 45
        %v2007 = vpop.permute.xlu0 %2006
        %v2008 = vrot.slane %v2001, 4
        %v2009 = vrot.slane %v2003, 4
        %v2010 = vrot.slane %v2005, 4
        %v2011 = vrot.slane %v2007, 4
        %v2012 = vsel %vm208, %v2008, %v2009
        %v2013 = vsel %vm1984, %v2001, %v2012
        %v2014 = vsel %vm208, %v2010, %v2011
        %v2015 = vsel %vm1984, %v2005, %v2014
        %2018 = vst [vmem:[#allocation2 + $0x4b0] sm:$0xff] %v2013
        %2019 = vst [vmem:[#allocation2 + $0x4b8] sm:$0xff] %v2015
        %2020 = vst [vmem:[#allocation2 + $0x4c0] sm:$0xff] %v2013
        %2021 = vst [vmem:[#allocation2 + $0x4c8] sm:$0xff] %v2015
        %v2022 = vld [vmem:[%s182 + $0x30] sm:$0xff]
        %v2023 = vld [vmem:[%s182 + $0x38] sm:$0xf]
        %v2024 = vld [vmem:[%s182 + $0x3c] sm:$0xff]
        %v2025 = vld [vmem:[%s182 + $0x44] sm:$0xf]
        %2030 = vrot.lane.b32.xlu0 %v2022, 45
        %v2031 = vpop.permute.xlu0 %2030
        %2032 = vrot.lane.b32.xlu0 %v2023, 45
        %v2033 = vpop.permute.xlu0 %2032
        %2034 = vrot.lane.b32.xlu0 %v2024, 45
        %v2035 = vpop.permute.xlu0 %2034
        %2036 = vrot.lane.b32.xlu0 %v2025, 45
        %v2037 = vpop.permute.xlu0 %2036
        %v2038 = vrot.slane %v2031, 4
        %v2039 = vrot.slane %v2033, 4
        %v2040 = vrot.slane %v2035, 4
        %v2041 = vrot.slane %v2037, 4
        %v2042 = vsel %vm208, %v2038, %v2039
        %v2043 = vsel %vm1984, %v2031, %v2042
        %v2044 = vsel %vm208, %v2040, %v2041
        %v2045 = vsel %vm1984, %v2035, %v2044
        %2048 = vst [vmem:[#allocation2 + $0x4d0] sm:$0xff] %v2043
        %2049 = vst [vmem:[#allocation2 + $0x4d8] sm:$0xff] %v2045
        %v2050 = vld [vmem:[%s182 + $0x48] sm:$0xff]
        %v2051 = vld [vmem:[%s182 + $0x50] sm:$0xf]
        %v2052 = vld [vmem:[%s182 + $0x54] sm:$0xff]
        %v2053 = vld [vmem:[%s182 + $0x5c] sm:$0xf]
        %2058 = vrot.lane.b32.xlu0 %v2050, 45
        %v2059 = vpop.permute.xlu0 %2058
        %2060 = vrot.lane.b32.xlu0 %v2051, 45
        %v2061 = vpop.permute.xlu0 %2060
        %2062 = vrot.lane.b32.xlu0 %v2052, 45
        %v2063 = vpop.permute.xlu0 %2062
        %2064 = vrot.lane.b32.xlu0 %v2053, 45
        %v2065 = vpop.permute.xlu0 %2064
        %v2066 = vrot.slane %v2059, 4
        %v2067 = vrot.slane %v2061, 4
        %v2068 = vrot.slane %v2063, 4
        %v2069 = vrot.slane %v2065, 4
        %v2070 = vsel %vm208, %v2066, %v2067
        %v2071 = vsel %vm1984, %v2059, %v2070
        %v2072 = vsel %vm208, %v2068, %v2069
        %v2073 = vsel %vm1984, %v2063, %v2072
        %2076 = vst [vmem:[#allocation2 + $0x4e0] sm:$0xff] %v2071
        %2077 = vst [vmem:[#allocation2 + $0x4e8] sm:$0xff] %v2073
        %v2078 = vld [vmem:[%s182] sm:$0xff]
        %v2079 = vld [vmem:[%s182 + $0x8] sm:$0xf]
        %v2080 = vld [vmem:[%s182 + $0xc] sm:$0xff]
        %v2081 = vld [vmem:[%s182 + $0x14] sm:$0xf]
        %2086 = vrot.lane.b32.xlu0 %v2078, 44
        %v2087 = vpop.permute.xlu0 %2086
        %2088 = vrot.lane.b32.xlu0 %v2079, 44
        %v2089 = vpop.permute.xlu0 %2088
        %2090 = vrot.lane.b32.xlu0 %v2080, 44
        %v2091 = vpop.permute.xlu0 %2090
        %2092 = vrot.lane.b32.xlu0 %v2081, 44
        %v2093 = vpop.permute.xlu0 %2092
        %v2094 = vrot.slane %v2087, 4
        %v2095 = vrot.slane %v2089, 4
        %v2096 = vrot.slane %v2091, 4
        %v2097 = vrot.slane %v2093, 4
        %v2098 = vsel %vm208, %v2094, %v2095
        %vm2099 = vcmask 359424
        %v2100 = vsel %vm2099, %v2087, %v2098
        %v2101 = vsel %vm208, %v2096, %v2097
        %v2102 = vsel %vm2099, %v2091, %v2101
        %2105 = vst [vmem:[#allocation2 + $0x4f0] sm:$0xff] %v2100
        %2106 = vst [vmem:[#allocation2 + $0x4f8] sm:$0xff] %v2102
        %2107 = vst [vmem:[#allocation2 + $0x500] sm:$0xff] %v2100
        %2108 = vst [vmem:[#allocation2 + $0x508] sm:$0xff] %v2102
        %v2109 = vld [vmem:[%s182 + $0x18] sm:$0xff]
        %v2110 = vld [vmem:[%s182 + $0x20] sm:$0xf]
        %v2111 = vld [vmem:[%s182 + $0x24] sm:$0xff]
        %v2112 = vld [vmem:[%s182 + $0x2c] sm:$0xf]
        %2117 = vrot.lane.b32.xlu0 %v2109, 44
        %v2118 = vpop.permute.xlu0 %2117
        %2119 = vrot.lane.b32.xlu0 %v2110, 44
        %v2120 = vpop.permute.xlu0 %2119
        %2121 = vrot.lane.b32.xlu0 %v2111, 44
        %v2122 = vpop.permute.xlu0 %2121
        %2123 = vrot.lane.b32.xlu0 %v2112, 44
        %v2124 = vpop.permute.xlu0 %2123
        %v2125 = vrot.slane %v2118, 4
        %v2126 = vrot.slane %v2120, 4
        %v2127 = vrot.slane %v2122, 4
        %v2128 = vrot.slane %v2124, 4
        %v2129 = vsel %vm208, %v2125, %v2126
        %v2130 = vsel %vm2099, %v2118, %v2129
        %v2131 = vsel %vm208, %v2127, %v2128
        %v2132 = vsel %vm2099, %v2122, %v2131
        %2135 = vst [vmem:[#allocation2 + $0x510] sm:$0xff] %v2130
        %2136 = vst [vmem:[#allocation2 + $0x518] sm:$0xff] %v2132
        %v2137 = vld [vmem:[%s182 + $0x30] sm:$0xff]
        %v2138 = vld [vmem:[%s182 + $0x38] sm:$0xf]
        %v2139 = vld [vmem:[%s182 + $0x3c] sm:$0xff]
        %v2140 = vld [vmem:[%s182 + $0x44] sm:$0xf]
        %2145 = vrot.lane.b32.xlu0 %v2137, 44
        %v2146 = vpop.permute.xlu0 %2145
        %2147 = vrot.lane.b32.xlu0 %v2138, 44
        %v2148 = vpop.permute.xlu0 %2147
        %2149 = vrot.lane.b32.xlu0 %v2139, 44
        %v2150 = vpop.permute.xlu0 %2149
        %2151 = vrot.lane.b32.xlu0 %v2140, 44
        %v2152 = vpop.permute.xlu0 %2151
        %v2153 = vrot.slane %v2146, 4
        %v2154 = vrot.slane %v2148, 4
        %v2155 = vrot.slane %v2150, 4
        %v2156 = vrot.slane %v2152, 4
        %v2157 = vsel %vm208, %v2153, %v2154
        %v2158 = vsel %vm2099, %v2146, %v2157
        %v2159 = vsel %vm208, %v2155, %v2156
        %v2160 = vsel %vm2099, %v2150, %v2159
        %2163 = vst [vmem:[#allocation2 + $0x520] sm:$0xff] %v2158
        %2164 = vst [vmem:[#allocation2 + $0x528] sm:$0xff] %v2160
        %2165 = vst [vmem:[#allocation2 + $0x530] sm:$0xff] %v2158
        %2166 = vst [vmem:[#allocation2 + $0x538] sm:$0xff] %v2160
        %v2167 = vld [vmem:[%s182 + $0x48] sm:$0xff]
        %v2168 = vld [vmem:[%s182 + $0x50] sm:$0xf]
        %v2169 = vld [vmem:[%s182 + $0x54] sm:$0xff]
        %v2170 = vld [vmem:[%s182 + $0x5c] sm:$0xf]
        %2175 = vrot.lane.b32.xlu0 %v2167, 44
        %v2176 = vpop.permute.xlu0 %2175
        %2177 = vrot.lane.b32.xlu0 %v2168, 44
        %v2178 = vpop.permute.xlu0 %2177
        %2179 = vrot.lane.b32.xlu0 %v2169, 44
        %v2180 = vpop.permute.xlu0 %2179
        %2181 = vrot.lane.b32.xlu0 %v2170, 44
        %v2182 = vpop.permute.xlu0 %2181
        %v2183 = vrot.slane %v2176, 4
        %v2184 = vrot.slane %v2178, 4
        %v2185 = vrot.slane %v2180, 4
        %v2186 = vrot.slane %v2182, 4
        %v2187 = vsel %vm208, %v2183, %v2184
        %v2188 = vsel %vm2099, %v2176, %v2187
        %v2189 = vsel %vm208, %v2185, %v2186
        %v2190 = vsel %vm2099, %v2180, %v2189
        %2193 = vst [vmem:[#allocation2 + $0x540] sm:$0xff] %v2188
        %2194 = vst [vmem:[#allocation2 + $0x548] sm:$0xff] %v2190
        %2195 = vst [vmem:[#allocation2 + $0x550] sm:$0xff] %v2188
        %2196 = vst [vmem:[#allocation2 + $0x558] sm:$0xff] %v2190
        %v2197 = vld [vmem:[%s182] sm:$0xff]
        %v2198 = vld [vmem:[%s182 + $0x8] sm:$0xf]
        %v2199 = vld [vmem:[%s182 + $0xc] sm:$0xff]
        %v2200 = vld [vmem:[%s182 + $0x14] sm:$0xf]
        %2205 = vrot.lane.b32.xlu0 %v2197, 43
        %v2206 = vpop.permute.xlu0 %2205
        %2207 = vrot.lane.b32.xlu0 %v2198, 43
        %v2208 = vpop.permute.xlu0 %2207
        %2209 = vrot.lane.b32.xlu0 %v2199, 43
        %v2210 = vpop.permute.xlu0 %2209
        %2211 = vrot.lane.b32.xlu0 %v2200, 43
        %v2212 = vpop.permute.xlu0 %2211
        %v2213 = vrot.slane %v2206, 4
        %v2214 = vrot.slane %v2208, 4
        %v2215 = vrot.slane %v2210, 4
        %v2216 = vrot.slane %v2212, 4
        %v2217 = vsel %vm208, %v2213, %v2214
        %vm2218 = vcmask 351232
        %v2219 = vsel %vm2218, %v2206, %v2217
        %v2220 = vsel %vm208, %v2215, %v2216
        %v2221 = vsel %vm2218, %v2210, %v2220
        %2224 = vst [vmem:[#allocation2 + $0x560] sm:$0xff] %v2219
        %2225 = vst [vmem:[#allocation2 + $0x568] sm:$0xff] %v2221
        %v2226 = vld [vmem:[%s182 + $0x18] sm:$0xff]
        %v2227 = vld [vmem:[%s182 + $0x20] sm:$0xf]
        %v2228 = vld [vmem:[%s182 + $0x24] sm:$0xff]
        %v2229 = vld [vmem:[%s182 + $0x2c] sm:$0xf]
        %2234 = vrot.lane.b32.xlu0 %v2226, 43
        %v2235 = vpop.permute.xlu0 %2234
        %2236 = vrot.lane.b32.xlu0 %v2227, 43
        %v2237 = vpop.permute.xlu0 %2236
        %2238 = vrot.lane.b32.xlu0 %v2228, 43
        %v2239 = vpop.permute.xlu0 %2238
        %2240 = vrot.lane.b32.xlu0 %v2229, 43
        %v2241 = vpop.permute.xlu0 %2240
        %v2242 = vrot.slane %v2235, 4
        %v2243 = vrot.slane %v2237, 4
        %v2244 = vrot.slane %v2239, 4
        %v2245 = vrot.slane %v2241, 4
        %v2246 = vsel %vm208, %v2242, %v2243
        %v2247 = vsel %vm2218, %v2235, %v2246
        %v2248 = vsel %vm208, %v2244, %v2245
        %v2249 = vsel %vm2218, %v2239, %v2248
        %2252 = vst [vmem:[#allocation2 + $0x570] sm:$0xff] %v2247
        %2253 = vst [vmem:[#allocation2 + $0x578] sm:$0xff] %v2249
        %v2254 = vld [vmem:[%s182 + $0x30] sm:$0xff]
        %v2255 = vld [vmem:[%s182 + $0x38] sm:$0xf]
        %v2256 = vld [vmem:[%s182 + $0x3c] sm:$0xff]
        %v2257 = vld [vmem:[%s182 + $0x44] sm:$0xf]
        %2262 = vrot.lane.b32.xlu0 %v2254, 43
        %v2263 = vpop.permute.xlu0 %2262
        %2264 = vrot.lane.b32.xlu0 %v2255, 43
        %v2265 = vpop.permute.xlu0 %2264
        %2266 = vrot.lane.b32.xlu0 %v2256, 43
        %v2267 = vpop.permute.xlu0 %2266
        %2268 = vrot.lane.b32.xlu0 %v2257, 43
        %v2269 = vpop.permute.xlu0 %2268
        %v2270 = vrot.slane %v2263, 4
        %v2271 = vrot.slane %v2265, 4
        %v2272 = vrot.slane %v2267, 4
        %v2273 = vrot.slane %v2269, 4
        %v2274 = vsel %vm208, %v2270, %v2271
        %v2275 = vsel %vm2218, %v2263, %v2274
        %v2276 = vsel %vm208, %v2272, %v2273
        %v2277 = vsel %vm2218, %v2267, %v2276
        %2280 = vst [vmem:[#allocation2 + $0x580] sm:$0xff] %v2275
        %2281 = vst [vmem:[#allocation2 + $0x588] sm:$0xff] %v2277
        %2282 = vst [vmem:[#allocation2 + $0x590] sm:$0xff] %v2275
        %2283 = vst [vmem:[#allocation2 + $0x598] sm:$0xff] %v2277
        %v2284 = vld [vmem:[%s182 + $0x48] sm:$0xff]
        %v2285 = vld [vmem:[%s182 + $0x50] sm:$0xf]
        %v2286 = vld [vmem:[%s182 + $0x54] sm:$0xff]
        %v2287 = vld [vmem:[%s182 + $0x5c] sm:$0xf]
        %2292 = vrot.lane.b32.xlu0 %v2284, 43
        %v2293 = vpop.permute.xlu0 %2292
        %2294 = vrot.lane.b32.xlu0 %v2285, 43
        %v2295 = vpop.permute.xlu0 %2294
        %2296 = vrot.lane.b32.xlu0 %v2286, 43
        %v2297 = vpop.permute.xlu0 %2296
        %2298 = vrot.lane.b32.xlu0 %v2287, 43
        %v2299 = vpop.permute.xlu0 %2298
        %v2300 = vrot.slane %v2293, 4
        %v2301 = vrot.slane %v2295, 4
        %v2302 = vrot.slane %v2297, 4
        %v2303 = vrot.slane %v2299, 4
        %v2304 = vsel %vm208, %v2300, %v2301
        %v2305 = vsel %vm2218, %v2293, %v2304
        %v2306 = vsel %vm208, %v2302, %v2303
        %v2307 = vsel %vm2218, %v2297, %v2306
        %2310 = vst [vmem:[#allocation2 + $0x5a0] sm:$0xff] %v2305
        %2311 = vst [vmem:[#allocation2 + $0x5a8] sm:$0xff] %v2307
        %v2312 = vld [vmem:[%s182] sm:$0xff]
        %v2313 = vld [vmem:[%s182 + $0x8] sm:$0xf]
        %v2314 = vld [vmem:[%s182 + $0xc] sm:$0xff]
        %v2315 = vld [vmem:[%s182 + $0x14] sm:$0xf]
        %2320 = vrot.lane.b32.xlu0 %v2312, 42
        %v2321 = vpop.permute.xlu0 %2320
        %2322 = vrot.lane.b32.xlu0 %v2313, 42
        %v2323 = vpop.permute.xlu0 %2322
        %2324 = vrot.lane.b32.xlu0 %v2314, 42
        %v2325 = vpop.permute.xlu0 %2324
        %2326 = vrot.lane.b32.xlu0 %v2315, 42
        %v2327 = vpop.permute.xlu0 %2326
        %v2328 = vrot.slane %v2321, 4
        %v2329 = vrot.slane %v2323, 4
        %v2330 = vrot.slane %v2325, 4
        %v2331 = vrot.slane %v2327, 4
        %v2332 = vsel %vm208, %v2328, %v2329
        %vm2333 = vcmask 343040
        %v2334 = vsel %vm2333, %v2321, %v2332
        %v2335 = vsel %vm208, %v2330, %v2331
        %v2336 = vsel %vm2333, %v2325, %v2335
        %2339 = vst [vmem:[#allocation2 + $0x5b0] sm:$0xff] %v2334
        %2340 = vst [vmem:[#allocation2 + $0x5b8] sm:$0xff] %v2336
        %v2341 = vld [vmem:[%s182 + $0x18] sm:$0xff]
        %v2342 = vld [vmem:[%s182 + $0x20] sm:$0xf]
        %v2343 = vld [vmem:[%s182 + $0x24] sm:$0xff]
        %v2344 = vld [vmem:[%s182 + $0x2c] sm:$0xf]
        %2349 = vrot.lane.b32.xlu0 %v2341, 42
        %v2350 = vpop.permute.xlu0 %2349
        %2351 = vrot.lane.b32.xlu0 %v2342, 42
        %v2352 = vpop.permute.xlu0 %2351
        %2353 = vrot.lane.b32.xlu0 %v2343, 42
        %v2354 = vpop.permute.xlu0 %2353
        %2355 = vrot.lane.b32.xlu0 %v2344, 42
        %v2356 = vpop.permute.xlu0 %2355
        %v2357 = vrot.slane %v2350, 4
        %v2358 = vrot.slane %v2352, 4
        %v2359 = vrot.slane %v2354, 4
        %v2360 = vrot.slane %v2356, 4
        %v2361 = vsel %vm208, %v2357, %v2358
        %v2362 = vsel %vm2333, %v2350, %v2361
        %v2363 = vsel %vm208, %v2359, %v2360
        %v2364 = vsel %vm2333, %v2354, %v2363
        %2367 = vst [vmem:[#allocation2 + $0x5c0] sm:$0xff] %v2362
        %2368 = vst [vmem:[#allocation2 + $0x5c8] sm:$0xff] %v2364
        %2369 = vst [vmem:[#allocation2 + $0x5d0] sm:$0xff] %v2362
        %2370 = vst [vmem:[#allocation2 + $0x5d8] sm:$0xff] %v2364
        %2371 = vst [vmem:[#allocation2 + $0x5e0] sm:$0xff] %v2362
        %2372 = vst [vmem:[#allocation2 + $0x5e8] sm:$0xff] %v2364
        %2373 = vst [vmem:[#allocation2 + $0x5f0] sm:$0xff] %v2362
        %2374 = vst [vmem:[#allocation2 + $0x5f8] sm:$0xff] %v2364
        %v2375 = vld [vmem:[%s1] sm:$0xff]
        %v2376 = vld [vmem:[%s1 + $0x8] sm:$0xff]
        %v2377 = vld [vmem:[%s1 + $0x10] sm:$0xff]
        %v2378 = vld [vmem:[%s1 + $0x18] sm:$0xff]
        %v2379 = vld [vmem:[%s1 + $0x20] sm:$0xff]
        %v2380 = vld [vmem:[%s1 + $0x28] sm:$0xff]
        %v2381 = vld [vmem:[%s1 + $0x30] sm:$0xff]
        %v2382 = vld [vmem:[%s1 + $0x38] sm:$0xff]
        %v2383 = vld [vmem:[%s1 + $0x40] sm:$0xff]
        %v2384 = vld [vmem:[%s1 + $0x48] sm:$0xff]
        %v2385 = vld [vmem:[%s1 + $0x50] sm:$0xff]
        %v2386 = vld [vmem:[%s1 + $0x58] sm:$0xff]
        %v2387 = vld [vmem:[%s1 + $0x60] sm:$0xff]
        %v2388 = vld [vmem:[%s1 + $0x68] sm:$0xff]
        %v2389 = vld [vmem:[%s1 + $0x70] sm:$0xff]
        %v2390 = vld [vmem:[%s1 + $0x78] sm:$0xff]
        %v2391 = vld [vmem:[%s1 + $0x80] sm:$0xff]
        %v2392 = vld [vmem:[%s1 + $0x88] sm:$0xff]
        %v2393 = vld [vmem:[%s1 + $0x90] sm:$0xff]
        %v2394 = vld [vmem:[%s1 + $0x98] sm:$0xff]
        %v2395 = vld [vmem:[%s1 + $0xa0] sm:$0xff]
        %v2396 = vld [vmem:[%s1 + $0xa8] sm:$0xff]
        %v2397 = vld [vmem:[%s1 + $0xb0] sm:$0xff]
        %v2398 = vld [vmem:[%s1 + $0xb8] sm:$0xff]
        %v2399 = vld [vmem:[#allocation2] sm:$0xff]
        %v2400 = vld [vmem:[#allocation2 + $0x8] sm:$0xff]
        %v2401 = vld [vmem:[#allocation2 + $0x10] sm:$0xff]
        %v2402 = vld [vmem:[#allocation2 + $0x18] sm:$0xff]
        %v2403 = vld [vmem:[#allocation2 + $0x20] sm:$0xff]
        %v2404 = vld [vmem:[#allocation2 + $0x28] sm:$0xff]
        %v2405 = vld [vmem:[#allocation2 + $0x30] sm:$0xff]
        %v2406 = vld [vmem:[#allocation2 + $0x38] sm:$0xff]
        %v2407 = vld [vmem:[#allocation2 + $0x40] sm:$0xff]
        %v2408 = vld [vmem:[#allocation2 + $0x48] sm:$0xff]
        %v2409 = vld [vmem:[#allocation2 + $0x50] sm:$0xff]
        %v2410 = vld [vmem:[#allocation2 + $0x58] sm:$0xff]
        %v2411 = vld [vmem:[#allocation2 + $0x60] sm:$0xff]
        %v2412 = vld [vmem:[#allocation2 + $0x68] sm:$0xff]
        %v2413 = vld [vmem:[#allocation2 + $0x70] sm:$0xff]
        %v2414 = vld [vmem:[#allocation2 + $0x78] sm:$0xff]
        %v2415 = vld [vmem:[#allocation2 + $0x80] sm:$0xff]
        %v2416 = vld [vmem:[#allocation2 + $0x88] sm:$0xff]
        %v2417 = vld [vmem:[#allocation2 + $0x90] sm:$0xff]
        %v2418 = vld [vmem:[#allocation2 + $0x98] sm:$0xff]
        %v2419 = vld [vmem:[#allocation2 + $0xa0] sm:$0xff]
        %v2420 = vld [vmem:[#allocation2 + $0xa8] sm:$0xff]
        %v2421 = vld [vmem:[#allocation2 + $0xb0] sm:$0xff]
        %v2422 = vld [vmem:[#allocation2 + $0xb8] sm:$0xff]
        %v2423 = vld [vmem:[#allocation2 + $0xc0] sm:$0xff]
        %v2424 = vld [vmem:[#allocation2 + $0xc8] sm:$0xff]
        %v2425 = vld [vmem:[#allocation2 + $0xd0] sm:$0xff]
        %v2426 = vld [vmem:[#allocation2 + $0xd8] sm:$0xff]
        %v2427 = vld [vmem:[#allocation2 + $0xe0] sm:$0xff]
        %v2428 = vld [vmem:[#allocation2 + $0xe8] sm:$0xff]
        %v2429 = vld [vmem:[#allocation2 + $0xf0] sm:$0xff]
        %v2430 = vld [vmem:[#allocation2 + $0xf8] sm:$0xff]
        %v2431 = vld [vmem:[#allocation2 + $0x100] sm:$0xff]
        %v2432 = vld [vmem:[#allocation2 + $0x108] sm:$0xff]
        %v2433 = vld [vmem:[#allocation2 + $0x110] sm:$0xff]
        %v2434 = vld [vmem:[#allocation2 + $0x118] sm:$0xff]
        %v2435 = vld [vmem:[#allocation2 + $0x120] sm:$0xff]
        %v2436 = vld [vmem:[#allocation2 + $0x128] sm:$0xff]
        %v2437 = vld [vmem:[#allocation2 + $0x130] sm:$0xff]
        %v2438 = vld [vmem:[#allocation2 + $0x138] sm:$0xff]
        %v2439 = vld [vmem:[#allocation2 + $0x140] sm:$0xff]
        %v2440 = vld [vmem:[#allocation2 + $0x148] sm:$0xff]
        %v2441 = vld [vmem:[#allocation2 + $0x150] sm:$0xff]
        %v2442 = vld [vmem:[#allocation2 + $0x158] sm:$0xff]
        %v2443 = vld [vmem:[#allocation2 + $0x160] sm:$0xff]
        %v2444 = vld [vmem:[#allocation2 + $0x168] sm:$0xff]
        %v2445 = vld [vmem:[#allocation2 + $0x170] sm:$0xff]
        %v2446 = vld [vmem:[#allocation2 + $0x178] sm:$0xff]
        %v2447 = vld [vmem:[#allocation2 + $0x180] sm:$0xff]
        %v2448 = vld [vmem:[#allocation2 + $0x188] sm:$0xff]
        %v2449 = vld [vmem:[#allocation2 + $0x190] sm:$0xff]
        %v2450 = vld [vmem:[#allocation2 + $0x198] sm:$0xff]
        %v2451 = vld [vmem:[#allocation2 + $0x1a0] sm:$0xff]
        %v2452 = vld [vmem:[#allocation2 + $0x1a8] sm:$0xff]
        %v2453 = vld [vmem:[#allocation2 + $0x1b0] sm:$0xff]
        %v2454 = vld [vmem:[#allocation2 + $0x1b8] sm:$0xff]
        %v2455 = vld [vmem:[#allocation2 + $0x1c0] sm:$0xff]
        %v2456 = vld [vmem:[#allocation2 + $0x1c8] sm:$0xff]
        %v2457 = vld [vmem:[#allocation2 + $0x1d0] sm:$0xff]
        %v2458 = vld [vmem:[#allocation2 + $0x1d8] sm:$0xff]
        %v2459 = vld [vmem:[#allocation2 + $0x1e0] sm:$0xff]
        %v2460 = vld [vmem:[#allocation2 + $0x1e8] sm:$0xff]
        %v2461 = vld [vmem:[#allocation2 + $0x1f0] sm:$0xff]
        %v2462 = vld [vmem:[#allocation2 + $0x1f8] sm:$0xff]
        %v2463 = vld [vmem:[#allocation2 + $0x200] sm:$0xff]
        %v2464 = vld [vmem:[#allocation2 + $0x208] sm:$0xff]
        %v2465 = vld [vmem:[#allocation2 + $0x210] sm:$0xff]
        %v2466 = vld [vmem:[#allocation2 + $0x218] sm:$0xff]
        %v2467 = vld [vmem:[#allocation2 + $0x220] sm:$0xff]
        %v2468 = vld [vmem:[#allocation2 + $0x228] sm:$0xff]
        %v2469 = vld [vmem:[#allocation2 + $0x230] sm:$0xff]
        %v2470 = vld [vmem:[#allocation2 + $0x238] sm:$0xff]
        %v2471 = vld [vmem:[#allocation2 + $0x240] sm:$0xff]
        %v2472 = vld [vmem:[#allocation2 + $0x248] sm:$0xff]
        %v2473 = vld [vmem:[#allocation2 + $0x250] sm:$0xff]
        %v2474 = vld [vmem:[#allocation2 + $0x258] sm:$0xff]
        %v2475 = vld [vmem:[#allocation2 + $0x260] sm:$0xff]
        %v2476 = vld [vmem:[#allocation2 + $0x268] sm:$0xff]
        %v2477 = vld [vmem:[#allocation2 + $0x270] sm:$0xff]
        %v2478 = vld [vmem:[#allocation2 + $0x278] sm:$0xff]
        %v2479 = vld [vmem:[#allocation2 + $0x280] sm:$0xff]
        %v2480 = vld [vmem:[#allocation2 + $0x288] sm:$0xff]
        %v2481 = vld [vmem:[#allocation2 + $0x290] sm:$0xff]
        %v2482 = vld [vmem:[#allocation2 + $0x298] sm:$0xff]
        %v2483 = vld [vmem:[#allocation2 + $0x2a0] sm:$0xff]
        %v2484 = vld [vmem:[#allocation2 + $0x2a8] sm:$0xff]
        %v2485 = vld [vmem:[#allocation2 + $0x2b0] sm:$0xff]
        %v2486 = vld [vmem:[#allocation2 + $0x2b8] sm:$0xff]
        %v2487 = vld [vmem:[#allocation2 + $0x2c0] sm:$0xff]
        %v2488 = vld [vmem:[#allocation2 + $0x2c8] sm:$0xff]
        %v2489 = vld [vmem:[#allocation2 + $0x2d0] sm:$0xff]
        %v2490 = vld [vmem:[#allocation2 + $0x2d8] sm:$0xff]
        %v2491 = vld [vmem:[#allocation2 + $0x2e0] sm:$0xff]
        %v2492 = vld [vmem:[#allocation2 + $0x2e8] sm:$0xff]
        %v2493 = vld [vmem:[#allocation2 + $0x2f0] sm:$0xff]
        %v2494 = vld [vmem:[#allocation2 + $0x2f8] sm:$0xff]
        %v2495 = vld [vmem:[#allocation2 + $0x300] sm:$0xff]
        %v2496 = vld [vmem:[#allocation2 + $0x308] sm:$0xff]
        %v2497 = vld [vmem:[#allocation2 + $0x310] sm:$0xff]
        %v2498 = vld [vmem:[#allocation2 + $0x318] sm:$0xff]
        %v2499 = vld [vmem:[#allocation2 + $0x320] sm:$0xff]
        %v2500 = vld [vmem:[#allocation2 + $0x328] sm:$0xff]
        %v2501 = vld [vmem:[#allocation2 + $0x330] sm:$0xff]
        %v2502 = vld [vmem:[#allocation2 + $0x338] sm:$0xff]
        %v2503 = vld [vmem:[#allocation2 + $0x340] sm:$0xff]
        %v2504 = vld [vmem:[#allocation2 + $0x348] sm:$0xff]
        %v2505 = vld [vmem:[#allocation2 + $0x350] sm:$0xff]
        %v2506 = vld [vmem:[#allocation2 + $0x358] sm:$0xff]
        %v2507 = vld [vmem:[#allocation2 + $0x360] sm:$0xff]
        %v2508 = vld [vmem:[#allocation2 + $0x368] sm:$0xff]
        %v2509 = vld [vmem:[#allocation2 + $0x370] sm:$0xff]
        %v2510 = vld [vmem:[#allocation2 + $0x378] sm:$0xff]
        %v2511 = vld [vmem:[#allocation2 + $0x380] sm:$0xff]
        %v2512 = vld [vmem:[#allocation2 + $0x388] sm:$0xff]
        %v2513 = vld [vmem:[#allocation2 + $0x390] sm:$0xff]
        %v2514 = vld [vmem:[#allocation2 + $0x398] sm:$0xff]
        %v2515 = vld [vmem:[#allocation2 + $0x3a0] sm:$0xff]
        %v2516 = vld [vmem:[#allocation2 + $0x3a8] sm:$0xff]
        %v2517 = vld [vmem:[#allocation2 + $0x3b0] sm:$0xff]
        %v2518 = vld [vmem:[#allocation2 + $0x3b8] sm:$0xff]
        %v2519 = vld [vmem:[#allocation2 + $0x3c0] sm:$0xff]
        %v2520 = vld [vmem:[#allocation2 + $0x3c8] sm:$0xff]
        %v2521 = vld [vmem:[#allocation2 + $0x3d0] sm:$0xff]
        %v2522 = vld [vmem:[#allocation2 + $0x3d8] sm:$0xff]
        %v2523 = vld [vmem:[#allocation2 + $0x3e0] sm:$0xff]
        %v2524 = vld [vmem:[#allocation2 + $0x3e8] sm:$0xff]
        %v2525 = vld [vmem:[#allocation2 + $0x3f0] sm:$0xff]
        %v2526 = vld [vmem:[#allocation2 + $0x3f8] sm:$0xff]
        %v2527 = vld [vmem:[#allocation2 + $0x400] sm:$0xff]
        %v2528 = vld [vmem:[#allocation2 + $0x408] sm:$0xff]
        %v2529 = vld [vmem:[#allocation2 + $0x410] sm:$0xff]
        %v2530 = vld [vmem:[#allocation2 + $0x418] sm:$0xff]
        %v2531 = vld [vmem:[#allocation2 + $0x420] sm:$0xff]
        %v2532 = vld [vmem:[#allocation2 + $0x428] sm:$0xff]
        %v2533 = vld [vmem:[#allocation2 + $0x430] sm:$0xff]
        %v2534 = vld [vmem:[#allocation2 + $0x438] sm:$0xff]
        %v2535 = vld [vmem:[#allocation2 + $0x440] sm:$0xff]
        %v2536 = vld [vmem:[#allocation2 + $0x448] sm:$0xff]
        %v2537 = vld [vmem:[#allocation2 + $0x450] sm:$0xff]
        %v2538 = vld [vmem:[#allocation2 + $0x458] sm:$0xff]
        %v2539 = vld [vmem:[#allocation2 + $0x460] sm:$0xff]
        %v2540 = vld [vmem:[#allocation2 + $0x468] sm:$0xff]
        %v2541 = vld [vmem:[#allocation2 + $0x470] sm:$0xff]
        %v2542 = vld [vmem:[#allocation2 + $0x478] sm:$0xff]
        %v2543 = vld [vmem:[#allocation2 + $0x480] sm:$0xff]
        %v2544 = vld [vmem:[#allocation2 + $0x488] sm:$0xff]
        %v2545 = vld [vmem:[#allocation2 + $0x490] sm:$0xff]
        %v2546 = vld [vmem:[#allocation2 + $0x498] sm:$0xff]
        %v2547 = vld [vmem:[#allocation2 + $0x4a0] sm:$0xff]
        %v2548 = vld [vmem:[#allocation2 + $0x4a8] sm:$0xff]
        %v2549 = vld [vmem:[#allocation2 + $0x4b0] sm:$0xff]
        %v2550 = vld [vmem:[#allocation2 + $0x4b8] sm:$0xff]
        %v2551 = vld [vmem:[#allocation2 + $0x4c0] sm:$0xff]
        %v2552 = vld [vmem:[#allocation2 + $0x4c8] sm:$0xff]
        %v2553 = vld [vmem:[#allocation2 + $0x4d0] sm:$0xff]
        %v2554 = vld [vmem:[#allocation2 + $0x4d8] sm:$0xff]
        %v2555 = vld [vmem:[#allocation2 + $0x4e0] sm:$0xff]
        %v2556 = vld [vmem:[#allocation2 + $0x4e8] sm:$0xff]
        %v2557 = vld [vmem:[#allocation2 + $0x4f0] sm:$0xff]
        %v2558 = vld [vmem:[#allocation2 + $0x4f8] sm:$0xff]
        %v2559 = vld [vmem:[#allocation2 + $0x500] sm:$0xff]
        %v2560 = vld [vmem:[#allocation2 + $0x508] sm:$0xff]
        %v2561 = vld [vmem:[#allocation2 + $0x510] sm:$0xff]
        %v2562 = vld [vmem:[#allocation2 + $0x518] sm:$0xff]
        %v2563 = vld [vmem:[#allocation2 + $0x520] sm:$0xff]
        %v2564 = vld [vmem:[#allocation2 + $0x528] sm:$0xff]
        %v2565 = vld [vmem:[#allocation2 + $0x530] sm:$0xff]
        %v2566 = vld [vmem:[#allocation2 + $0x538] sm:$0xff]
        %v2567 = vld [vmem:[#allocation2 + $0x540] sm:$0xff]
        %v2568 = vld [vmem:[#allocation2 + $0x548] sm:$0xff]
        %v2569 = vld [vmem:[#allocation2 + $0x550] sm:$0xff]
        %v2570 = vld [vmem:[#allocation2 + $0x558] sm:$0xff]
        %v2571 = vld [vmem:[#allocation2 + $0x560] sm:$0xff]
        %v2572 = vld [vmem:[#allocation2 + $0x568] sm:$0xff]
        %v2573 = vld [vmem:[#allocation2 + $0x570] sm:$0xff]
        %v2574 = vld [vmem:[#allocation2 + $0x578] sm:$0xff]
        %v2575 = vld [vmem:[#allocation2 + $0x580] sm:$0xff]
        %v2576 = vld [vmem:[#allocation2 + $0x588] sm:$0xff]
        %v2577 = vld [vmem:[#allocation2 + $0x590] sm:$0xff]
        %v2578 = vld [vmem:[#allocation2 + $0x598] sm:$0xff]
        %v2579 = vld [vmem:[#allocation2 + $0x5a0] sm:$0xff]
        %v2580 = vld [vmem:[#allocation2 + $0x5a8] sm:$0xff]
        %v2581 = vld [vmem:[#allocation2 + $0x5b0] sm:$0xff]
        %v2582 = vld [vmem:[#allocation2 + $0x5b8] sm:$0xff]
        %v2583 = vld [vmem:[#allocation2 + $0x5c0] sm:$0xff]
        %v2584 = vld [vmem:[#allocation2 + $0x5c8] sm:$0xff]
        %v2585 = vld [vmem:[#allocation2 + $0x5d0] sm:$0xff]
        %v2586 = vld [vmem:[#allocation2 + $0x5d8] sm:$0xff]
        %v2587 = vld [vmem:[#allocation2 + $0x5e0] sm:$0xff]
        %v2588 = vld [vmem:[#allocation2 + $0x5e8] sm:$0xff]
        %v2589 = vld [vmem:[#allocation2 + $0x5f0] sm:$0xff]
        %v2590 = vld [vmem:[#allocation2 + $0x5f8] sm:$0xff]
        %v2591 = vld [vmem:[%s2] sm:$0xff]
        %v2592 = vld [vmem:[%s2 + $0x8] sm:$0xff]
        %v2593 = vld [vmem:[%s2 + $0x10] sm:$0xff]
        %v2594 = vld [vmem:[%s2 + $0x18] sm:$0xff]
        %2596 = vset.pattern.permute.xlu0 0
        %2597 = vperm.xlu0 %2596, %v2591
        %v2598 = vpop.permute.xlu0 %2597
        %2601 = vset.pattern.permute.xlu0 0
        %2602 = vperm.xlu0 %2601, %v2592
        %v2603 = vpop.permute.xlu0 %2602
        %2606 = vset.pattern.permute.xlu0 0
        %2607 = vperm.xlu0 %2606, %v2593
        %v2608 = vpop.permute.xlu0 %2607
        %2611 = vset.pattern.permute.xlu0 0
        %2612 = vperm.xlu0 %2611, %v2594
        %v2613 = vpop.permute.xlu0 %2612
        %v2639 = vunpack.c.l.b16 %v2375
        %v2640 = vunpack.c.h.b16 %v2375
        %v2641 = vunpack.c.l.b16 %v2376
        %v2642 = vunpack.c.h.b16 %v2376
        %v2643 = vunpack.c.l.b16 %v2377
        %v2644 = vunpack.c.h.b16 %v2377
        %v2645 = vunpack.c.l.b16 %v2378
        %v2646 = vunpack.c.h.b16 %v2378
        %v2647 = vunpack.c.l.b16 %v2379
        %v2648 = vunpack.c.h.b16 %v2379
        %v2649 = vunpack.c.l.b16 %v2380
        %v2650 = vunpack.c.h.b16 %v2380
        %v2651 = vunpack.c.l.b16 %v2381
        %v2652 = vunpack.c.h.b16 %v2381
        %v2653 = vunpack.c.l.b16 %v2382
        %v2654 = vunpack.c.h.b16 %v2382
        %v2655 = vunpack.c.l.b16 %v2383
        %v2656 = vunpack.c.h.b16 %v2383
        %v2657 = vunpack.c.l.b16 %v2384
        %v2658 = vunpack.c.h.b16 %v2384
        %v2659 = vunpack.c.l.b16 %v2385
        %v2660 = vunpack.c.h.b16 %v2385
        %v2661 = vunpack.c.l.b16 %v2386
        %v2662 = vunpack.c.h.b16 %v2386
        %v2663 = vunpack.c.l.b16 %v2387
        %v2664 = vunpack.c.h.b16 %v2387
        %v2665 = vunpack.c.l.b16 %v2388
        %v2666 = vunpack.c.h.b16 %v2388
        %v2667 = vunpack.c.l.b16 %v2389
        %v2668 = vunpack.c.h.b16 %v2389
        %v2669 = vunpack.c.l.b16 %v2390
        %v2670 = vunpack.c.h.b16 %v2390
        %v2671 = vunpack.c.l.b16 %v2391
        %v2672 = vunpack.c.h.b16 %v2391
        %v2673 = vunpack.c.l.b16 %v2392
        %v2674 = vunpack.c.h.b16 %v2392
        %v2675 = vunpack.c.l.b16 %v2393
        %v2676 = vunpack.c.h.b16 %v2393
        %v2677 = vunpack.c.l.b16 %v2394
        %v2678 = vunpack.c.h.b16 %v2394
        %v2679 = vunpack.c.l.b16 %v2395
        %v2680 = vunpack.c.h.b16 %v2395
        %v2681 = vunpack.c.l.b16 %v2396
        %v2682 = vunpack.c.h.b16 %v2396
        %v2683 = vunpack.c.l.b16 %v2397
        %v2684 = vunpack.c.h.b16 %v2397
        %v2685 = vunpack.c.l.b16 %v2398
        %v2686 = vunpack.c.h.b16 %v2398
        %v2687 = vpack.c.b16 %v2651, %v2639
        %v2688 = vpack.c.b16 %v2652, %v2640
        %v2689 = vpack.c.b16 %v2653, %v2641
        %v2690 = vpack.c.b16 %v2654, %v2642
        %v2691 = vpack.c.b16 %v2655, %v2643
        %v2692 = vpack.c.b16 %v2656, %v2644
        %v2693 = vpack.c.b16 %v2657, %v2645
        %v2694 = vpack.c.b16 %v2658, %v2646
        %v2695 = vpack.c.b16 %v2659, %v2647
        %v2696 = vpack.c.b16 %v2660, %v2648
        %v2697 = vpack.c.b16 %v2661, %v2649
        %v2698 = vpack.c.b16 %v2662, %v2650
        %v2699 = vpack.c.b16 %v2675, %v2663
        %v2700 = vpack.c.b16 %v2676, %v2664
        %v2701 = vpack.c.b16 %v2677, %v2665
        %v2702 = vpack.c.b16 %v2678, %v2666
        %v2703 = vpack.c.b16 %v2679, %v2667
        %v2704 = vpack.c.b16 %v2680, %v2668
        %v2705 = vpack.c.b16 %v2681, %v2669
        %v2706 = vpack.c.b16 %v2682, %v2670
        %v2707 = vpack.c.b16 %v2683, %v2671
        %v2708 = vpack.c.b16 %v2684, %v2672
        %v2709 = vpack.c.b16 %v2685, %v2673
        %v2710 = vpack.c.b16 %v2686, %v2674
        %v2927 = vunpack.c.l.b16 %v2399
        %v2928 = vunpack.c.h.b16 %v2399
        %v2929 = vunpack.c.l.b16 %v2400
        %v2930 = vunpack.c.h.b16 %v2400
        %v2931 = vunpack.c.l.b16 %v2401
        %v2932 = vunpack.c.h.b16 %v2401
        %v2933 = vunpack.c.l.b16 %v2402
        %v2934 = vunpack.c.h.b16 %v2402
        %v2935 = vunpack.c.l.b16 %v2403
        %v2936 = vunpack.c.h.b16 %v2403
        %v2937 = vunpack.c.l.b16 %v2404
        %v2938 = vunpack.c.h.b16 %v2404
        %v2939 = vunpack.c.l.b16 %v2405
        %v2940 = vunpack.c.h.b16 %v2405
        %v2941 = vunpack.c.l.b16 %v2406
        %v2942 = vunpack.c.h.b16 %v2406
        %v2943 = vunpack.c.l.b16 %v2407
        %v2944 = vunpack.c.h.b16 %v2407
        %v2945 = vunpack.c.l.b16 %v2408
        %v2946 = vunpack.c.h.b16 %v2408
        %v2947 = vunpack.c.l.b16 %v2409
        %v2948 = vunpack.c.h.b16 %v2409
        %v2949 = vunpack.c.l.b16 %v2410
        %v2950 = vunpack.c.h.b16 %v2410
        %v2951 = vunpack.c.l.b16 %v2411
        %v2952 = vunpack.c.h.b16 %v2411
        %v2953 = vunpack.c.l.b16 %v2412
        %v2954 = vunpack.c.h.b16 %v2412
        %v2955 = vunpack.c.l.b16 %v2413
        %v2956 = vunpack.c.h.b16 %v2413
        %v2957 = vunpack.c.l.b16 %v2414
        %v2958 = vunpack.c.h.b16 %v2414
        %v2959 = vunpack.c.l.b16 %v2415
        %v2960 = vunpack.c.h.b16 %v2415
        %v2961 = vunpack.c.l.b16 %v2416
        %v2962 = vunpack.c.h.b16 %v2416
        %v2963 = vunpack.c.l.b16 %v2417
        %v2964 = vunpack.c.h.b16 %v2417
        %v2965 = vunpack.c.l.b16 %v2418
        %v2966 = vunpack.c.h.b16 %v2418
        %v2967 = vunpack.c.l.b16 %v2419
        %v2968 = vunpack.c.h.b16 %v2419
        %v2969 = vunpack.c.l.b16 %v2420
        %v2970 = vunpack.c.h.b16 %v2420
        %v2971 = vunpack.c.l.b16 %v2421
        %v2972 = vunpack.c.h.b16 %v2421
        %v2973 = vunpack.c.l.b16 %v2422
        %v2974 = vunpack.c.h.b16 %v2422
        %v2975 = vunpack.c.l.b16 %v2423
        %v2976 = vunpack.c.h.b16 %v2423
        %v2977 = vunpack.c.l.b16 %v2424
        %v2978 = vunpack.c.h.b16 %v2424
        %v2979 = vunpack.c.l.b16 %v2425
        %v2980 = vunpack.c.h.b16 %v2425
        %v2981 = vunpack.c.l.b16 %v2426
        %v2982 = vunpack.c.h.b16 %v2426
        %v2983 = vunpack.c.l.b16 %v2427
        %v2984 = vunpack.c.h.b16 %v2427
        %v2985 = vunpack.c.l.b16 %v2428
        %v2986 = vunpack.c.h.b16 %v2428
        %v2987 = vunpack.c.l.b16 %v2429
        %v2988 = vunpack.c.h.b16 %v2429
        %v2989 = vunpack.c.l.b16 %v2430
        %v2990 = vunpack.c.h.b16 %v2430
        %v2991 = vunpack.c.l.b16 %v2431
        %v2992 = vunpack.c.h.b16 %v2431
        %v2993 = vunpack.c.l.b16 %v2432
        %v2994 = vunpack.c.h.b16 %v2432
        %v2995 = vunpack.c.l.b16 %v2433
        %v2996 = vunpack.c.h.b16 %v2433
        %v2997 = vunpack.c.l.b16 %v2434
        %v2998 = vunpack.c.h.b16 %v2434
        %v2999 = vunpack.c.l.b16 %v2435
        %v3000 = vunpack.c.h.b16 %v2435
        %v3001 = vunpack.c.l.b16 %v2436
        %v3002 = vunpack.c.h.b16 %v2436
        %v3003 = vunpack.c.l.b16 %v2437
        %v3004 = vunpack.c.h.b16 %v2437
        %v3005 = vunpack.c.l.b16 %v2438
        %v3006 = vunpack.c.h.b16 %v2438
        %v3007 = vunpack.c.l.b16 %v2439
        %v3008 = vunpack.c.h.b16 %v2439
        %v3009 = vunpack.c.l.b16 %v2440
        %v3010 = vunpack.c.h.b16 %v2440
        %v3011 = vunpack.c.l.b16 %v2441
        %v3012 = vunpack.c.h.b16 %v2441
        %v3013 = vunpack.c.l.b16 %v2442
        %v3014 = vunpack.c.h.b16 %v2442
        %v3015 = vunpack.c.l.b16 %v2443
        %v3016 = vunpack.c.h.b16 %v2443
        %v3017 = vunpack.c.l.b16 %v2444
        %v3018 = vunpack.c.h.b16 %v2444
        %v3019 = vunpack.c.l.b16 %v2445
        %v3020 = vunpack.c.h.b16 %v2445
        %v3021 = vunpack.c.l.b16 %v2446
        %v3022 = vunpack.c.h.b16 %v2446
        %v3023 = vunpack.c.l.b16 %v2447
        %v3024 = vunpack.c.h.b16 %v2447
        %v3025 = vunpack.c.l.b16 %v2448
        %v3026 = vunpack.c.h.b16 %v2448
        %v3027 = vunpack.c.l.b16 %v2449
        %v3028 = vunpack.c.h.b16 %v2449
        %v3029 = vunpack.c.l.b16 %v2450
        %v3030 = vunpack.c.h.b16 %v2450
        %v3031 = vunpack.c.l.b16 %v2451
        %v3032 = vunpack.c.h.b16 %v2451
        %v3033 = vunpack.c.l.b16 %v2452
        %v3034 = vunpack.c.h.b16 %v2452
        %v3035 = vunpack.c.l.b16 %v2453
        %v3036 = vunpack.c.h.b16 %v2453
        %v3037 = vunpack.c.l.b16 %v2454
        %v3038 = vunpack.c.h.b16 %v2454
        %v3039 = vunpack.c.l.b16 %v2455
        %v3040 = vunpack.c.h.b16 %v2455
        %v3041 = vunpack.c.l.b16 %v2456
        %v3042 = vunpack.c.h.b16 %v2456
        %v3043 = vunpack.c.l.b16 %v2457
        %v3044 = vunpack.c.h.b16 %v2457
        %v3045 = vunpack.c.l.b16 %v2458
        %v3046 = vunpack.c.h.b16 %v2458
        %v3047 = vunpack.c.l.b16 %v2459
        %v3048 = vunpack.c.h.b16 %v2459
        %v3049 = vunpack.c.l.b16 %v2460
        %v3050 = vunpack.c.h.b16 %v2460
        %v3051 = vunpack.c.l.b16 %v2461
        %v3052 = vunpack.c.h.b16 %v2461
        %v3053 = vunpack.c.l.b16 %v2462
        %v3054 = vunpack.c.h.b16 %v2462
        %v3055 = vunpack.c.l.b16 %v2463
        %v3056 = vunpack.c.h.b16 %v2463
        %v3057 = vunpack.c.l.b16 %v2464
        %v3058 = vunpack.c.h.b16 %v2464
        %v3059 = vunpack.c.l.b16 %v2465
        %v3060 = vunpack.c.h.b16 %v2465
        %v3061 = vunpack.c.l.b16 %v2466
        %v3062 = vunpack.c.h.b16 %v2466
        %v3063 = vunpack.c.l.b16 %v2467
        %v3064 = vunpack.c.h.b16 %v2467
        %v3065 = vunpack.c.l.b16 %v2468
        %v3066 = vunpack.c.h.b16 %v2468
        %v3067 = vunpack.c.l.b16 %v2469
        %v3068 = vunpack.c.h.b16 %v2469
        %v3069 = vunpack.c.l.b16 %v2470
        %v3070 = vunpack.c.h.b16 %v2470
        %v3071 = vunpack.c.l.b16 %v2471
        %v3072 = vunpack.c.h.b16 %v2471
        %v3073 = vunpack.c.l.b16 %v2472
        %v3074 = vunpack.c.h.b16 %v2472
        %v3075 = vunpack.c.l.b16 %v2473
        %v3076 = vunpack.c.h.b16 %v2473
        %v3077 = vunpack.c.l.b16 %v2474
        %v3078 = vunpack.c.h.b16 %v2474
        %v3079 = vunpack.c.l.b16 %v2475
        %v3080 = vunpack.c.h.b16 %v2475
        %v3081 = vunpack.c.l.b16 %v2476
        %v3082 = vunpack.c.h.b16 %v2476
        %v3083 = vunpack.c.l.b16 %v2477
        %v3084 = vunpack.c.h.b16 %v2477
        %v3085 = vunpack.c.l.b16 %v2478
        %v3086 = vunpack.c.h.b16 %v2478
        %v3087 = vunpack.c.l.b16 %v2479
        %v3088 = vunpack.c.h.b16 %v2479
        %v3089 = vunpack.c.l.b16 %v2480
        %v3090 = vunpack.c.h.b16 %v2480
        %v3091 = vunpack.c.l.b16 %v2481
        %v3092 = vunpack.c.h.b16 %v2481
        %v3093 = vunpack.c.l.b16 %v2482
        %v3094 = vunpack.c.h.b16 %v2482
        %v3095 = vunpack.c.l.b16 %v2483
        %v3096 = vunpack.c.h.b16 %v2483
        %v3097 = vunpack.c.l.b16 %v2484
        %v3098 = vunpack.c.h.b16 %v2484
        %v3099 = vunpack.c.l.b16 %v2485
        %v3100 = vunpack.c.h.b16 %v2485
        %v3101 = vunpack.c.l.b16 %v2486
        %v3102 = vunpack.c.h.b16 %v2486
        %v3103 = vunpack.c.l.b16 %v2487
        %v3104 = vunpack.c.h.b16 %v2487
        %v3105 = vunpack.c.l.b16 %v2488
        %v3106 = vunpack.c.h.b16 %v2488
        %v3107 = vunpack.c.l.b16 %v2489
        %v3108 = vunpack.c.h.b16 %v2489
        %v3109 = vunpack.c.l.b16 %v2490
        %v3110 = vunpack.c.h.b16 %v2490
        %v3111 = vunpack.c.l.b16 %v2491
        %v3112 = vunpack.c.h.b16 %v2491
        %v3113 = vunpack.c.l.b16 %v2492
        %v3114 = vunpack.c.h.b16 %v2492
        %v3115 = vunpack.c.l.b16 %v2493
        %v3116 = vunpack.c.h.b16 %v2493
        %v3117 = vunpack.c.l.b16 %v2494
        %v3118 = vunpack.c.h.b16 %v2494
        %v3119 = vunpack.c.l.b16 %v2495
        %v3120 = vunpack.c.h.b16 %v2495
        %v3121 = vunpack.c.l.b16 %v2496
        %v3122 = vunpack.c.h.b16 %v2496
        %v3123 = vunpack.c.l.b16 %v2497
        %v3124 = vunpack.c.h.b16 %v2497
        %v3125 = vunpack.c.l.b16 %v2498
        %v3126 = vunpack.c.h.b16 %v2498
        %v3127 = vunpack.c.l.b16 %v2499
        %v3128 = vunpack.c.h.b16 %v2499
        %v3129 = vunpack.c.l.b16 %v2500
        %v3130 = vunpack.c.h.b16 %v2500
        %v3131 = vunpack.c.l.b16 %v2501
        %v3132 = vunpack.c.h.b16 %v2501
        %v3133 = vunpack.c.l.b16 %v2502
        %v3134 = vunpack.c.h.b16 %v2502
        %v3135 = vunpack.c.l.b16 %v2503
        %v3136 = vunpack.c.h.b16 %v2503
        %v3137 = vunpack.c.l.b16 %v2504
        %v3138 = vunpack.c.h.b16 %v2504
        %v3139 = vunpack.c.l.b16 %v2505
        %v3140 = vunpack.c.h.b16 %v2505
        %v3141 = vunpack.c.l.b16 %v2506
        %v3142 = vunpack.c.h.b16 %v2506
        %v3143 = vunpack.c.l.b16 %v2507
        %v3144 = vunpack.c.h.b16 %v2507
        %v3145 = vunpack.c.l.b16 %v2508
        %v3146 = vunpack.c.h.b16 %v2508
        %v3147 = vunpack.c.l.b16 %v2509
        %v3148 = vunpack.c.h.b16 %v2509
        %v3149 = vunpack.c.l.b16 %v2510
        %v3150 = vunpack.c.h.b16 %v2510
        %v3151 = vunpack.c.l.b16 %v2511
        %v3152 = vunpack.c.h.b16 %v2511
        %v3153 = vunpack.c.l.b16 %v2512
        %v3154 = vunpack.c.h.b16 %v2512
        %v3155 = vunpack.c.l.b16 %v2513
        %v3156 = vunpack.c.h.b16 %v2513
        %v3157 = vunpack.c.l.b16 %v2514
        %v3158 = vunpack.c.h.b16 %v2514
        %v3159 = vunpack.c.l.b16 %v2515
        %v3160 = vunpack.c.h.b16 %v2515
        %v3161 = vunpack.c.l.b16 %v2516
        %v3162 = vunpack.c.h.b16 %v2516
        %v3163 = vunpack.c.l.b16 %v2517
        %v3164 = vunpack.c.h.b16 %v2517
        %v3165 = vunpack.c.l.b16 %v2518
        %v3166 = vunpack.c.h.b16 %v2518
        %v3167 = vunpack.c.l.b16 %v2519
        %v3168 = vunpack.c.h.b16 %v2519
        %v3169 = vunpack.c.l.b16 %v2520
        %v3170 = vunpack.c.h.b16 %v2520
        %v3171 = vunpack.c.l.b16 %v2521
        %v3172 = vunpack.c.h.b16 %v2521
        %v3173 = vunpack.c.l.b16 %v2522
        %v3174 = vunpack.c.h.b16 %v2522
        %v3175 = vunpack.c.l.b16 %v2523
        %v3176 = vunpack.c.h.b16 %v2523
        %v3177 = vunpack.c.l.b16 %v2524
        %v3178 = vunpack.c.h.b16 %v2524
        %v3179 = vunpack.c.l.b16 %v2525
        %v3180 = vunpack.c.h.b16 %v2525
        %v3181 = vunpack.c.l.b16 %v2526
        %v3182 = vunpack.c.h.b16 %v2526
        %v3183 = vunpack.c.l.b16 %v2527
        %v3184 = vunpack.c.h.b16 %v2527
        %v3185 = vunpack.c.l.b16 %v2528
        %v3186 = vunpack.c.h.b16 %v2528
        %v3187 = vunpack.c.l.b16 %v2529
        %v3188 = vunpack.c.h.b16 %v2529
        %v3189 = vunpack.c.l.b16 %v2530
        %v3190 = vunpack.c.h.b16 %v2530
        %v3191 = vunpack.c.l.b16 %v2531
        %v3192 = vunpack.c.h.b16 %v2531
        %v3193 = vunpack.c.l.b16 %v2532
        %v3194 = vunpack.c.h.b16 %v2532
        %v3195 = vunpack.c.l.b16 %v2533
        %v3196 = vunpack.c.h.b16 %v2533
        %v3197 = vunpack.c.l.b16 %v2534
        %v3198 = vunpack.c.h.b16 %v2534
        %v3199 = vunpack.c.l.b16 %v2535
        %v3200 = vunpack.c.h.b16 %v2535
        %v3201 = vunpack.c.l.b16 %v2536
        %v3202 = vunpack.c.h.b16 %v2536
        %v3203 = vunpack.c.l.b16 %v2537
        %v3204 = vunpack.c.h.b16 %v2537
        %v3205 = vunpack.c.l.b16 %v2538
        %v3206 = vunpack.c.h.b16 %v2538
        %v3207 = vunpack.c.l.b16 %v2539
        %v3208 = vunpack.c.h.b16 %v2539
        %v3209 = vunpack.c.l.b16 %v2540
        %v3210 = vunpack.c.h.b16 %v2540
        %v3211 = vunpack.c.l.b16 %v2541
        %v3212 = vunpack.c.h.b16 %v2541
        %v3213 = vunpack.c.l.b16 %v2542
        %v3214 = vunpack.c.h.b16 %v2542
        %v3215 = vunpack.c.l.b16 %v2543
        %v3216 = vunpack.c.h.b16 %v2543
        %v3217 = vunpack.c.l.b16 %v2544
        %v3218 = vunpack.c.h.b16 %v2544
        %v3219 = vunpack.c.l.b16 %v2545
        %v3220 = vunpack.c.h.b16 %v2545
        %v3221 = vunpack.c.l.b16 %v2546
        %v3222 = vunpack.c.h.b16 %v2546
        %v3223 = vunpack.c.l.b16 %v2547
        %v3224 = vunpack.c.h.b16 %v2547
        %v3225 = vunpack.c.l.b16 %v2548
        %v3226 = vunpack.c.h.b16 %v2548
        %v3227 = vunpack.c.l.b16 %v2549
        %v3228 = vunpack.c.h.b16 %v2549
        %v3229 = vunpack.c.l.b16 %v2550
        %v3230 = vunpack.c.h.b16 %v2550
        %v3231 = vunpack.c.l.b16 %v2551
        %v3232 = vunpack.c.h.b16 %v2551
        %v3233 = vunpack.c.l.b16 %v2552
        %v3234 = vunpack.c.h.b16 %v2552
        %v3235 = vunpack.c.l.b16 %v2553
        %v3236 = vunpack.c.h.b16 %v2553
        %v3237 = vunpack.c.l.b16 %v2554
        %v3238 = vunpack.c.h.b16 %v2554
        %v3239 = vunpack.c.l.b16 %v2555
        %v3240 = vunpack.c.h.b16 %v2555
        %v3241 = vunpack.c.l.b16 %v2556
        %v3242 = vunpack.c.h.b16 %v2556
        %v3243 = vunpack.c.l.b16 %v2557
        %v3244 = vunpack.c.h.b16 %v2557
        %v3245 = vunpack.c.l.b16 %v2558
        %v3246 = vunpack.c.h.b16 %v2558
        %v3247 = vunpack.c.l.b16 %v2559
        %v3248 = vunpack.c.h.b16 %v2559
        %v3249 = vunpack.c.l.b16 %v2560
        %v3250 = vunpack.c.h.b16 %v2560
        %v3251 = vunpack.c.l.b16 %v2561
        %v3252 = vunpack.c.h.b16 %v2561
        %v3253 = vunpack.c.l.b16 %v2562
        %v3254 = vunpack.c.h.b16 %v2562
        %v3255 = vunpack.c.l.b16 %v2563
        %v3256 = vunpack.c.h.b16 %v2563
        %v3257 = vunpack.c.l.b16 %v2564
        %v3258 = vunpack.c.h.b16 %v2564
        %v3259 = vunpack.c.l.b16 %v2565
        %v3260 = vunpack.c.h.b16 %v2565
        %v3261 = vunpack.c.l.b16 %v2566
        %v3262 = vunpack.c.h.b16 %v2566
        %v3263 = vunpack.c.l.b16 %v2567
        %v3264 = vunpack.c.h.b16 %v2567
        %v3265 = vunpack.c.l.b16 %v2568
        %v3266 = vunpack.c.h.b16 %v2568
        %v3267 = vunpack.c.l.b16 %v2569
        %v3268 = vunpack.c.h.b16 %v2569
        %v3269 = vunpack.c.l.b16 %v2570
        %v3270 = vunpack.c.h.b16 %v2570
        %v3271 = vunpack.c.l.b16 %v2571
        %v3272 = vunpack.c.h.b16 %v2571
        %v3273 = vunpack.c.l.b16 %v2572
        %v3274 = vunpack.c.h.b16 %v2572
        %v3275 = vunpack.c.l.b16 %v2573
        %v3276 = vunpack.c.h.b16 %v2573
        %v3277 = vunpack.c.l.b16 %v2574
        %v3278 = vunpack.c.h.b16 %v2574
        %v3279 = vunpack.c.l.b16 %v2575
        %v3280 = vunpack.c.h.b16 %v2575
        %v3281 = vunpack.c.l.b16 %v2576
        %v3282 = vunpack.c.h.b16 %v2576
        %v3283 = vunpack.c.l.b16 %v2577
        %v3284 = vunpack.c.h.b16 %v2577
        %v3285 = vunpack.c.l.b16 %v2578
        %v3286 = vunpack.c.h.b16 %v2578
        %v3287 = vunpack.c.l.b16 %v2579
        %v3288 = vunpack.c.h.b16 %v2579
        %v3289 = vunpack.c.l.b16 %v2580
        %v3290 = vunpack.c.h.b16 %v2580
        %v3291 = vunpack.c.l.b16 %v2581
        %v3292 = vunpack.c.h.b16 %v2581
        %v3293 = vunpack.c.l.b16 %v2582
        %v3294 = vunpack.c.h.b16 %v2582
        %v3295 = vunpack.c.l.b16 %v2583
        %v3296 = vunpack.c.h.b16 %v2583
        %v3297 = vunpack.c.l.b16 %v2584
        %v3298 = vunpack.c.h.b16 %v2584
        %v3299 = vunpack.c.l.b16 %v2585
        %v3300 = vunpack.c.h.b16 %v2585
        %v3301 = vunpack.c.l.b16 %v2586
        %v3302 = vunpack.c.h.b16 %v2586
        %v3303 = vunpack.c.l.b16 %v2587
        %v3304 = vunpack.c.h.b16 %v2587
        %v3305 = vunpack.c.l.b16 %v2588
        %v3306 = vunpack.c.h.b16 %v2588
        %v3307 = vunpack.c.l.b16 %v2589
        %v3308 = vunpack.c.h.b16 %v2589
        %v3309 = vunpack.c.l.b16 %v2590
        %v3310 = vunpack.c.h.b16 %v2590
        %v3311 = vpack.c.b16 %v2929, %v2927
        %v3312 = vpack.c.b16 %v2930, %v2928
        %v3313 = vpack.c.b16 %v2933, %v2931
        %v3314 = vpack.c.b16 %v2934, %v2932
        %v3315 = vpack.c.b16 %v2937, %v2935
        %v3316 = vpack.c.b16 %v2938, %v2936
        %v3317 = vpack.c.b16 %v2941, %v2939
        %v3318 = vpack.c.b16 %v2942, %v2940
        %v3319 = vpack.c.b16 %v2945, %v2943
        %v3320 = vpack.c.b16 %v2946, %v2944
        %v3321 = vpack.c.b16 %v2949, %v2947
        %v3322 = vpack.c.b16 %v2950, %v2948
        %v3323 = vpack.c.b16 %v2953, %v2951
        %v3324 = vpack.c.b16 %v2954, %v2952
        %v3325 = vpack.c.b16 %v2957, %v2955
        %v3326 = vpack.c.b16 %v2958, %v2956
        %v3327 = vpack.c.b16 %v2961, %v2959
        %v3328 = vpack.c.b16 %v2962, %v2960
        %v3329 = vpack.c.b16 %v2965, %v2963
        %v3330 = vpack.c.b16 %v2966, %v2964
        %v3331 = vpack.c.b16 %v2969, %v2967
        %v3332 = vpack.c.b16 %v2970, %v2968
        %v3333 = vpack.c.b16 %v2973, %v2971
        %v3334 = vpack.c.b16 %v2974, %v2972
        %v3335 = vpack.c.b16 %v2977, %v2975
        %v3336 = vpack.c.b16 %v2978, %v2976
        %v3337 = vpack.c.b16 %v2981, %v2979
        %v3338 = vpack.c.b16 %v2982, %v2980
        %v3339 = vpack.c.b16 %v2985, %v2983
        %v3340 = vpack.c.b16 %v2986, %v2984
        %v3341 = vpack.c.b16 %v2989, %v2987
        %v3342 = vpack.c.b16 %v2990, %v2988
        %v3343 = vpack.c.b16 %v2993, %v2991
        %v3344 = vpack.c.b16 %v2994, %v2992
        %v3345 = vpack.c.b16 %v2997, %v2995
        %v3346 = vpack.c.b16 %v2998, %v2996
        %v3347 = vpack.c.b16 %v3001, %v2999
        %v3348 = vpack.c.b16 %v3002, %v3000
        %v3349 = vpack.c.b16 %v3005, %v3003
        %v3350 = vpack.c.b16 %v3006, %v3004
        %v3351 = vpack.c.b16 %v3009, %v3007
        %v3352 = vpack.c.b16 %v3010, %v3008
        %v3353 = vpack.c.b16 %v3013, %v3011
        %v3354 = vpack.c.b16 %v3014, %v3012
        %v3355 = vpack.c.b16 %v3017, %v3015
        %v3356 = vpack.c.b16 %v3018, %v3016
        %v3357 = vpack.c.b16 %v3021, %v3019
        %v3358 = vpack.c.b16 %v3022, %v3020
        %v3359 = vpack.c.b16 %v3025, %v3023
        %v3360 = vpack.c.b16 %v3026, %v3024
        %v3361 = vpack.c.b16 %v3029, %v3027
        %v3362 = vpack.c.b16 %v3030, %v3028
        %v3363 = vpack.c.b16 %v3033, %v3031
        %v3364 = vpack.c.b16 %v3034, %v3032
        %v3365 = vpack.c.b16 %v3037, %v3035
        %v3366 = vpack.c.b16 %v3038, %v3036
        %v3367 = vpack.c.b16 %v3041, %v3039
        %v3368 = vpack.c.b16 %v3042, %v3040
        %v3369 = vpack.c.b16 %v3045, %v3043
        %v3370 = vpack.c.b16 %v3046, %v3044
        %v3371 = vpack.c.b16 %v3049, %v3047
        %v3372 = vpack.c.b16 %v3050, %v3048
        %v3373 = vpack.c.b16 %v3053, %v3051
        %v3374 = vpack.c.b16 %v3054, %v3052
        %v3375 = vpack.c.b16 %v3057, %v3055
        %v3376 = vpack.c.b16 %v3058, %v3056
        %v3377 = vpack.c.b16 %v3061, %v3059
        %v3378 = vpack.c.b16 %v3062, %v3060
        %v3379 = vpack.c.b16 %v3065, %v3063
        %v3380 = vpack.c.b16 %v3066, %v3064
        %v3381 = vpack.c.b16 %v3069, %v3067
        %v3382 = vpack.c.b16 %v3070, %v3068
        %v3383 = vpack.c.b16 %v3073, %v3071
        %v3384 = vpack.c.b16 %v3074, %v3072
        %v3385 = vpack.c.b16 %v3077, %v3075
        %v3386 = vpack.c.b16 %v3078, %v3076
        %v3387 = vpack.c.b16 %v3081, %v3079
        %v3388 = vpack.c.b16 %v3082, %v3080
        %v3389 = vpack.c.b16 %v3085, %v3083
        %v3390 = vpack.c.b16 %v3086, %v3084
        %v3391 = vpack.c.b16 %v3089, %v3087
        %v3392 = vpack.c.b16 %v3090, %v3088
        %v3393 = vpack.c.b16 %v3093, %v3091
        %v3394 = vpack.c.b16 %v3094, %v3092
        %v3395 = vpack.c.b16 %v3097, %v3095
        %v3396 = vpack.c.b16 %v3098, %v3096
        %v3397 = vpack.c.b16 %v3101, %v3099
        %v3398 = vpack.c.b16 %v3102, %v3100
        %v3399 = vpack.c.b16 %v3105, %v3103
        %v3400 = vpack.c.b16 %v3106, %v3104
        %v3401 = vpack.c.b16 %v3109, %v3107
        %v3402 = vpack.c.b16 %v3110, %v3108
        %v3403 = vpack.c.b16 %v3113, %v3111
        %v3404 = vpack.c.b16 %v3114, %v3112
        %v3405 = vpack.c.b16 %v3117, %v3115
        %v3406 = vpack.c.b16 %v3118, %v3116
        %v3407 = vpack.c.b16 %v3121, %v3119
        %v3408 = vpack.c.b16 %v3122, %v3120
        %v3409 = vpack.c.b16 %v3125, %v3123
        %v3410 = vpack.c.b16 %v3126, %v3124
        %v3411 = vpack.c.b16 %v3129, %v3127
        %v3412 = vpack.c.b16 %v3130, %v3128
        %v3413 = vpack.c.b16 %v3133, %v3131
        %v3414 = vpack.c.b16 %v3134, %v3132
        %v3415 = vpack.c.b16 %v3137, %v3135
        %v3416 = vpack.c.b16 %v3138, %v3136
        %v3417 = vpack.c.b16 %v3141, %v3139
        %v3418 = vpack.c.b16 %v3142, %v3140
        %v3419 = vpack.c.b16 %v3145, %v3143
        %v3420 = vpack.c.b16 %v3146, %v3144
        %v3421 = vpack.c.b16 %v3149, %v3147
        %v3422 = vpack.c.b16 %v3150, %v3148
        %v3423 = vpack.c.b16 %v3153, %v3151
        %v3424 = vpack.c.b16 %v3154, %v3152
        %v3425 = vpack.c.b16 %v3157, %v3155
        %v3426 = vpack.c.b16 %v3158, %v3156
        %v3427 = vpack.c.b16 %v3161, %v3159
        %v3428 = vpack.c.b16 %v3162, %v3160
        %v3429 = vpack.c.b16 %v3165, %v3163
        %v3430 = vpack.c.b16 %v3166, %v3164
        %v3431 = vpack.c.b16 %v3169, %v3167
        %v3432 = vpack.c.b16 %v3170, %v3168
        %v3433 = vpack.c.b16 %v3173, %v3171
        %v3434 = vpack.c.b16 %v3174, %v3172
        %v3435 = vpack.c.b16 %v3177, %v3175
        %v3436 = vpack.c.b16 %v3178, %v3176
        %v3437 = vpack.c.b16 %v3181, %v3179
        %v3438 = vpack.c.b16 %v3182, %v3180
        %v3439 = vpack.c.b16 %v3185, %v3183
        %v3440 = vpack.c.b16 %v3186, %v3184
        %v3441 = vpack.c.b16 %v3189, %v3187
        %v3442 = vpack.c.b16 %v3190, %v3188
        %v3443 = vpack.c.b16 %v3193, %v3191
        %v3444 = vpack.c.b16 %v3194, %v3192
        %v3445 = vpack.c.b16 %v3197, %v3195
        %v3446 = vpack.c.b16 %v3198, %v3196
        %v3447 = vpack.c.b16 %v3201, %v3199
        %v3448 = vpack.c.b16 %v3202, %v3200
        %v3449 = vpack.c.b16 %v3205, %v3203
        %v3450 = vpack.c.b16 %v3206, %v3204
        %v3451 = vpack.c.b16 %v3209, %v3207
        %v3452 = vpack.c.b16 %v3210, %v3208
        %v3453 = vpack.c.b16 %v3213, %v3211
        %v3454 = vpack.c.b16 %v3214, %v3212
        %v3455 = vpack.c.b16 %v3217, %v3215
        %v3456 = vpack.c.b16 %v3218, %v3216
        %v3457 = vpack.c.b16 %v3221, %v3219
        %v3458 = vpack.c.b16 %v3222, %v3220
        %v3459 = vpack.c.b16 %v3225, %v3223
        %v3460 = vpack.c.b16 %v3226, %v3224
        %v3461 = vpack.c.b16 %v3229, %v3227
        %v3462 = vpack.c.b16 %v3230, %v3228
        %v3463 = vpack.c.b16 %v3233, %v3231
        %v3464 = vpack.c.b16 %v3234, %v3232
        %v3465 = vpack.c.b16 %v3237, %v3235
        %v3466 = vpack.c.b16 %v3238, %v3236
        %v3467 = vpack.c.b16 %v3241, %v3239
        %v3468 = vpack.c.b16 %v3242, %v3240
        %v3469 = vpack.c.b16 %v3245, %v3243
        %v3470 = vpack.c.b16 %v3246, %v3244
        %v3471 = vpack.c.b16 %v3249, %v3247
        %v3472 = vpack.c.b16 %v3250, %v3248
        %v3473 = vpack.c.b16 %v3253, %v3251
        %v3474 = vpack.c.b16 %v3254, %v3252
        %v3475 = vpack.c.b16 %v3257, %v3255
        %v3476 = vpack.c.b16 %v3258, %v3256
        %v3477 = vpack.c.b16 %v3261, %v3259
        %v3478 = vpack.c.b16 %v3262, %v3260
        %v3479 = vpack.c.b16 %v3265, %v3263
        %v3480 = vpack.c.b16 %v3266, %v3264
        %v3481 = vpack.c.b16 %v3269, %v3267
        %v3482 = vpack.c.b16 %v3270, %v3268
        %v3483 = vpack.c.b16 %v3273, %v3271
        %v3484 = vpack.c.b16 %v3274, %v3272
        %v3485 = vpack.c.b16 %v3277, %v3275
        %v3486 = vpack.c.b16 %v3278, %v3276
        %v3487 = vpack.c.b16 %v3281, %v3279
        %v3488 = vpack.c.b16 %v3282, %v3280
        %v3489 = vpack.c.b16 %v3285, %v3283
        %v3490 = vpack.c.b16 %v3286, %v3284
        %v3491 = vpack.c.b16 %v3289, %v3287
        %v3492 = vpack.c.b16 %v3290, %v3288
        %v3493 = vpack.c.b16 %v3293, %v3291
        %v3494 = vpack.c.b16 %v3294, %v3292
        %v3495 = vpack.c.b16 %v3297, %v3295
        %v3496 = vpack.c.b16 %v3298, %v3296
        %v3497 = vpack.c.b16 %v3301, %v3299
        %v3498 = vpack.c.b16 %v3302, %v3300
        %v3499 = vpack.c.b16 %v3305, %v3303
        %v3500 = vpack.c.b16 %v3306, %v3304
        %v3501 = vpack.c.b16 %v3309, %v3307
        %v3502 = vpack.c.b16 %v3310, %v3308
        %3695 = vmatpush.bf16.msra.mxu0 %v3325
        %3696 = vmatpush.bf16.msra.mxu0 %v3323
        %3697 = vmatpush.bf16.msra.mxu0 %v3321
        %3698 = vmatpush.bf16.msra.mxu0 %v3319
        %3699 = vmatpush.bf16.msra.mxu0 %v3317
        %3700 = vmatpush.bf16.msra.mxu0 %v3315
        %3701 = vmatpush.bf16.msra.mxu0 %v3313
        %3702 = vmatpush.bf16.msra.mxu0 %v3311
        %3703 = vmatmul.bf16.gmra.mxu0 %v2687
        %v3704 = vpop.f32.mrf.mxu0
        %v3705 = vadd.f32 %v2598, %v3704
        %v3706 = vpop.f32.mrf.mxu0
        %v3707 = vadd.f32 %v2603, %v3706
        %3708 = vmatmul.bf16.gmra.mxu0 %v2699
        %v3709 = vpop.f32.mrf.mxu0
        %v3710 = vadd.f32 %v2608, %v3709
        %v3711 = vpop.f32.mrf.mxu0
        %v3712 = vadd.f32 %v2613, %v3711
        %3713 = vdwg.mxu0
        %3714 = vmatpush.bf16.msra.mxu0 %v3341
        %3715 = vmatpush.bf16.msra.mxu0 %v3339
        %3716 = vmatpush.bf16.msra.mxu0 %v3337
        %3717 = vmatpush.bf16.msra.mxu0 %v3335
        %3718 = vmatpush.bf16.msra.mxu0 %v3333
        %3719 = vmatpush.bf16.msra.mxu0 %v3331
        %3720 = vmatpush.bf16.msra.mxu0 %v3329
        %3721 = vmatpush.bf16.msra.mxu0 %v3327
        %3722 = vmatmul.bf16.gmra.mxu0 %v2688
        %v3723 = vpop.f32.mrf.mxu0
        %v3724 = vadd.f32 %v3705, %v3723
        %v3725 = vpop.f32.mrf.mxu0
        %v3726 = vadd.f32 %v3707, %v3725
        %3727 = vmatmul.bf16.gmra.mxu0 %v2700
        %v3728 = vpop.f32.mrf.mxu0
        %v3729 = vadd.f32 %v3710, %v3728
        %v3730 = vpop.f32.mrf.mxu0
        %v3731 = vadd.f32 %v3712, %v3730
        %3732 = vdwg.mxu0
        %3733 = vmatpush.bf16.msra.mxu0 %v3357
        %3734 = vmatpush.bf16.msra.mxu0 %v3355
        %3735 = vmatpush.bf16.msra.mxu0 %v3353
        %3736 = vmatpush.bf16.msra.mxu0 %v3351
        %3737 = vmatpush.bf16.msra.mxu0 %v3349
        %3738 = vmatpush.bf16.msra.mxu0 %v3347
        %3739 = vmatpush.bf16.msra.mxu0 %v3345
        %3740 = vmatpush.bf16.msra.mxu0 %v3343
        %3741 = vmatmul.bf16.gmra.mxu0 %v2689
        %v3742 = vpop.f32.mrf.mxu0
        %v3743 = vadd.f32 %v3724, %v3742
        %v3744 = vpop.f32.mrf.mxu0
        %v3745 = vadd.f32 %v3726, %v3744
        %3746 = vmatmul.bf16.gmra.mxu0 %v2701
        %v3747 = vpop.f32.mrf.mxu0
        %v3748 = vadd.f32 %v3729, %v3747
        %v3749 = vpop.f32.mrf.mxu0
        %v3750 = vadd.f32 %v3731, %v3749
        %3751 = vdwg.mxu0
        %3752 = vmatpush.bf16.msra.mxu0 %v3373
        %3753 = vmatpush.bf16.msra.mxu0 %v3371
        %3754 = vmatpush.bf16.msra.mxu0 %v3369
        %3755 = vmatpush.bf16.msra.mxu0 %v3367
        %3756 = vmatpush.bf16.msra.mxu0 %v3365
        %3757 = vmatpush.bf16.msra.mxu0 %v3363
        %3758 = vmatpush.bf16.msra.mxu0 %v3361
        %3759 = vmatpush.bf16.msra.mxu0 %v3359
        %3760 = vmatmul.bf16.gmra.mxu0 %v2690
        %v3761 = vpop.f32.mrf.mxu0
        %v3762 = vadd.f32 %v3743, %v3761
        %v3763 = vpop.f32.mrf.mxu0
        %v3764 = vadd.f32 %v3745, %v3763
        %3765 = vmatmul.bf16.gmra.mxu0 %v2702
        %v3766 = vpop.f32.mrf.mxu0
        %v3767 = vadd.f32 %v3748, %v3766
        %v3768 = vpop.f32.mrf.mxu0
        %v3769 = vadd.f32 %v3750, %v3768
        %3770 = vdwg.mxu0
        %3771 = vmatpush.bf16.msra.mxu0 %v3389
        %3772 = vmatpush.bf16.msra.mxu0 %v3387
        %3773 = vmatpush.bf16.msra.mxu0 %v3385
        %3774 = vmatpush.bf16.msra.mxu0 %v3383
        %3775 = vmatpush.bf16.msra.mxu0 %v3381
        %3776 = vmatpush.bf16.msra.mxu0 %v3379
        %3777 = vmatpush.bf16.msra.mxu0 %v3377
        %3778 = vmatpush.bf16.msra.mxu0 %v3375
        %3779 = vmatmul.bf16.gmra.mxu0 %v2691
        %v3780 = vpop.f32.mrf.mxu0
        %v3781 = vadd.f32 %v3762, %v3780
        %v3782 = vpop.f32.mrf.mxu0
        %v3783 = vadd.f32 %v3764, %v3782
        %3784 = vmatmul.bf16.gmra.mxu0 %v2703
        %v3785 = vpop.f32.mrf.mxu0
        %v3786 = vadd.f32 %v3767, %v3785
        %v3787 = vpop.f32.mrf.mxu0
        %v3788 = vadd.f32 %v3769, %v3787
        %3789 = vdwg.mxu0
        %3790 = vmatpush.bf16.msra.mxu0 %v3405
        %3791 = vmatpush.bf16.msra.mxu0 %v3403
        %3792 = vmatpush.bf16.msra.mxu0 %v3401
        %3793 = vmatpush.bf16.msra.mxu0 %v3399
        %3794 = vmatpush.bf16.msra.mxu0 %v3397
        %3795 = vmatpush.bf16.msra.mxu0 %v3395
        %3796 = vmatpush.bf16.msra.mxu0 %v3393
        %3797 = vmatpush.bf16.msra.mxu0 %v3391
        %3798 = vmatmul.bf16.gmra.mxu0 %v2692
        %v3799 = vpop.f32.mrf.mxu0
        %v3800 = vadd.f32 %v3781, %v3799
        %v3801 = vpop.f32.mrf.mxu0
        %v3802 = vadd.f32 %v3783, %v3801
        %3803 = vmatmul.bf16.gmra.mxu0 %v2704
        %v3804 = vpop.f32.mrf.mxu0
        %v3805 = vadd.f32 %v3786, %v3804
        %v3806 = vpop.f32.mrf.mxu0
        %v3807 = vadd.f32 %v3788, %v3806
        %3808 = vdwg.mxu0
        %3809 = vmatpush.bf16.msra.mxu0 %v3421
        %3810 = vmatpush.bf16.msra.mxu0 %v3419
        %3811 = vmatpush.bf16.msra.mxu0 %v3417
        %3812 = vmatpush.bf16.msra.mxu0 %v3415
        %3813 = vmatpush.bf16.msra.mxu0 %v3413
        %3814 = vmatpush.bf16.msra.mxu0 %v3411
        %3815 = vmatpush.bf16.msra.mxu0 %v3409
        %3816 = vmatpush.bf16.msra.mxu0 %v3407
        %3817 = vmatmul.bf16.gmra.mxu0 %v2693
        %v3818 = vpop.f32.mrf.mxu0
        %v3819 = vadd.f32 %v3800, %v3818
        %v3820 = vpop.f32.mrf.mxu0
        %v3821 = vadd.f32 %v3802, %v3820
        %3822 = vmatmul.bf16.gmra.mxu0 %v2705
        %v3823 = vpop.f32.mrf.mxu0
        %v3824 = vadd.f32 %v3805, %v3823
        %v3825 = vpop.f32.mrf.mxu0
        %v3826 = vadd.f32 %v3807, %v3825
        %3827 = vdwg.mxu0
        %3828 = vmatpush.bf16.msra.mxu0 %v3437
        %3829 = vmatpush.bf16.msra.mxu0 %v3435
        %3830 = vmatpush.bf16.msra.mxu0 %v3433
        %3831 = vmatpush.bf16.msra.mxu0 %v3431
        %3832 = vmatpush.bf16.msra.mxu0 %v3429
        %3833 = vmatpush.bf16.msra.mxu0 %v3427
        %3834 = vmatpush.bf16.msra.mxu0 %v3425
        %3835 = vmatpush.bf16.msra.mxu0 %v3423
        %3836 = vmatmul.bf16.gmra.mxu0 %v2694
        %v3837 = vpop.f32.mrf.mxu0
        %v3838 = vadd.f32 %v3819, %v3837
        %v3839 = vpop.f32.mrf.mxu0
        %v3840 = vadd.f32 %v3821, %v3839
        %3841 = vmatmul.bf16.gmra.mxu0 %v2706
        %v3842 = vpop.f32.mrf.mxu0
        %v3843 = vadd.f32 %v3824, %v3842
        %v3844 = vpop.f32.mrf.mxu0
        %v3845 = vadd.f32 %v3826, %v3844
        %3846 = vdwg.mxu0
        %3847 = vmatpush.bf16.msra.mxu0 %v3453
        %3848 = vmatpush.bf16.msra.mxu0 %v3451
        %3849 = vmatpush.bf16.msra.mxu0 %v3449
        %3850 = vmatpush.bf16.msra.mxu0 %v3447
        %3851 = vmatpush.bf16.msra.mxu0 %v3445
        %3852 = vmatpush.bf16.msra.mxu0 %v3443
        %3853 = vmatpush.bf16.msra.mxu0 %v3441
        %3854 = vmatpush.bf16.msra.mxu0 %v3439
        %3855 = vmatmul.bf16.gmra.mxu0 %v2695
        %v3856 = vpop.f32.mrf.mxu0
        %v3857 = vadd.f32 %v3838, %v3856
        %v3858 = vpop.f32.mrf.mxu0
        %v3859 = vadd.f32 %v3840, %v3858
        %3860 = vmatmul.bf16.gmra.mxu0 %v2707
        %v3861 = vpop.f32.mrf.mxu0
        %v3862 = vadd.f32 %v3843, %v3861
        %v3863 = vpop.f32.mrf.mxu0
        %v3864 = vadd.f32 %v3845, %v3863
        %3865 = vdwg.mxu0
        %3866 = vmatpush.bf16.msra.mxu0 %v3469
        %3867 = vmatpush.bf16.msra.mxu0 %v3467
        %3868 = vmatpush.bf16.msra.mxu0 %v3465
        %3869 = vmatpush.bf16.msra.mxu0 %v3463
        %3870 = vmatpush.bf16.msra.mxu0 %v3461
        %3871 = vmatpush.bf16.msra.mxu0 %v3459
        %3872 = vmatpush.bf16.msra.mxu0 %v3457
        %3873 = vmatpush.bf16.msra.mxu0 %v3455
        %3874 = vmatmul.bf16.gmra.mxu0 %v2696
        %v3875 = vpop.f32.mrf.mxu0
        %v3876 = vadd.f32 %v3857, %v3875
        %v3877 = vpop.f32.mrf.mxu0
        %v3878 = vadd.f32 %v3859, %v3877
        %3879 = vmatmul.bf16.gmra.mxu0 %v2708
        %v3880 = vpop.f32.mrf.mxu0
        %v3881 = vadd.f32 %v3862, %v3880
        %v3882 = vpop.f32.mrf.mxu0
        %v3883 = vadd.f32 %v3864, %v3882
        %3884 = vdwg.mxu0
        %3885 = vmatpush.bf16.msra.mxu0 %v3485
        %3886 = vmatpush.bf16.msra.mxu0 %v3483
        %3887 = vmatpush.bf16.msra.mxu0 %v3481
        %3888 = vmatpush.bf16.msra.mxu0 %v3479
        %3889 = vmatpush.bf16.msra.mxu0 %v3477
        %3890 = vmatpush.bf16.msra.mxu0 %v3475
        %3891 = vmatpush.bf16.msra.mxu0 %v3473
        %3892 = vmatpush.bf16.msra.mxu0 %v3471
        %3893 = vmatmul.bf16.gmra.mxu0 %v2697
        %v3894 = vpop.f32.mrf.mxu0
        %v3895 = vadd.f32 %v3876, %v3894
        %v3896 = vpop.f32.mrf.mxu0
        %v3897 = vadd.f32 %v3878, %v3896
        %3898 = vmatmul.bf16.gmra.mxu0 %v2709
        %v3899 = vpop.f32.mrf.mxu0
        %v3900 = vadd.f32 %v3881, %v3899
        %v3901 = vpop.f32.mrf.mxu0
        %v3902 = vadd.f32 %v3883, %v3901
        %3903 = vdwg.mxu0
        %3904 = vmatpush.bf16.msra.mxu0 %v3501
        %3905 = vmatpush.bf16.msra.mxu0 %v3499
        %3906 = vmatpush.bf16.msra.mxu0 %v3497
        %3907 = vmatpush.bf16.msra.mxu0 %v3495
        %3908 = vmatpush.bf16.msra.mxu0 %v3493
        %3909 = vmatpush.bf16.msra.mxu0 %v3491
        %3910 = vmatpush.bf16.msra.mxu0 %v3489
        %3911 = vmatpush.bf16.msra.mxu0 %v3487
        %3912 = vmatmul.bf16.gmra.mxu0 %v2698
        %v3913 = vpop.f32.mrf.mxu0
        %v3914 = vadd.f32 %v3895, %v3913
        %v3915 = vpop.f32.mrf.mxu0
        %v3916 = vadd.f32 %v3897, %v3915
        %3917 = vmatmul.bf16.gmra.mxu0 %v2710
        %v3918 = vpop.f32.mrf.mxu0
        %v3919 = vadd.f32 %v3900, %v3918
        %v3920 = vpop.f32.mrf.mxu0
        %v3921 = vadd.f32 %v3902, %v3920
        %3922 = vdwg.mxu0
        %3923 = vmatpush.bf16.msra.mxu0 %v3326
        %3924 = vmatpush.bf16.msra.mxu0 %v3324
        %3925 = vmatpush.bf16.msra.mxu0 %v3322
        %3926 = vmatpush.bf16.msra.mxu0 %v3320
        %3927 = vmatpush.bf16.msra.mxu0 %v3318
        %3928 = vmatpush.bf16.msra.mxu0 %v3316
        %3929 = vmatpush.bf16.msra.mxu0 %v3314
        %3930 = vmatpush.bf16.msra.mxu0 %v3312
        %3931 = vmatmul.bf16.gmra.mxu0 %v2687
        %v3932 = vpop.f32.mrf.mxu0
        %v3933 = vadd.f32 %v2598, %v3932
        %v3934 = vpop.f32.mrf.mxu0
        %v3935 = vadd.f32 %v2603, %v3934
        %3936 = vmatmul.bf16.gmra.mxu0 %v2699
        %v3937 = vpop.f32.mrf.mxu0
        %v3938 = vadd.f32 %v2608, %v3937
        %v3939 = vpop.f32.mrf.mxu0
        %v3940 = vadd.f32 %v2613, %v3939
        %3941 = vdwg.mxu0
        %3942 = vmatpush.bf16.msra.mxu0 %v3342
        %3943 = vmatpush.bf16.msra.mxu0 %v3340
        %3944 = vmatpush.bf16.msra.mxu0 %v3338
        %3945 = vmatpush.bf16.msra.mxu0 %v3336
        %3946 = vmatpush.bf16.msra.mxu0 %v3334
        %3947 = vmatpush.bf16.msra.mxu0 %v3332
        %3948 = vmatpush.bf16.msra.mxu0 %v3330
        %3949 = vmatpush.bf16.msra.mxu0 %v3328
        %3950 = vmatmul.bf16.gmra.mxu0 %v2688
        %v3951 = vpop.f32.mrf.mxu0
        %v3952 = vadd.f32 %v3933, %v3951
        %v3953 = vpop.f32.mrf.mxu0
        %v3954 = vadd.f32 %v3935, %v3953
        %3955 = vmatmul.bf16.gmra.mxu0 %v2700
        %v3956 = vpop.f32.mrf.mxu0
        %v3957 = vadd.f32 %v3938, %v3956
        %v3958 = vpop.f32.mrf.mxu0
        %v3959 = vadd.f32 %v3940, %v3958
        %3960 = vdwg.mxu0
        %3961 = vmatpush.bf16.msra.mxu0 %v3358
        %3962 = vmatpush.bf16.msra.mxu0 %v3356
        %3963 = vmatpush.bf16.msra.mxu0 %v3354
        %3964 = vmatpush.bf16.msra.mxu0 %v3352
        %3965 = vmatpush.bf16.msra.mxu0 %v3350
        %3966 = vmatpush.bf16.msra.mxu0 %v3348
        %3967 = vmatpush.bf16.msra.mxu0 %v3346
        %3968 = vmatpush.bf16.msra.mxu0 %v3344
        %3969 = vmatmul.bf16.gmra.mxu0 %v2689
        %v3970 = vpop.f32.mrf.mxu0
        %v3971 = vadd.f32 %v3952, %v3970
        %v3972 = vpop.f32.mrf.mxu0
        %v3973 = vadd.f32 %v3954, %v3972
        %3974 = vmatmul.bf16.gmra.mxu0 %v2701
        %v3975 = vpop.f32.mrf.mxu0
        %v3976 = vadd.f32 %v3957, %v3975
        %v3977 = vpop.f32.mrf.mxu0
        %v3978 = vadd.f32 %v3959, %v3977
        %3979 = vdwg.mxu0
        %3980 = vmatpush.bf16.msra.mxu0 %v3374
        %3981 = vmatpush.bf16.msra.mxu0 %v3372
        %3982 = vmatpush.bf16.msra.mxu0 %v3370
        %3983 = vmatpush.bf16.msra.mxu0 %v3368
        %3984 = vmatpush.bf16.msra.mxu0 %v3366
        %3985 = vmatpush.bf16.msra.mxu0 %v3364
        %3986 = vmatpush.bf16.msra.mxu0 %v3362
        %3987 = vmatpush.bf16.msra.mxu0 %v3360
        %3988 = vmatmul.bf16.gmra.mxu0 %v2690
        %v3989 = vpop.f32.mrf.mxu0
        %v3990 = vadd.f32 %v3971, %v3989
        %v3991 = vpop.f32.mrf.mxu0
        %v3992 = vadd.f32 %v3973, %v3991
        %3993 = vmatmul.bf16.gmra.mxu0 %v2702
        %v3994 = vpop.f32.mrf.mxu0
        %v3995 = vadd.f32 %v3976, %v3994
        %v3996 = vpop.f32.mrf.mxu0
        %v3997 = vadd.f32 %v3978, %v3996
        %3998 = vdwg.mxu0
        %3999 = vmatpush.bf16.msra.mxu0 %v3390
        %4000 = vmatpush.bf16.msra.mxu0 %v3388
        %4001 = vmatpush.bf16.msra.mxu0 %v3386
        %4002 = vmatpush.bf16.msra.mxu0 %v3384
        %4003 = vmatpush.bf16.msra.mxu0 %v3382
        %4004 = vmatpush.bf16.msra.mxu0 %v3380
        %4005 = vmatpush.bf16.msra.mxu0 %v3378
        %4006 = vmatpush.bf16.msra.mxu0 %v3376
        %4007 = vmatmul.bf16.gmra.mxu0 %v2691
        %v4008 = vpop.f32.mrf.mxu0
        %v4009 = vadd.f32 %v3990, %v4008
        %v4010 = vpop.f32.mrf.mxu0
        %v4011 = vadd.f32 %v3992, %v4010
        %4012 = vmatmul.bf16.gmra.mxu0 %v2703
        %v4013 = vpop.f32.mrf.mxu0
        %v4014 = vadd.f32 %v3995, %v4013
        %v4015 = vpop.f32.mrf.mxu0
        %v4016 = vadd.f32 %v3997, %v4015
        %4017 = vdwg.mxu0
        %4018 = vmatpush.bf16.msra.mxu0 %v3406
        %4019 = vmatpush.bf16.msra.mxu0 %v3404
        %4020 = vmatpush.bf16.msra.mxu0 %v3402
        %4021 = vmatpush.bf16.msra.mxu0 %v3400
        %4022 = vmatpush.bf16.msra.mxu0 %v3398
        %4023 = vmatpush.bf16.msra.mxu0 %v3396
        %4024 = vmatpush.bf16.msra.mxu0 %v3394
        %4025 = vmatpush.bf16.msra.mxu0 %v3392
        %4026 = vmatmul.bf16.gmra.mxu0 %v2692
        %v4027 = vpop.f32.mrf.mxu0
        %v4028 = vadd.f32 %v4009, %v4027
        %v4029 = vpop.f32.mrf.mxu0
        %v4030 = vadd.f32 %v4011, %v4029
        %4031 = vmatmul.bf16.gmra.mxu0 %v2704
        %v4032 = vpop.f32.mrf.mxu0
        %v4033 = vadd.f32 %v4014, %v4032
        %v4034 = vpop.f32.mrf.mxu0
        %v4035 = vadd.f32 %v4016, %v4034
        %4036 = vdwg.mxu0
        %4037 = vmatpush.bf16.msra.mxu0 %v3422
        %4038 = vmatpush.bf16.msra.mxu0 %v3420
        %4039 = vmatpush.bf16.msra.mxu0 %v3418
        %4040 = vmatpush.bf16.msra.mxu0 %v3416
        %4041 = vmatpush.bf16.msra.mxu0 %v3414
        %4042 = vmatpush.bf16.msra.mxu0 %v3412
        %4043 = vmatpush.bf16.msra.mxu0 %v3410
        %4044 = vmatpush.bf16.msra.mxu0 %v3408
        %4045 = vmatmul.bf16.gmra.mxu0 %v2693
        %v4046 = vpop.f32.mrf.mxu0
        %v4047 = vadd.f32 %v4028, %v4046
        %v4048 = vpop.f32.mrf.mxu0
        %v4049 = vadd.f32 %v4030, %v4048
        %4050 = vmatmul.bf16.gmra.mxu0 %v2705
        %v4051 = vpop.f32.mrf.mxu0
        %v4052 = vadd.f32 %v4033, %v4051
        %v4053 = vpop.f32.mrf.mxu0
        %v4054 = vadd.f32 %v4035, %v4053
        %4055 = vdwg.mxu0
        %4056 = vmatpush.bf16.msra.mxu0 %v3438
        %4057 = vmatpush.bf16.msra.mxu0 %v3436
        %4058 = vmatpush.bf16.msra.mxu0 %v3434
        %4059 = vmatpush.bf16.msra.mxu0 %v3432
        %4060 = vmatpush.bf16.msra.mxu0 %v3430
        %4061 = vmatpush.bf16.msra.mxu0 %v3428
        %4062 = vmatpush.bf16.msra.mxu0 %v3426
        %4063 = vmatpush.bf16.msra.mxu0 %v3424
        %4064 = vmatmul.bf16.gmra.mxu0 %v2694
        %v4065 = vpop.f32.mrf.mxu0
        %v4066 = vadd.f32 %v4047, %v4065
        %v4067 = vpop.f32.mrf.mxu0
        %v4068 = vadd.f32 %v4049, %v4067
        %4069 = vmatmul.bf16.gmra.mxu0 %v2706
        %v4070 = vpop.f32.mrf.mxu0
        %v4071 = vadd.f32 %v4052, %v4070
        %v4072 = vpop.f32.mrf.mxu0
        %v4073 = vadd.f32 %v4054, %v4072
        %4074 = vdwg.mxu0
        %4075 = vmatpush.bf16.msra.mxu0 %v3454
        %4076 = vmatpush.bf16.msra.mxu0 %v3452
        %4077 = vmatpush.bf16.msra.mxu0 %v3450
        %4078 = vmatpush.bf16.msra.mxu0 %v3448
        %4079 = vmatpush.bf16.msra.mxu0 %v3446
        %4080 = vmatpush.bf16.msra.mxu0 %v3444
        %4081 = vmatpush.bf16.msra.mxu0 %v3442
        %4082 = vmatpush.bf16.msra.mxu0 %v3440
        %4083 = vmatmul.bf16.gmra.mxu0 %v2695
        %v4084 = vpop.f32.mrf.mxu0
        %v4085 = vadd.f32 %v4066, %v4084
        %v4086 = vpop.f32.mrf.mxu0
        %v4087 = vadd.f32 %v4068, %v4086
        %4088 = vmatmul.bf16.gmra.mxu0 %v2707
        %v4089 = vpop.f32.mrf.mxu0
        %v4090 = vadd.f32 %v4071, %v4089
        %v4091 = vpop.f32.mrf.mxu0
        %v4092 = vadd.f32 %v4073, %v4091
        %4093 = vdwg.mxu0
        %4094 = vmatpush.bf16.msra.mxu0 %v3470
        %4095 = vmatpush.bf16.msra.mxu0 %v3468
        %4096 = vmatpush.bf16.msra.mxu0 %v3466
        %4097 = vmatpush.bf16.msra.mxu0 %v3464
        %4098 = vmatpush.bf16.msra.mxu0 %v3462
        %4099 = vmatpush.bf16.msra.mxu0 %v3460
        %4100 = vmatpush.bf16.msra.mxu0 %v3458
        %4101 = vmatpush.bf16.msra.mxu0 %v3456
        %4102 = vmatmul.bf16.gmra.mxu0 %v2696
        %v4103 = vpop.f32.mrf.mxu0
        %v4104 = vadd.f32 %v4085, %v4103
        %v4105 = vpop.f32.mrf.mxu0
        %v4106 = vadd.f32 %v4087, %v4105
        %4107 = vmatmul.bf16.gmra.mxu0 %v2708
        %v4108 = vpop.f32.mrf.mxu0
        %v4109 = vadd.f32 %v4090, %v4108
        %v4110 = vpop.f32.mrf.mxu0
        %v4111 = vadd.f32 %v4092, %v4110
        %4112 = vdwg.mxu0
        %4113 = vmatpush.bf16.msra.mxu0 %v3486
        %4114 = vmatpush.bf16.msra.mxu0 %v3484
        %4115 = vmatpush.bf16.msra.mxu0 %v3482
        %4116 = vmatpush.bf16.msra.mxu0 %v3480
        %4117 = vmatpush.bf16.msra.mxu0 %v3478
        %4118 = vmatpush.bf16.msra.mxu0 %v3476
        %4119 = vmatpush.bf16.msra.mxu0 %v3474
        %4120 = vmatpush.bf16.msra.mxu0 %v3472
        %4121 = vmatmul.bf16.gmra.mxu0 %v2697
        %v4122 = vpop.f32.mrf.mxu0
        %v4123 = vadd.f32 %v4104, %v4122
        %v4124 = vpop.f32.mrf.mxu0
        %v4125 = vadd.f32 %v4106, %v4124
        %4126 = vmatmul.bf16.gmra.mxu0 %v2709
        %v4127 = vpop.f32.mrf.mxu0
        %v4128 = vadd.f32 %v4109, %v4127
        %v4129 = vpop.f32.mrf.mxu0
        %v4130 = vadd.f32 %v4111, %v4129
        %4131 = vdwg.mxu0
        %4132 = vmatpush.bf16.msra.mxu0 %v3502
        %4133 = vmatpush.bf16.msra.mxu0 %v3500
        %4134 = vmatpush.bf16.msra.mxu0 %v3498
        %4135 = vmatpush.bf16.msra.mxu0 %v3496
        %4136 = vmatpush.bf16.msra.mxu0 %v3494
        %4137 = vmatpush.bf16.msra.mxu0 %v3492
        %4138 = vmatpush.bf16.msra.mxu0 %v3490
        %4139 = vmatpush.bf16.msra.mxu0 %v3488
        %4140 = vmatmul.bf16.gmra.mxu0 %v2698
        %v4141 = vpop.f32.mrf.mxu0
        %v4142 = vadd.f32 %v4123, %v4141
        %v4143 = vpop.f32.mrf.mxu0
        %v4144 = vadd.f32 %v4125, %v4143
        %4145 = vmatmul.bf16.gmra.mxu0 %v2710
        %v4146 = vpop.f32.mrf.mxu0
        %v4147 = vadd.f32 %v4128, %v4146
        %v4148 = vpop.f32.mrf.mxu0
        %v4149 = vadd.f32 %v4130, %v4148
        %4150 = vdwg.mxu0
        %4151 = vst [vmem:[%s177] sm:$0xff] %v3914
        %4152 = vst [vmem:[%s177 + $0x8] sm:$0xff] %v4142
        %4153 = vst [vmem:[%s177 + $0x10] sm:$0xff] %v3916
        %4154 = vst [vmem:[%s177 + $0x18] sm:$0xff] %v4144
        %4155 = vst [vmem:[%s177 + $0x20] sm:$0xff] %v3919
        %4156 = vst [vmem:[%s177 + $0x28] sm:$0xff] %v4147
        %4157 = vst [vmem:[%s177 + $0x30] sm:$0xff] %v3921
        %4158 = vst [vmem:[%s177 + $0x38] sm:$0xff] %v4149
        %s4159 = sand.u32 %s107, 1
        %s4160 = scalar_lea.sflag [#allocation4], %s4159
        %s4161 = sand.u32 %s107, 1
        %s4162 = smul.addr %s4161, 64
        %s4163 = scalar_lea.vmem [#allocation3], %s4162
        // Predicated region
        $region33: #{d_stack_dilate_block.1} parent=31 // pred_check
          %p4164 = pneg %p117
        $region34: #{d_stack_dilate_block.1} parent=31 // pred_check_branch
          %4166 = sbr.rel (%p4164) target = $region36
        $region35: #{d_stack_dilate_block.1} parent=31 // pred_region
          %s4167 = smul.u32 2, %s22
          %4169 = vsyncadd %s4160, 0
          %s4170 = smul.addr %s21, 8
          %s4171 = sadd.s32 %s4167, %s4170
          %s4172 = smul.addr %s4171, 8
          %s4173 = scalar_lea.hbm %s3, %s4172
          %s4174 = sshll.u32 %s4163, 4
          %s4175 = int_to_ptr.vmem [resolvable:$true] %s4174
          %s4176 = sshll.u32 %s4173, 4
          %s4177 = int_to_ptr.hbm [resolvable:$true] %s4176
          %4182 = dma.vmem_to_hbm [thread:$0]  %s4175, 1024, %s4177, %s4160, 256, 256, 16
        $region36: #{d_stack_dilate_block.1} parent=31 // pred_fallthru
          _
      $region32: #{d_stack_dilate_block.1} parent=5 // pred_fallthru
        _
      %p4183 = scmp.le.s32.totalorder 2, %s12
      // Predicated region
      $region37: #{d_stack_dilate_block.1} parent=5 // pred_check
        %p4184 = pneg %p4183
      $region38: #{d_stack_dilate_block.1} parent=5 // pred_check_branch
        %4186 = sbr.rel (%p4184) target = $region40
      $region39: #{d_stack_dilate_block.1} parent=5 // pred_region
        %s4187 = ssub.s32 %s12, 2
        // Predicated region
        $region41: #{d_stack_dilate_block.1} parent=39 // pred_check
          %p4188 = pneg %p123
        $region42: #{d_stack_dilate_block.1} parent=39 // pred_check_branch
          %4190 = sbr.rel (%p4188) target = $region44
        $region43: #{d_stack_dilate_block.1} parent=39 // pred_region
          %s4191 = sand.u32 %s108, 1
          %s4192 = scalar_lea.sflag [#allocation4], %s4191
          %s4193 = sand.u32 %s108, 1
          %s4194 = smul.addr %s4193, 64
          %s4195 = scalar_lea.vmem [#allocation3], %s4194
          %4197 = dma.done %s4192, 1024
        $region44: #{d_stack_dilate_block.1} parent=39 // pred_fallthru
          _
      $region40: #{d_stack_dilate_block.1} parent=5 // pred_fallthru
        _
    $region6: #{d_stack_dilate_block.1} parent=1 // loop_footer
      %s16 = sadd.s32 1, %s12
    $region7: #{d_stack_dilate_block.1} parent=1 // loop_footer_branch
      %11 = sbr.rel target = $region3
    $region8: #{d_stack_dilate_block.1} parent=1 // loop_exit
      _
    %4198 = vsyncpa [#allocation4], 1
    %s4199 = scalar_lea.sflag [#allocation4], 1
    %4200 = vsyncpa %s4199, 1

</llo_original>
